<compile_context>
chip_gen: v5e
topology: v5e:2x2
jax: 0.10.0
libtpu: 0.0.40
codegen_flags: <defaults>
</compile_context>

<pallas_src>
import numpy as np
import jax
import jax.numpy as jnp
from jax.experimental import pallas as pl
from jax.experimental.pallas import tpu as pltpu


def _softplus(v):
    # F.softplus (beta=1), numerically stable.
    return jnp.maximum(v, 0.0) + jnp.log1p(jnp.exp(-jnp.abs(v)))


def _physnet_interaction_kernel(x_ref, rbf_ref, gath_ref, qr_ref, ss_ref,
                                wk2f_ref, wij_ref, w_ref, bu_ref,
                                out_ref, xjw_ref):
    f32 = jnp.float32
    x = x_ref[...]                                   # (N, F)
    n_atoms, feat = x.shape
    mn = gath_ref.shape[0]                           # M * N (neighbour-major pairs)
    m_per = mn // n_atoms                            # neighbours per atom (M)
    n_res = (w_ref.shape[0] - 1) // 2

    bu = bu_ref[...]                                 # (4 + 2R, F): biases then u
    b_i, b_j, b_d = bu[0:1, :], bu[1:2, :], bu[2:3, :]
    u = bu[3 + 2 * n_res:4 + 2 * n_res, :]

    # dropout(activation(x)) with dropout = identity (eval mode).
    xa = _softplus(x)

    # Fused dense_i | dense_j: one (N,F)@(F,2F) matmul, static lane split.
    xidj = jnp.dot(xa, wij_ref[...], preferred_element_type=f32)           # (N, 2F)
    xi = xidj[:, :feat] + b_i                                              # dense_i
    dj = xidj[:, feat:] + b_j                                              # dense_j

    # k2f on the neighbour-major permuted rbf; gather dense_j rows via the
    # pre-permuted one-hot; modulate.  Row r*N + n of xjp == pair (n*M + r).
    g = jnp.dot(rbf_ref[...], wk2f_ref[...], preferred_element_type=f32)   # (M*N, F)
    djg = jnp.dot(gath_ref[...], dj, preferred_element_type=f32)           # (M*N, F)
    xjp = g * djg                                                          # (M*N, F)

    # Lane-dense XJ buffer: XJ[n, r*F + f] = xj[pair n*M + r, f].
    for r in range(m_per):
        xjw_ref[:, r * feat:(r + 1) * feat] = xjp[r * n_atoms:(r + 1) * n_atoms, :]
    xj_wide = xjw_ref[...]                                                 # (N, M*F)

    qr = qr_ref[...]                                 # (F+M, M*F): Qbig over Rep
    qbig, rep = qr[:feat, :], qr[feat:, :]
    ss = ss_ref[...]                                 # (M*F, F+M): SumBig | Sbig
    sumbig, sbig = ss[:, :feat], ss[:, feat:]

    # --- AtomwiseAttention (reproduces torch .view(N,F,M) reinterpretation) --
    # att = ((xi @ Qbig) ⊙ XJ) @ Sbig   -> (N, M)
    att = jnp.dot(jnp.dot(xi, qbig, preferred_element_type=f32) * xj_wide,
                  sbig, preferred_element_type=f32)
    att = att - jnp.max(att, axis=-1, keepdims=True)
    att = jnp.exp(att)
    att = att / jnp.sum(att, axis=-1, keepdims=True)

    # einsum('nom,nmf->nf', att, xj.view(N,M,F)) = ((att @ Rep) ⊙ XJ) @ SumBig
    xj_att = jnp.dot(jnp.dot(att, rep, preferred_element_type=f32) * xj_wide,
                     sumbig, preferred_element_type=f32)                   # (N, F)

    # --- residual stack + output head ----------------------------------------
    m = xi + xj_att
    for i in range(n_res):
        y = _softplus(m)                             # dropout identity (eval)
        h = (jnp.dot(y, w_ref[1 + 2 * i], preferred_element_type=f32)
             + bu[3 + 2 * i:4 + 2 * i, :])
        h = (jnp.dot(h, w_ref[2 + 2 * i], preferred_element_type=f32)
             + bu[4 + 2 * i:5 + 2 * i, :])
        m = m + h
    m = _softplus(m)
    out_ref[...] = u * x + jnp.dot(m, w_ref[0], preferred_element_type=f32) + b_d


def physnet_interaction_forward(x, rbf, idx_i, idx_j, params):
    """Fused PhysNetInteractionLayer forward (eval mode) via a single pallas_call."""
    del idx_i  # unused by the PyTorch forward as well
    n_atoms, feat = x.shape
    n_pairs, n_rbf = rbf.shape
    # Same assumption as torch's .view(): exactly P/N pairs per atom, i-major.
    assert n_pairs % n_atoms == 0, "pairs must regroup per atom (torch .view requirement)"
    m_per = n_pairs // n_atoms
    n_res = len(params["res_w1"])
    mf = m_per * feat

    # Neighbour-major permutation of the pair axis, done once in the wrapper:
    # destination row q = r*N + n  <-  source pair p = n*M + r.
    src = (np.tile(np.arange(n_atoms), m_per) * m_per
           + np.repeat(np.arange(m_per), n_atoms))
    src = jnp.asarray(src, jnp.int32)
    rbf_perm = jnp.asarray(rbf, jnp.float32)[src]                          # (M*N, K)
    gath_perm = jax.nn.one_hot(jnp.asarray(idx_j, jnp.int32)[src],
                               n_atoms, dtype=jnp.float32)                 # (M*N, N)

    # Constant 0/1 selection matrices reproducing torch's .view() layouts.
    cols = np.arange(mf)
    qbig = np.zeros((feat, mf), np.float32)
    qbig[cols // m_per, cols] = 1.0          # picks xi[:, (r*F+f)//M]
    rep = np.zeros((m_per, mf), np.float32)
    rep[cols // feat, cols] = 1.0            # replicates att[:, m] across block m
    sumbig = np.zeros((mf, feat), np.float32)
    sumbig[cols, cols % feat] = 1.0          # stacked identities (sum over m)
    sbig = np.zeros((mf, m_per), np.float32)
    sbig[cols, cols % m_per] = 1.0           # routes slot (r*F+f)%M
    qr = jnp.asarray(np.concatenate([qbig, rep], axis=0))                  # (F+M, M*F)
    ss = jnp.asarray(np.concatenate([sumbig, sbig], axis=1))               # (M*F, F+M)

    # Parameter packing: fused Wi|Wj, stacked (F,F) weights, stacked biases+u.
    w_ij = jnp.concatenate([jnp.asarray(params["w_i"], jnp.float32),
                            jnp.asarray(params["w_j"], jnp.float32)], axis=1)  # (F, 2F)
    w_list = [params["w_d"]]
    b_list = [params["b_i"], params["b_j"], params["b_d"]]
    for i in range(n_res):
        w_list += [params["res_w1"][i], params["res_w2"][i]]
        b_list += [params["res_b1"][i], params["res_b2"][i]]
    b_list.append(params["u"])
    w_stack = jnp.stack([jnp.asarray(w, jnp.float32) for w in w_list])          # (1+2R, F, F)
    bu_stack = jnp.stack([jnp.asarray(b, jnp.float32).reshape(feat)
                          for b in b_list])                                     # (4+2R, F)

    inputs = [
        jnp.asarray(x, jnp.float32),
        rbf_perm,
        gath_perm,
        qr,
        ss,
        jnp.asarray(params["w_k2f"], jnp.float32),
        w_ij,
        w_stack,
        bu_stack,
    ]

    return pl.pallas_call(
        _physnet_interaction_kernel,
        out_shape=jax.ShapeDtypeStruct((n_atoms, feat), jnp.float32),
        in_specs=[pl.BlockSpec(memory_space=pltpu.MemorySpace.VMEM)] * len(inputs),
        out_specs=pl.BlockSpec(memory_space=pltpu.MemorySpace.VMEM),
        scratch_shapes=[pltpu.VMEM((n_atoms, mf), jnp.float32)],
        compiler_params=pltpu.CompilerParams(vmem_limit_bytes=32 * 1024 * 1024),
    )(*inputs)


def _reference(x, rbf, idx_j, params):
    """Pure-JAX mirror of the PyTorch forward (eval mode) for correctness check."""
    act = jax.nn.softplus
    n_atoms, feat = x.shape
    xa = act(x)
    g = rbf @ params["w_k2f"]
    xi = xa @ params["w_i"] + params["b_i"]
    xj = g * (xa @ params["w_j"] + params["b_j"])[idx_j]
    att = jnp.einsum("nf,nfm->nm", xi, xj.reshape(n_atoms, feat, -1))
    att = jax.nn.softmax(att, axis=-1)
    xj = jnp.einsum("nm,nmf->nf", att, xj.reshape(n_atoms, -1, feat))
    m = xi + xj
    for w1, b1, w2, b2 in zip(params["res_w1"], params["res_b1"],
                              params["res_w2"], params["res_b2"]):
        m = m + (act(m) @ w1 + b1) @ w2 + b2
    m = act(m)
    return params["u"] * x + m @ params["w_d"] + params["b_d"]


if __name__ == "__main__":
    jax.config.update("jax_default_matmul_precision", "float32")

    n_atoms, feat, n_rbf, n_res = 8, 32, 16, 2
    n_pairs = n_atoms * (n_atoms - 1)

    key = jax.random.PRNGKey(0)
    ks = jax.random.split(key, 20)

    x = 0.5 * jax.random.normal(ks[0], (n_atoms, feat), dtype=jnp.float32)
    rbf = jax.random.uniform(ks[1], (n_pairs, n_rbf), dtype=jnp.float32)

    # Full i != j pair list, i-major (the grouping the torch .view relies on).
    idx_i = jnp.asarray(np.repeat(np.arange(n_atoms), n_atoms - 1), jnp.int32)
    idx_j = jnp.asarray(np.concatenate(
        [np.concatenate([np.arange(i), np.arange(i + 1, n_atoms)])
         for i in range(n_atoms)]), jnp.int32)

    def lin(k, fan_in, shape):
        lim = 1.0 / np.sqrt(fan_in)
        return jax.random.uniform(k, shape, jnp.float32, -lim, lim)

    params = {
        "w_k2f": lin(ks[2], n_rbf, (n_rbf, feat)),
        "w_i": lin(ks[3], feat, (feat, feat)), "b_i": lin(ks[4], feat, (feat,)),
        "w_j": lin(ks[5], feat, (feat, feat)), "b_j": lin(ks[6], feat, (feat,)),
        "w_d": lin(ks[7], feat, (feat, feat)), "b_d": lin(ks[8], feat, (feat,)),
        "u": jax.random.uniform(ks[9], (feat,), dtype=jnp.float32),
        "res_w1": [lin(ks[10 + 4 * i], feat, (feat, feat)) for i in range(n_res)],
        "res_b1": [lin(ks[11 + 4 * i], feat, (feat,)) for i in range(n_res)],
        "res_w2": [lin(ks[12 + 4 * i], feat, (feat, feat)) for i in range(n_res)],
        "res_b2": [lin(ks[13 + 4 * i], feat, (feat,)) for i in range(n_res)],
    }

    out = physnet_interaction_forward(x, rbf, idx_i, idx_j, params)
    out = jax.block_until_ready(out)

    ref = _reference(x, rbf, idx_j, params)
    assert out.shape == (n_atoms, feat)
    err = float(jnp.max(jnp.abs(out - ref)))
    assert jnp.allclose(out, ref, atol=1e-4, rtol=1e-4), f"mismatch vs reference: {err}"

    print("KERNEL_OK")
</pallas_src>

<mosaic_0001>
module attributes {stable_mosaic.version = 11 : i64} {
  func.func @_physnet_interaction_kernel(%arg0: memref<8x32xf32, #tpu.memory_space<vmem>>, %arg1: memref<56x16xf32, #tpu.memory_space<vmem>>, %arg2: memref<56x8xf32, #tpu.memory_space<vmem>>, %arg3: memref<39x224xf32, #tpu.memory_space<vmem>>, %arg4: memref<224x39xf32, #tpu.memory_space<vmem>>, %arg5: memref<16x32xf32, #tpu.memory_space<vmem>>, %arg6: memref<32x64xf32, #tpu.memory_space<vmem>>, %arg7: memref<5x32x32xf32, #tpu.memory_space<vmem>>, %arg8: memref<8x32xf32, #tpu.memory_space<vmem>>, %arg9: memref<8x32xf32, #tpu.memory_space<vmem>>, %arg10: memref<8x224xf32, #tpu.memory_space<vmem>>) attributes {dimension_semantics = [], scalar_prefetch = 0 : i64, scratch_operands = 1 : i64, tpu.core_type = #tpu.core_type<tc>} {
    %c0 = arith.constant 0 : index
    %c0_0 = arith.constant 0 : index
    %0 = vector.load %arg0[%c0, %c0_0] : memref<8x32xf32, #tpu.memory_space<vmem>>, vector<8x32xf32>
    %c0_1 = arith.constant 0 : index
    %c0_2 = arith.constant 0 : index
    %1 = vector.load %arg8[%c0_1, %c0_2] : memref<8x32xf32, #tpu.memory_space<vmem>>, vector<8x32xf32>
    %2 = vector.extract_strided_slice %1 {offsets = [0, 0], sizes = [1, 32], strides = [1, 1]} : vector<8x32xf32> to vector<1x32xf32>
    %3 = vector.extract_strided_slice %1 {offsets = [1, 0], sizes = [1, 32], strides = [1, 1]} : vector<8x32xf32> to vector<1x32xf32>
    %4 = vector.extract_strided_slice %1 {offsets = [2, 0], sizes = [1, 32], strides = [1, 1]} : vector<8x32xf32> to vector<1x32xf32>
    %5 = vector.extract_strided_slice %1 {offsets = [7, 0], sizes = [1, 32], strides = [1, 1]} : vector<8x32xf32> to vector<1x32xf32>
    %cst = arith.constant 0.000000e+00 : f32
    %6 = vector.broadcast %cst : f32 to vector<8x32xf32>
    %7 = arith.maximumf %0, %6 : vector<8x32xf32>
    %8 = math.absf %0 : vector<8x32xf32>
    %cst_3 = arith.constant 0.000000e+00 : f32
    %9 = vector.broadcast %cst_3 : f32 to vector<8x32xf32>
    %10 = arith.subf %9, %8 : vector<8x32xf32>
    %11 = math.exp %10 : vector<8x32xf32>
    %12 = math.log1p %11 : vector<8x32xf32>
    %13 = arith.addf %7, %12 : vector<8x32xf32>
    %c0_4 = arith.constant 0 : index
    %c0_5 = arith.constant 0 : index
    %14 = vector.load %arg6[%c0_4, %c0_5] : memref<32x64xf32, #tpu.memory_space<vmem>>, vector<32x64xf32>
    %cst_6 = arith.constant dense<0.000000e+00> : vector<8x64xf32>
    %15 = tpu.matmul %13, %14, %cst_6 {dimension_numbers = #tpu.dot_dimension_numbers<[1], [0], [0], [1], [0, 0, 1, 1], [], []>, precision = #tpu.contract_precision<fp32>} : vector<8x32xf32>, vector<32x64xf32>, vector<8x64xf32> -> vector<8x64xf32>
    %16 = vector.extract_strided_slice %15 {offsets = [0, 0], sizes = [8, 32], strides = [1, 1]} : vector<8x64xf32> to vector<8x32xf32>
    %17 = vector.broadcast %2 : vector<1x32xf32> to vector<8x32xf32>
    %18 = arith.addf %16, %17 : vector<8x32xf32>
    %19 = vector.extract_strided_slice %15 {offsets = [0, 32], sizes = [8, 32], strides = [1, 1]} : vector<8x64xf32> to vector<8x32xf32>
    %20 = vector.broadcast %3 : vector<1x32xf32> to vector<8x32xf32>
    %21 = arith.addf %19, %20 : vector<8x32xf32>
    %c0_7 = arith.constant 0 : index
    %c0_8 = arith.constant 0 : index
    %22 = vector.load %arg1[%c0_7, %c0_8] : memref<56x16xf32, #tpu.memory_space<vmem>>, vector<56x16xf32>
    %c0_9 = arith.constant 0 : index
    %c0_10 = arith.constant 0 : index
    %23 = vector.load %arg5[%c0_9, %c0_10] : memref<16x32xf32, #tpu.memory_space<vmem>>, vector<16x32xf32>
    %cst_11 = arith.constant dense<0.000000e+00> : vector<56x32xf32>
    %24 = tpu.matmul %22, %23, %cst_11 {dimension_numbers = #tpu.dot_dimension_numbers<[1], [0], [0], [1], [0, 0, 1, 1], [], []>, precision = #tpu.contract_precision<fp32>} : vector<56x16xf32>, vector<16x32xf32>, vector<56x32xf32> -> vector<56x32xf32>
    %c0_12 = arith.constant 0 : index
    %c0_13 = arith.constant 0 : index
    %25 = vector.load %arg2[%c0_12, %c0_13] : memref<56x8xf32, #tpu.memory_space<vmem>>, vector<56x8xf32>
    %cst_14 = arith.constant dense<0.000000e+00> : vector<56x32xf32>
    %26 = tpu.matmul %25, %21, %cst_14 {dimension_numbers = #tpu.dot_dimension_numbers<[1], [0], [0], [1], [0, 0, 1, 1], [], []>, precision = #tpu.contract_precision<fp32>} : vector<56x8xf32>, vector<8x32xf32>, vector<56x32xf32> -> vector<56x32xf32>
    %27 = arith.mulf %24, %26 : vector<56x32xf32>
    %28 = vector.extract_strided_slice %27 {offsets = [0, 0], sizes = [8, 32], strides = [1, 1]} : vector<56x32xf32> to vector<8x32xf32>
    %c0_15 = arith.constant 0 : index
    %c0_16 = arith.constant 0 : index
    %29 = vector.load %arg10[%c0_15, %c0_16] : memref<8x224xf32, #tpu.memory_space<vmem>>, vector<8x32xf32>
    tpu.vector_store %arg10[%c0_15, %c0_16], %28 {strides = array<i32>} : memref<8x224xf32, #tpu.memory_space<vmem>>, vector<8x32xf32>,
    %30 = vector.extract_strided_slice %27 {offsets = [8, 0], sizes = [8, 32], strides = [1, 1]} : vector<56x32xf32> to vector<8x32xf32>
    %c0_17 = arith.constant 0 : index
    %c32 = arith.constant 32 : index
    %31 = vector.load %arg10[%c0_17, %c32] : memref<8x224xf32, #tpu.memory_space<vmem>>, vector<8x32xf32>
    tpu.vector_store %arg10[%c0_17, %c32], %30 {strides = array<i32>} : memref<8x224xf32, #tpu.memory_space<vmem>>, vector<8x32xf32>,
    %32 = vector.extract_strided_slice %27 {offsets = [16, 0], sizes = [8, 32], strides = [1, 1]} : vector<56x32xf32> to vector<8x32xf32>
    %c0_18 = arith.constant 0 : index
    %c64 = arith.constant 64 : index
    %33 = vector.load %arg10[%c0_18, %c64] : memref<8x224xf32, #tpu.memory_space<vmem>>, vector<8x32xf32>
    tpu.vector_store %arg10[%c0_18, %c64], %32 {strides = array<i32>} : memref<8x224xf32, #tpu.memory_space<vmem>>, vector<8x32xf32>,
    %34 = vector.extract_strided_slice %27 {offsets = [24, 0], sizes = [8, 32], strides = [1, 1]} : vector<56x32xf32> to vector<8x32xf32>
    %c0_19 = arith.constant 0 : index
    %c96 = arith.constant 96 : index
    %35 = vector.load %arg10[%c0_19, %c96] : memref<8x224xf32, #tpu.memory_space<vmem>>, vector<8x32xf32>
    tpu.vector_store %arg10[%c0_19, %c96], %34 {strides = array<i32>} : memref<8x224xf32, #tpu.memory_space<vmem>>, vector<8x32xf32>,
    %36 = vector.extract_strided_slice %27 {offsets = [32, 0], sizes = [8, 32], strides = [1, 1]} : vector<56x32xf32> to vector<8x32xf32>
    %c0_20 = arith.constant 0 : index
    %c128 = arith.constant 128 : index
    %37 = vector.load %arg10[%c0_20, %c128] : memref<8x224xf32, #tpu.memory_space<vmem>>, vector<8x32xf32>
    tpu.vector_store %arg10[%c0_20, %c128], %36 {strides = array<i32>} : memref<8x224xf32, #tpu.memory_space<vmem>>, vector<8x32xf32>,
    %38 = vector.extract_strided_slice %27 {offsets = [40, 0], sizes = [8, 32], strides = [1, 1]} : vector<56x32xf32> to vector<8x32xf32>
    %c0_21 = arith.constant 0 : index
    %c160 = arith.constant 160 : index
    %39 = vector.load %arg10[%c0_21, %c160] : memref<8x224xf32, #tpu.memory_space<vmem>>, vector<8x32xf32>
    tpu.vector_store %arg10[%c0_21, %c160], %38 {strides = array<i32>} : memref<8x224xf32, #tpu.memory_space<vmem>>, vector<8x32xf32>,
    %40 = vector.extract_strided_slice %27 {offsets = [48, 0], sizes = [8, 32], strides = [1, 1]} : vector<56x32xf32> to vector<8x32xf32>
    %c0_22 = arith.constant 0 : index
    %c192 = arith.constant 192 : index
    %41 = vector.load %arg10[%c0_22, %c192] : memref<8x224xf32, #tpu.memory_space<vmem>>, vector<8x32xf32>
    tpu.vector_store %arg10[%c0_22, %c192], %40 {strides = array<i32>} : memref<8x224xf32, #tpu.memory_space<vmem>>, vector<8x32xf32>,
    %c0_23 = arith.constant 0 : index
    %c0_24 = arith.constant 0 : index
    %42 = vector.load %arg10[%c0_23, %c0_24] : memref<8x224xf32, #tpu.memory_space<vmem>>, vector<8x224xf32>
    %c0_25 = arith.constant 0 : index
    %c0_26 = arith.constant 0 : index
    %43 = vector.load %arg3[%c0_25, %c0_26] : memref<39x224xf32, #tpu.memory_space<vmem>>, vector<39x224xf32>
    %44 = vector.extract_strided_slice %43 {offsets = [0, 0], sizes = [32, 224], strides = [1, 1]} : vector<39x224xf32> to vector<32x224xf32>
    %45 = vector.extract_strided_slice %43 {offsets = [32, 0], sizes = [7, 224], strides = [1, 1]} : vector<39x224xf32> to vector<7x224xf32>
    %c0_27 = arith.constant 0 : index
    %c0_28 = arith.constant 0 : index
    %46 = vector.load %arg4[%c0_27, %c0_28] : memref<224x39xf32, #tpu.memory_space<vmem>>, vector<224x39xf32>
    %47 = vector.extract_strided_slice %46 {offsets = [0, 0], sizes = [224, 32], strides = [1, 1]} : vector<224x39xf32> to vector<224x32xf32>
    %48 = vector.extract_strided_slice %46 {offsets = [0, 32], sizes = [224, 7], strides = [1, 1]} : vector<224x39xf32> to vector<224x7xf32>
    %cst_29 = arith.constant dense<0.000000e+00> : vector<8x224xf32>
    %49 = tpu.matmul %18, %44, %cst_29 {dimension_numbers = #tpu.dot_dimension_numbers<[1], [0], [0], [1], [0, 0, 1, 1], [], []>, precision = #tpu.contract_precision<fp32>} : vector<8x32xf32>, vector<32x224xf32>, vector<8x224xf32> -> vector<8x224xf32>
    %50 = arith.mulf %49, %42 : vector<8x224xf32>
    %cst_30 = arith.constant dense<0.000000e+00> : vector<8x7xf32>
    %51 = tpu.matmul %50, %48, %cst_30 {dimension_numbers = #tpu.dot_dimension_numbers<[1], [0], [0], [1], [0, 0, 1, 1], [], []>, precision = #tpu.contract_precision<fp32>} : vector<8x224xf32>, vector<224x7xf32>, vector<8x7xf32> -> vector<8x7xf32>
    %cst_31 = arith.constant dense<0xFF800000> : vector<8xf32>
    %52 = vector.multi_reduction <maximumf>, %51, %cst_31 [1] : vector<8x7xf32> to vector<8xf32>
    %53 = vector.shape_cast %52 : vector<8xf32> to vector<8x1xf32>
    %54 = vector.broadcast %53 : vector<8x1xf32> to vector<8x7xf32>
    %55 = arith.subf %51, %54 : vector<8x7xf32>
    %56 = math.exp %55 : vector<8x7xf32>
    %cst_32 = arith.constant dense<0.000000e+00> : vector<8xf32>
    %57 = vector.multi_reduction <add>, %56, %cst_32 [1] : vector<8x7xf32> to vector<8xf32>
    %58 = vector.shape_cast %57 : vector<8xf32> to vector<8x1xf32>
    %59 = vector.broadcast %58 : vector<8x1xf32> to vector<8x7xf32>
    %60 = arith.divf %56, %59 : vector<8x7xf32>
    %cst_33 = arith.constant dense<0.000000e+00> : vector<8x224xf32>
    %61 = tpu.matmul %60, %45, %cst_33 {dimension_numbers = #tpu.dot_dimension_numbers<[1], [0], [0], [1], [0, 0, 1, 1], [], []>, precision = #tpu.contract_precision<fp32>} : vector<8x7xf32>, vector<7x224xf32>, vector<8x224xf32> -> vector<8x224xf32>
    %62 = arith.mulf %61, %42 : vector<8x224xf32>
    %cst_34 = arith.constant dense<0.000000e+00> : vector<8x32xf32>
    %63 = tpu.matmul %62, %47, %cst_34 {dimension_numbers = #tpu.dot_dimension_numbers<[1], [0], [0], [1], [0, 0, 1, 1], [], []>, precision = #tpu.contract_precision<fp32>} : vector<8x224xf32>, vector<224x32xf32>, vector<8x32xf32> -> vector<8x32xf32>
    %64 = arith.addf %18, %63 : vector<8x32xf32>
    %cst_35 = arith.constant 0.000000e+00 : f32
    %65 = vector.broadcast %cst_35 : f32 to vector<8x32xf32>
    %66 = arith.maximumf %64, %65 : vector<8x32xf32>
    %67 = math.absf %64 : vector<8x32xf32>
    %cst_36 = arith.constant 0.000000e+00 : f32
    %68 = vector.broadcast %cst_36 : f32 to vector<8x32xf32>
    %69 = arith.subf %68, %67 : vector<8x32xf32>
    %70 = math.exp %69 : vector<8x32xf32>
    %71 = math.log1p %70 : vector<8x32xf32>
    %72 = arith.addf %66, %71 : vector<8x32xf32>
    %c1 = arith.constant 1 : index
    %c0_37 = arith.constant 0 : index
    %c0_38 = arith.constant 0 : index
    %73 = vector.load %arg7[%c1, %c0_37, %c0_38] : memref<5x32x32xf32, #tpu.memory_space<vmem>>, vector<1x32x32xf32>
    %74 = vector.shape_cast %73 : vector<1x32x32xf32> to vector<32x32xf32>
    %cst_39 = arith.constant dense<0.000000e+00> : vector<8x32xf32>
    %75 = tpu.matmul %72, %74, %cst_39 {dimension_numbers = #tpu.dot_dimension_numbers<[1], [0], [0], [1], [0, 0, 1, 1], [], []>, precision = #tpu.contract_precision<fp32>} : vector<8x32xf32>, vector<32x32xf32>, vector<8x32xf32> -> vector<8x32xf32>
    %76 = vector.extract_strided_slice %1 {offsets = [3, 0], sizes = [1, 32], strides = [1, 1]} : vector<8x32xf32> to vector<1x32xf32>
    %77 = vector.broadcast %76 : vector<1x32xf32> to vector<8x32xf32>
    %78 = arith.addf %75, %77 : vector<8x32xf32>
    %c2 = arith.constant 2 : index
    %c0_40 = arith.constant 0 : index
    %c0_41 = arith.constant 0 : index
    %79 = vector.load %arg7[%c2, %c0_40, %c0_41] : memref<5x32x32xf32, #tpu.memory_space<vmem>>, vector<1x32x32xf32>
    %80 = vector.shape_cast %79 : vector<1x32x32xf32> to vector<32x32xf32>
    %cst_42 = arith.constant dense<0.000000e+00> : vector<8x32xf32>
    %81 = tpu.matmul %78, %80, %cst_42 {dimension_numbers = #tpu.dot_dimension_numbers<[1], [0], [0], [1], [0, 0, 1, 1], [], []>, precision = #tpu.contract_precision<fp32>} : vector<8x32xf32>, vector<32x32xf32>, vector<8x32xf32> -> vector<8x32xf32>
    %82 = vector.extract_strided_slice %1 {offsets = [4, 0], sizes = [1, 32], strides = [1, 1]} : vector<8x32xf32> to vector<1x32xf32>
    %83 = vector.broadcast %82 : vector<1x32xf32> to vector<8x32xf32>
    %84 = arith.addf %81, %83 : vector<8x32xf32>
    %85 = arith.addf %64, %84 : vector<8x32xf32>
    %cst_43 = arith.constant 0.000000e+00 : f32
    %86 = vector.broadcast %cst_43 : f32 to vector<8x32xf32>
    %87 = arith.maximumf %85, %86 : vector<8x32xf32>
    %88 = math.absf %85 : vector<8x32xf32>
    %cst_44 = arith.constant 0.000000e+00 : f32
    %89 = vector.broadcast %cst_44 : f32 to vector<8x32xf32>
    %90 = arith.subf %89, %88 : vector<8x32xf32>
    %91 = math.exp %90 : vector<8x32xf32>
    %92 = math.log1p %91 : vector<8x32xf32>
    %93 = arith.addf %87, %92 : vector<8x32xf32>
    %c3 = arith.constant 3 : index
    %c0_45 = arith.constant 0 : index
    %c0_46 = arith.constant 0 : index
    %94 = vector.load %arg7[%c3, %c0_45, %c0_46] : memref<5x32x32xf32, #tpu.memory_space<vmem>>, vector<1x32x32xf32>
    %95 = vector.shape_cast %94 : vector<1x32x32xf32> to vector<32x32xf32>
    %cst_47 = arith.constant dense<0.000000e+00> : vector<8x32xf32>
    %96 = tpu.matmul %93, %95, %cst_47 {dimension_numbers = #tpu.dot_dimension_numbers<[1], [0], [0], [1], [0, 0, 1, 1], [], []>, precision = #tpu.contract_precision<fp32>} : vector<8x32xf32>, vector<32x32xf32>, vector<8x32xf32> -> vector<8x32xf32>
    %97 = vector.extract_strided_slice %1 {offsets = [5, 0], sizes = [1, 32], strides = [1, 1]} : vector<8x32xf32> to vector<1x32xf32>
    %98 = vector.broadcast %97 : vector<1x32xf32> to vector<8x32xf32>
    %99 = arith.addf %96, %98 : vector<8x32xf32>
    %c4 = arith.constant 4 : index
    %c0_48 = arith.constant 0 : index
    %c0_49 = arith.constant 0 : index
    %100 = vector.load %arg7[%c4, %c0_48, %c0_49] : memref<5x32x32xf32, #tpu.memory_space<vmem>>, vector<1x32x32xf32>
    %101 = vector.shape_cast %100 : vector<1x32x32xf32> to vector<32x32xf32>
    %cst_50 = arith.constant dense<0.000000e+00> : vector<8x32xf32>
    %102 = tpu.matmul %99, %101, %cst_50 {dimension_numbers = #tpu.dot_dimension_numbers<[1], [0], [0], [1], [0, 0, 1, 1], [], []>, precision = #tpu.contract_precision<fp32>} : vector<8x32xf32>, vector<32x32xf32>, vector<8x32xf32> -> vector<8x32xf32>
    %103 = vector.extract_strided_slice %1 {offsets = [6, 0], sizes = [1, 32], strides = [1, 1]} : vector<8x32xf32> to vector<1x32xf32>
    %104 = vector.broadcast %103 : vector<1x32xf32> to vector<8x32xf32>
    %105 = arith.addf %102, %104 : vector<8x32xf32>
    %106 = arith.addf %85, %105 : vector<8x32xf32>
    %cst_51 = arith.constant 0.000000e+00 : f32
    %107 = vector.broadcast %cst_51 : f32 to vector<8x32xf32>
    %108 = arith.maximumf %106, %107 : vector<8x32xf32>
    %109 = math.absf %106 : vector<8x32xf32>
    %cst_52 = arith.constant 0.000000e+00 : f32
    %110 = vector.broadcast %cst_52 : f32 to vector<8x32xf32>
    %111 = arith.subf %110, %109 : vector<8x32xf32>
    %112 = math.exp %111 : vector<8x32xf32>
    %113 = math.log1p %112 : vector<8x32xf32>
    %114 = arith.addf %108, %113 : vector<8x32xf32>
    %115 = vector.broadcast %5 : vector<1x32xf32> to vector<8x32xf32>
    %116 = arith.mulf %115, %0 : vector<8x32xf32>
    %c0_53 = arith.constant 0 : index
    %c0_54 = arith.constant 0 : index
    %c0_55 = arith.constant 0 : index
    %117 = vector.load %arg7[%c0_53, %c0_54, %c0_55] : memref<5x32x32xf32, #tpu.memory_space<vmem>>, vector<1x32x32xf32>
    %118 = vector.shape_cast %117 : vector<1x32x32xf32> to vector<32x32xf32>
    %cst_56 = arith.constant dense<0.000000e+00> : vector<8x32xf32>
    %119 = tpu.matmul %114, %118, %cst_56 {dimension_numbers = #tpu.dot_dimension_numbers<[1], [0], [0], [1], [0, 0, 1, 1], [], []>, precision = #tpu.contract_precision<fp32>} : vector<8x32xf32>, vector<32x32xf32>, vector<8x32xf32> -> vector<8x32xf32>
    %120 = arith.addf %116, %119 : vector<8x32xf32>
    %121 = vector.broadcast %4 : vector<1x32xf32> to vector<8x32xf32>
    %122 = arith.addf %120, %121 : vector<8x32xf32>
    %c0_57 = arith.constant 0 : index
    %c0_58 = arith.constant 0 : index
    %123 = vector.load %arg9[%c0_57, %c0_58] : memref<8x32xf32, #tpu.memory_space<vmem>>, vector<8x32xf32>
    tpu.vector_store %arg9[%c0_57, %c0_58], %122 {strides = array<i32>} : memref<8x32xf32, #tpu.memory_space<vmem>>, vector<8x32xf32>,
    return
  }
}

</mosaic_0001>

<llo_original>
// kernel: tpu_custom_call.1
$region0: #{tpu_custom_call.1}
  #allocation0 [shape = 'u32[]', space=smem, size = 0x4, offset = 0x4, fixed_abs, tag = 'smem constant byte address 0x4 - core index']
  #allocation1 [shape = 'u32[72,128]{1,0:T(1,128)}', space=vmem, size = 0x9000, scoped, tag = 'internal scratch']
  #allocation2 [shape = 'f32[8,224]{1,0:T(8,128)}', space=vmem, size = 0x2000, scoped, tag = 'scratch operand']
  %s0 = inlined_call_operand.vmem [shape: f32[8,32], index: 0, kind: input, shape index: {}]
  %s1 = inlined_call_operand.vmem [shape: f32[56,16], index: 1, kind: input, shape index: {}]
  %s2 = inlined_call_operand.vmem [shape: f32[56,8], index: 2, kind: input, shape index: {}]
  %s3 = inlined_call_operand.vmem [shape: f32[39,224], index: 3, kind: input, shape index: {}]
  %s4 = inlined_call_operand.vmem [shape: f32[224,39], index: 4, kind: input, shape index: {}]
  %s5 = inlined_call_operand.vmem [shape: f32[16,32], index: 5, kind: input, shape index: {}]
  %s6 = inlined_call_operand.vmem [shape: f32[32,64], index: 6, kind: input, shape index: {}]
  %s7 = inlined_call_operand.vmem [shape: f32[5,32,32], index: 7, kind: input, shape index: {}]
  %s8 = inlined_call_operand.vmem [shape: f32[8,32], index: 8, kind: input, shape index: {}]
  %s9 = inlined_call_operand.hbm [shape: f32[8,32], index: 9, kind: output, shape index: {}]
  %s10 = sld [smem:[#allocation0]]
  $region46: #{tpu_custom_call.1} parent=0
    _
  %s12 = ssub.s32 1, %s10
  %s13 = scalar_select 0, %s12, %s10
  $region1: #{tpu_custom_call.1} parent=0
    #allocation3 [shape = 'u8[4096]{0}', space=vmem, size = 0x1000, scoped, tag = 'output window, operand 0, single buffered']
    #allocation4 [shape = 's32[1]{0}', space=sflag, size = 0x4, scoped, tag = 'scoped memory for tpu_custom_call.1']
    %14 = vsyncpa [#allocation4], 0
    // Predicated region
    $region2: #{tpu_custom_call.1} parent=1 // pred_check
      _
    $region3: #{tpu_custom_call.1} parent=1 // pred_check_branch
      %16 = sbr.rel (0) target = $region5
    $region4: #{tpu_custom_call.1} parent=1 // pred_region
      _
    $region5: #{tpu_custom_call.1} parent=1 // pred_fallthru
      _
    // Predicated region
    $region6: #{tpu_custom_call.1} parent=1 // pred_check
      _
    $region7: #{tpu_custom_call.1} parent=1 // pred_check_branch
      %18 = sbr.rel (0) target = $region9
    $region8: #{tpu_custom_call.1} parent=1 // pred_region
      _
    $region9: #{tpu_custom_call.1} parent=1 // pred_fallthru
      _
    // Predicated region
    $region10: #{tpu_custom_call.1} parent=1 // pred_check
      _
    $region11: #{tpu_custom_call.1} parent=1 // pred_check_branch
      %20 = sbr.rel (0) target = $region13
    $region12: #{tpu_custom_call.1} parent=1 // pred_region
      _
    $region13: #{tpu_custom_call.1} parent=1 // pred_fallthru
      _
    // Predicated region
    $region14: #{tpu_custom_call.1} parent=1 // pred_check
      _
    $region15: #{tpu_custom_call.1} parent=1 // pred_check_branch
      %22 = sbr.rel (0) target = $region17
    $region16: #{tpu_custom_call.1} parent=1 // pred_region
      _
    $region17: #{tpu_custom_call.1} parent=1 // pred_fallthru
      _
    // Predicated region
    $region18: #{tpu_custom_call.1} parent=1 // pred_check
      _
    $region19: #{tpu_custom_call.1} parent=1 // pred_check_branch
      %24 = sbr.rel (0) target = $region21
    $region20: #{tpu_custom_call.1} parent=1 // pred_region
      _
    $region21: #{tpu_custom_call.1} parent=1 // pred_fallthru
      _
    // Predicated region
    $region22: #{tpu_custom_call.1} parent=1 // pred_check
      _
    $region23: #{tpu_custom_call.1} parent=1 // pred_check_branch
      %26 = sbr.rel (0) target = $region25
    $region24: #{tpu_custom_call.1} parent=1 // pred_region
      _
    $region25: #{tpu_custom_call.1} parent=1 // pred_fallthru
      _
    // Predicated region
    $region26: #{tpu_custom_call.1} parent=1 // pred_check
      _
    $region27: #{tpu_custom_call.1} parent=1 // pred_check_branch
      %28 = sbr.rel (0) target = $region29
    $region28: #{tpu_custom_call.1} parent=1 // pred_region
      _
    $region29: #{tpu_custom_call.1} parent=1 // pred_fallthru
      _
    // Predicated region
    $region30: #{tpu_custom_call.1} parent=1 // pred_check
      _
    $region31: #{tpu_custom_call.1} parent=1 // pred_check_branch
      %30 = sbr.rel (0) target = $region33
    $region32: #{tpu_custom_call.1} parent=1 // pred_region
      _
    $region33: #{tpu_custom_call.1} parent=1 // pred_fallthru
      _
    // Predicated region
    $region34: #{tpu_custom_call.1} parent=1 // pred_check
      _
    $region35: #{tpu_custom_call.1} parent=1 // pred_check_branch
      %32 = sbr.rel (0) target = $region37
    $region36: #{tpu_custom_call.1} parent=1 // pred_region
      _
    $region37: #{tpu_custom_call.1} parent=1 // pred_fallthru
      _
    %v33 = vld [vmem:[%s0] sm:$0xff]
    %v34 = vld [vmem:[%s8] sm:$0xff]
    %v35 = vmax.f32 %v33, 0.0
    %v36 = vand.u32 2147483647, %v33
    %v37 = vsub.f32 0.0, %v36
    %v38 = vmul.f32 %v37, 1.442695
    %v39 = vpow.pop %v38
    %v40 = vadd.f32 %v39, 1.0
    %v41 = vlog2.pop %v40
    %v42 = vmul.f32 %v41, 0.6931472
    %v43 = vmul.f32 -0.5, %v39
    %v44 = vadd.f32 %v43, 1.0
    %v45 = vmul.f32 %v44, %v39
    %v46 = vand.u32 2147483647, %v39
    %vm47 = vcmp.lt.f32.partialorder %v46, 0.0004427343
    %v48 = vsel %vm47, %v45, %v42
    %v49 = vadd.f32 %v35, %v48
    %v50 = vld [vmem:[%s6] sm:$0xff]
    %v51 = vld [vmem:[%s6 + $0x8] sm:$0xff]
    %v52 = vld [vmem:[%s6 + $0x10] sm:$0xff]
    %v53 = vld [vmem:[%s6 + $0x18] sm:$0xff]
    %vm54 = vcmask 261120
    %v56 = vsel %vm54, %v49, 0
    %58 = vmatpush.msra.mxu0 0.0
    %59 = vmatpush.msra.mxu0 0.0
    %60 = vmatpush.msra.mxu0 0.0
    %61 = vmatpush.msra.mxu0 0.0
    %62 = vmatpush.msra.mxu0 0.0
    %63 = vmatpush.msra.mxu0 0.0
    %64 = vmatpush.msra.mxu0 0.0
    %65 = vmatpush.msra.mxu0 0.0
    %66 = vmatpush.msra.mxu0 0.0
    %67 = vmatpush.msra.mxu0 0.0
    %68 = vmatpush.msra.mxu0 0.0
    %69 = vmatpush.msra.mxu0 0.0
    %v70 = vand.u32 %v53, 4294901760
    %71 = vmatpush.msra.mxu0 %v70
    %v72 = vand.u32 %v52, 4294901760
    %73 = vmatpush.msra.mxu0 %v72
    %v74 = vand.u32 %v51, 4294901760
    %75 = vmatpush.msra.mxu0 %v74
    %v76 = vand.u32 %v50, 4294901760
    %77 = vmatpush.msra.mxu0 %v76
    %v78 = vand.u32 %v56, 4294901760
    %v79 = vsub.f32 %v56, %v78
    %v80 = vand.u32 %v79, 4294901760
    %v81 = vsub.f32 %v79, %v80
    %v82 = vand.u32 %v81, 4294901760
    %83 = vmatmul.f32.gmra.mxu0 %v82
    %v84 = vpop.f32.mrf.mxu0
    %v85 = vadd.f32 0.0, %v84
    %86 = vdwg.mxu0
    %87 = vmatpush.msra.mxu0 0.0
    %88 = vmatpush.msra.mxu0 0.0
    %89 = vmatpush.msra.mxu0 0.0
    %90 = vmatpush.msra.mxu0 0.0
    %91 = vmatpush.msra.mxu0 0.0
    %92 = vmatpush.msra.mxu0 0.0
    %93 = vmatpush.msra.mxu0 0.0
    %94 = vmatpush.msra.mxu0 0.0
    %95 = vmatpush.msra.mxu0 0.0
    %96 = vmatpush.msra.mxu0 0.0
    %97 = vmatpush.msra.mxu0 0.0
    %98 = vmatpush.msra.mxu0 0.0
    %v99 = vand.u32 %v53, 4294901760
    %v100 = vsub.f32 %v53, %v99
    %v101 = vand.u32 %v100, 4294901760
    %v102 = vsub.f32 %v100, %v101
    %v103 = vand.u32 %v102, 4294901760
    %104 = vmatpush.msra.mxu0 %v103
    %v105 = vand.u32 %v52, 4294901760
    %v106 = vsub.f32 %v52, %v105
    %v107 = vand.u32 %v106, 4294901760
    %v108 = vsub.f32 %v106, %v107
    %v109 = vand.u32 %v108, 4294901760
    %110 = vmatpush.msra.mxu0 %v109
    %v111 = vand.u32 %v51, 4294901760
    %v112 = vsub.f32 %v51, %v111
    %v113 = vand.u32 %v112, 4294901760
    %v114 = vsub.f32 %v112, %v113
    %v115 = vand.u32 %v114, 4294901760
    %116 = vmatpush.msra.mxu0 %v115
    %v117 = vand.u32 %v50, 4294901760
    %v118 = vsub.f32 %v50, %v117
    %v119 = vand.u32 %v118, 4294901760
    %v120 = vsub.f32 %v118, %v119
    %v121 = vand.u32 %v120, 4294901760
    %122 = vmatpush.msra.mxu0 %v121
    %v123 = vand.u32 %v56, 4294901760
    %124 = vmatmul.f32.gmra.mxu0 %v123
    %v125 = vpop.f32.mrf.mxu0
    %v126 = vadd.f32 %v85, %v125
    %127 = vdwg.mxu0
    %128 = vmatpush.msra.mxu0 0.0
    %129 = vmatpush.msra.mxu0 0.0
    %130 = vmatpush.msra.mxu0 0.0
    %131 = vmatpush.msra.mxu0 0.0
    %132 = vmatpush.msra.mxu0 0.0
    %133 = vmatpush.msra.mxu0 0.0
    %134 = vmatpush.msra.mxu0 0.0
    %135 = vmatpush.msra.mxu0 0.0
    %136 = vmatpush.msra.mxu0 0.0
    %137 = vmatpush.msra.mxu0 0.0
    %138 = vmatpush.msra.mxu0 0.0
    %139 = vmatpush.msra.mxu0 0.0
    %v140 = vand.u32 %v53, 4294901760
    %v141 = vsub.f32 %v53, %v140
    %142 = vmatpush.msra.mxu0 %v141
    %v143 = vand.u32 %v52, 4294901760
    %v144 = vsub.f32 %v52, %v143
    %145 = vmatpush.msra.mxu0 %v144
    %v146 = vand.u32 %v51, 4294901760
    %v147 = vsub.f32 %v51, %v146
    %148 = vmatpush.msra.mxu0 %v147
    %v149 = vand.u32 %v50, 4294901760
    %v150 = vsub.f32 %v50, %v149
    %151 = vmatpush.msra.mxu0 %v150
    %v152 = vand.u32 %v56, 4294901760
    %v153 = vsub.f32 %v56, %v152
    %154 = vmatmul.f32.gmra.mxu0 %v153
    %v155 = vpop.f32.mrf.mxu0
    %v156 = vadd.f32 %v126, %v155
    %157 = vdwg.mxu0
    %158 = vmatpush.msra.mxu0 0.0
    %159 = vmatpush.msra.mxu0 0.0
    %160 = vmatpush.msra.mxu0 0.0
    %161 = vmatpush.msra.mxu0 0.0
    %162 = vmatpush.msra.mxu0 0.0
    %163 = vmatpush.msra.mxu0 0.0
    %164 = vmatpush.msra.mxu0 0.0
    %165 = vmatpush.msra.mxu0 0.0
    %166 = vmatpush.msra.mxu0 0.0
    %167 = vmatpush.msra.mxu0 0.0
    %168 = vmatpush.msra.mxu0 0.0
    %169 = vmatpush.msra.mxu0 0.0
    %v170 = vand.u32 %v53, 4294901760
    %171 = vmatpush.msra.mxu0 %v170
    %v172 = vand.u32 %v52, 4294901760
    %173 = vmatpush.msra.mxu0 %v172
    %v174 = vand.u32 %v51, 4294901760
    %175 = vmatpush.msra.mxu0 %v174
    %v176 = vand.u32 %v50, 4294901760
    %177 = vmatpush.msra.mxu0 %v176
    %v178 = vand.u32 %v56, 4294901760
    %v179 = vsub.f32 %v56, %v178
    %v180 = vand.u32 %v179, 4294901760
    %181 = vmatmul.f32.gmra.mxu0 %v180
    %v182 = vpop.f32.mrf.mxu0
    %v183 = vadd.f32 %v156, %v182
    %184 = vdwg.mxu0
    %185 = vmatpush.msra.mxu0 0.0
    %186 = vmatpush.msra.mxu0 0.0
    %187 = vmatpush.msra.mxu0 0.0
    %188 = vmatpush.msra.mxu0 0.0
    %189 = vmatpush.msra.mxu0 0.0
    %190 = vmatpush.msra.mxu0 0.0
    %191 = vmatpush.msra.mxu0 0.0
    %192 = vmatpush.msra.mxu0 0.0
    %193 = vmatpush.msra.mxu0 0.0
    %194 = vmatpush.msra.mxu0 0.0
    %195 = vmatpush.msra.mxu0 0.0
    %196 = vmatpush.msra.mxu0 0.0
    %v197 = vand.u32 %v53, 4294901760
    %v198 = vsub.f32 %v53, %v197
    %v199 = vand.u32 %v198, 4294901760
    %200 = vmatpush.msra.mxu0 %v199
    %v201 = vand.u32 %v52, 4294901760
    %v202 = vsub.f32 %v52, %v201
    %v203 = vand.u32 %v202, 4294901760
    %204 = vmatpush.msra.mxu0 %v203
    %v205 = vand.u32 %v51, 4294901760
    %v206 = vsub.f32 %v51, %v205
    %v207 = vand.u32 %v206, 4294901760
    %208 = vmatpush.msra.mxu0 %v207
    %v209 = vand.u32 %v50, 4294901760
    %v210 = vsub.f32 %v50, %v209
    %v211 = vand.u32 %v210, 4294901760
    %212 = vmatpush.msra.mxu0 %v211
    %v213 = vand.u32 %v56, 4294901760
    %214 = vmatmul.f32.gmra.mxu0 %v213
    %v215 = vpop.f32.mrf.mxu0
    %v216 = vadd.f32 %v183, %v215
    %217 = vdwg.mxu0
    %218 = vmatpush.msra.mxu0 0.0
    %219 = vmatpush.msra.mxu0 0.0
    %220 = vmatpush.msra.mxu0 0.0
    %221 = vmatpush.msra.mxu0 0.0
    %222 = vmatpush.msra.mxu0 0.0
    %223 = vmatpush.msra.mxu0 0.0
    %224 = vmatpush.msra.mxu0 0.0
    %225 = vmatpush.msra.mxu0 0.0
    %226 = vmatpush.msra.mxu0 0.0
    %227 = vmatpush.msra.mxu0 0.0
    %228 = vmatpush.msra.mxu0 0.0
    %229 = vmatpush.msra.mxu0 0.0
    %v230 = vand.u32 %v53, 4294901760
    %231 = vmatpush.msra.mxu0 %v230
    %v232 = vand.u32 %v52, 4294901760
    %233 = vmatpush.msra.mxu0 %v232
    %v234 = vand.u32 %v51, 4294901760
    %235 = vmatpush.msra.mxu0 %v234
    %v236 = vand.u32 %v50, 4294901760
    %237 = vmatpush.msra.mxu0 %v236
    %v238 = vand.u32 %v56, 4294901760
    %239 = vmatmul.f32.gmra.mxu0 %v238
    %v240 = vpop.f32.mrf.mxu0
    %v241 = vadd.f32 %v216, %v240
    %242 = vdwg.mxu0
    %v243 = vperm.slane %v34, 0
    %v244 = vadd.f32 %v241, %v243
    %v245 = vperm.slane %v34, 1
    %247 = vrot.lane.b32.xlu0 %v245, 32
    %v248 = vpop.permute.xlu0 %247
    %v250 = vadd.f32 %v241, %v248
    %v251 = vld [vmem:[%s1] sm:$0xff]
    %v252 = vld [vmem:[%s1 + $0x8] sm:$0xff]
    %v253 = vld [vmem:[%s1 + $0x10] sm:$0xff]
    %v254 = vld [vmem:[%s1 + $0x18] sm:$0xff]
    %v255 = vld [vmem:[%s1 + $0x20] sm:$0xff]
    %v256 = vld [vmem:[%s1 + $0x28] sm:$0xff]
    %v257 = vld [vmem:[%s1 + $0x30] sm:$0xff]
    %v258 = vld [vmem:[%s5] sm:$0xff]
    %v259 = vld [vmem:[%s5 + $0x8] sm:$0xff]
    %vm260 = vcmask 130048
    %v262 = vsel %vm260, %v251, 0
    %v265 = vsel %vm260, %v252, 0
    %v268 = vsel %vm260, %v253, 0
    %v271 = vsel %vm260, %v254, 0
    %v274 = vsel %vm260, %v255, 0
    %v277 = vsel %vm260, %v256, 0
    %v280 = vsel %vm260, %v257, 0
    %282 = vmatpush.msra.mxu0 0.0
    %283 = vmatpush.msra.mxu0 0.0
    %284 = vmatpush.msra.mxu0 0.0
    %285 = vmatpush.msra.mxu0 0.0
    %286 = vmatpush.msra.mxu0 0.0
    %287 = vmatpush.msra.mxu0 0.0
    %288 = vmatpush.msra.mxu0 0.0
    %289 = vmatpush.msra.mxu0 0.0
    %290 = vmatpush.msra.mxu0 0.0
    %291 = vmatpush.msra.mxu0 0.0
    %292 = vmatpush.msra.mxu0 0.0
    %293 = vmatpush.msra.mxu0 0.0
    %294 = vmatpush.msra.mxu0 0.0
    %295 = vmatpush.msra.mxu0 0.0
    %v296 = vand.u32 %v259, 4294901760
    %297 = vmatpush.msra.mxu0 %v296
    %v298 = vand.u32 %v258, 4294901760
    %299 = vmatpush.msra.mxu0 %v298
    %v300 = vand.u32 %v262, 4294901760
    %v301 = vsub.f32 %v262, %v300
    %v302 = vand.u32 %v301, 4294901760
    %v303 = vsub.f32 %v301, %v302
    %v304 = vand.u32 %v303, 4294901760
    %305 = vmatmul.f32.gmra.mxu0 %v304
    %v306 = vpop.f32.mrf.mxu0
    %v307 = vadd.f32 0.0, %v306
    %v308 = vand.u32 %v265, 4294901760
    %v309 = vsub.f32 %v265, %v308
    %v310 = vand.u32 %v309, 4294901760
    %v311 = vsub.f32 %v309, %v310
    %v312 = vand.u32 %v311, 4294901760
    %313 = vmatmul.f32.gmra.mxu0 %v312
    %v314 = vpop.f32.mrf.mxu0
    %v315 = vadd.f32 0.0, %v314
    %v316 = vand.u32 %v268, 4294901760
    %v317 = vsub.f32 %v268, %v316
    %v318 = vand.u32 %v317, 4294901760
    %v319 = vsub.f32 %v317, %v318
    %v320 = vand.u32 %v319, 4294901760
    %321 = vmatmul.f32.gmra.mxu0 %v320
    %v322 = vpop.f32.mrf.mxu0
    %v323 = vadd.f32 0.0, %v322
    %v324 = vand.u32 %v271, 4294901760
    %v325 = vsub.f32 %v271, %v324
    %v326 = vand.u32 %v325, 4294901760
    %v327 = vsub.f32 %v325, %v326
    %v328 = vand.u32 %v327, 4294901760
    %329 = vmatmul.f32.gmra.mxu0 %v328
    %v330 = vpop.f32.mrf.mxu0
    %v331 = vadd.f32 0.0, %v330
    %v332 = vand.u32 %v274, 4294901760
    %v333 = vsub.f32 %v274, %v332
    %v334 = vand.u32 %v333, 4294901760
    %v335 = vsub.f32 %v333, %v334
    %v336 = vand.u32 %v335, 4294901760
    %337 = vmatmul.f32.gmra.mxu0 %v336
    %v338 = vpop.f32.mrf.mxu0
    %v339 = vadd.f32 0.0, %v338
    %v340 = vand.u32 %v277, 4294901760
    %v341 = vsub.f32 %v277, %v340
    %v342 = vand.u32 %v341, 4294901760
    %v343 = vsub.f32 %v341, %v342
    %v344 = vand.u32 %v343, 4294901760
    %345 = vmatmul.f32.gmra.mxu0 %v344
    %v346 = vpop.f32.mrf.mxu0
    %v347 = vadd.f32 0.0, %v346
    %v348 = vand.u32 %v280, 4294901760
    %v349 = vsub.f32 %v280, %v348
    %v350 = vand.u32 %v349, 4294901760
    %v351 = vsub.f32 %v349, %v350
    %v352 = vand.u32 %v351, 4294901760
    %353 = vmatmul.f32.gmra.mxu0 %v352
    %v354 = vpop.f32.mrf.mxu0
    %v355 = vadd.f32 0.0, %v354
    %356 = vdwg.mxu0
    %357 = vmatpush.msra.mxu0 0.0
    %358 = vmatpush.msra.mxu0 0.0
    %359 = vmatpush.msra.mxu0 0.0
    %360 = vmatpush.msra.mxu0 0.0
    %361 = vmatpush.msra.mxu0 0.0
    %362 = vmatpush.msra.mxu0 0.0
    %363 = vmatpush.msra.mxu0 0.0
    %364 = vmatpush.msra.mxu0 0.0
    %365 = vmatpush.msra.mxu0 0.0
    %366 = vmatpush.msra.mxu0 0.0
    %367 = vmatpush.msra.mxu0 0.0
    %368 = vmatpush.msra.mxu0 0.0
    %369 = vmatpush.msra.mxu0 0.0
    %370 = vmatpush.msra.mxu0 0.0
    %v371 = vand.u32 %v259, 4294901760
    %v372 = vsub.f32 %v259, %v371
    %v373 = vand.u32 %v372, 4294901760
    %v374 = vsub.f32 %v372, %v373
    %v375 = vand.u32 %v374, 4294901760
    %376 = vmatpush.msra.mxu0 %v375
    %v377 = vand.u32 %v258, 4294901760
    %v378 = vsub.f32 %v258, %v377
    %v379 = vand.u32 %v378, 4294901760
    %v380 = vsub.f32 %v378, %v379
    %v381 = vand.u32 %v380, 4294901760
    %382 = vmatpush.msra.mxu0 %v381
    %v383 = vand.u32 %v262, 4294901760
    %384 = vmatmul.f32.gmra.mxu0 %v383
    %v385 = vpop.f32.mrf.mxu0
    %v386 = vadd.f32 %v307, %v385
    %v387 = vand.u32 %v265, 4294901760
    %388 = vmatmul.f32.gmra.mxu0 %v387
    %v389 = vpop.f32.mrf.mxu0
    %v390 = vadd.f32 %v315, %v389
    %v391 = vand.u32 %v268, 4294901760
    %392 = vmatmul.f32.gmra.mxu0 %v391
    %v393 = vpop.f32.mrf.mxu0
    %v394 = vadd.f32 %v323, %v393
    %v395 = vand.u32 %v271, 4294901760
    %396 = vmatmul.f32.gmra.mxu0 %v395
    %v397 = vpop.f32.mrf.mxu0
    %v398 = vadd.f32 %v331, %v397
    %v399 = vand.u32 %v274, 4294901760
    %400 = vmatmul.f32.gmra.mxu0 %v399
    %v401 = vpop.f32.mrf.mxu0
    %v402 = vadd.f32 %v339, %v401
    %v403 = vand.u32 %v277, 4294901760
    %404 = vmatmul.f32.gmra.mxu0 %v403
    %v405 = vpop.f32.mrf.mxu0
    %v406 = vadd.f32 %v347, %v405
    %v407 = vand.u32 %v280, 4294901760
    %408 = vmatmul.f32.gmra.mxu0 %v407
    %v409 = vpop.f32.mrf.mxu0
    %v410 = vadd.f32 %v355, %v409
    %411 = vdwg.mxu0
    %412 = vmatpush.msra.mxu0 0.0
    %413 = vmatpush.msra.mxu0 0.0
    %414 = vmatpush.msra.mxu0 0.0
    %415 = vmatpush.msra.mxu0 0.0
    %416 = vmatpush.msra.mxu0 0.0
    %417 = vmatpush.msra.mxu0 0.0
    %418 = vmatpush.msra.mxu0 0.0
    %419 = vmatpush.msra.mxu0 0.0
    %420 = vmatpush.msra.mxu0 0.0
    %421 = vmatpush.msra.mxu0 0.0
    %422 = vmatpush.msra.mxu0 0.0
    %423 = vmatpush.msra.mxu0 0.0
    %424 = vmatpush.msra.mxu0 0.0
    %425 = vmatpush.msra.mxu0 0.0
    %v426 = vand.u32 %v259, 4294901760
    %v427 = vsub.f32 %v259, %v426
    %428 = vmatpush.msra.mxu0 %v427
    %v429 = vand.u32 %v258, 4294901760
    %v430 = vsub.f32 %v258, %v429
    %431 = vmatpush.msra.mxu0 %v430
    %v432 = vand.u32 %v262, 4294901760
    %v433 = vsub.f32 %v262, %v432
    %434 = vmatmul.f32.gmra.mxu0 %v433
    %v435 = vpop.f32.mrf.mxu0
    %v436 = vadd.f32 %v386, %v435
    %v437 = vand.u32 %v265, 4294901760
    %v438 = vsub.f32 %v265, %v437
    %439 = vmatmul.f32.gmra.mxu0 %v438
    %v440 = vpop.f32.mrf.mxu0
    %v441 = vadd.f32 %v390, %v440
    %v442 = vand.u32 %v268, 4294901760
    %v443 = vsub.f32 %v268, %v442
    %444 = vmatmul.f32.gmra.mxu0 %v443
    %v445 = vpop.f32.mrf.mxu0
    %v446 = vadd.f32 %v394, %v445
    %v447 = vand.u32 %v271, 4294901760
    %v448 = vsub.f32 %v271, %v447
    %449 = vmatmul.f32.gmra.mxu0 %v448
    %v450 = vpop.f32.mrf.mxu0
    %v451 = vadd.f32 %v398, %v450
    %v452 = vand.u32 %v274, 4294901760
    %v453 = vsub.f32 %v274, %v452
    %454 = vmatmul.f32.gmra.mxu0 %v453
    %v455 = vpop.f32.mrf.mxu0
    %v456 = vadd.f32 %v402, %v455
    %v457 = vand.u32 %v277, 4294901760
    %v458 = vsub.f32 %v277, %v457
    %459 = vmatmul.f32.gmra.mxu0 %v458
    %v460 = vpop.f32.mrf.mxu0
    %v461 = vadd.f32 %v406, %v460
    %v462 = vand.u32 %v280, 4294901760
    %v463 = vsub.f32 %v280, %v462
    %464 = vmatmul.f32.gmra.mxu0 %v463
    %v465 = vpop.f32.mrf.mxu0
    %v466 = vadd.f32 %v410, %v465
    %467 = vdwg.mxu0
    %468 = vmatpush.msra.mxu0 0.0
    %469 = vmatpush.msra.mxu0 0.0
    %470 = vmatpush.msra.mxu0 0.0
    %471 = vmatpush.msra.mxu0 0.0
    %472 = vmatpush.msra.mxu0 0.0
    %473 = vmatpush.msra.mxu0 0.0
    %474 = vmatpush.msra.mxu0 0.0
    %475 = vmatpush.msra.mxu0 0.0
    %476 = vmatpush.msra.mxu0 0.0
    %477 = vmatpush.msra.mxu0 0.0
    %478 = vmatpush.msra.mxu0 0.0
    %479 = vmatpush.msra.mxu0 0.0
    %480 = vmatpush.msra.mxu0 0.0
    %481 = vmatpush.msra.mxu0 0.0
    %v482 = vand.u32 %v259, 4294901760
    %483 = vmatpush.msra.mxu0 %v482
    %v484 = vand.u32 %v258, 4294901760
    %485 = vmatpush.msra.mxu0 %v484
    %v486 = vand.u32 %v262, 4294901760
    %v487 = vsub.f32 %v262, %v486
    %v488 = vand.u32 %v487, 4294901760
    %489 = vmatmul.f32.gmra.mxu0 %v488
    %v490 = vpop.f32.mrf.mxu0
    %v491 = vadd.f32 %v436, %v490
    %v492 = vand.u32 %v265, 4294901760
    %v493 = vsub.f32 %v265, %v492
    %v494 = vand.u32 %v493, 4294901760
    %495 = vmatmul.f32.gmra.mxu0 %v494
    %v496 = vpop.f32.mrf.mxu0
    %v497 = vadd.f32 %v441, %v496
    %v498 = vand.u32 %v268, 4294901760
    %v499 = vsub.f32 %v268, %v498
    %v500 = vand.u32 %v499, 4294901760
    %501 = vmatmul.f32.gmra.mxu0 %v500
    %v502 = vpop.f32.mrf.mxu0
    %v503 = vadd.f32 %v446, %v502
    %v504 = vand.u32 %v271, 4294901760
    %v505 = vsub.f32 %v271, %v504
    %v506 = vand.u32 %v505, 4294901760
    %507 = vmatmul.f32.gmra.mxu0 %v506
    %v508 = vpop.f32.mrf.mxu0
    %v509 = vadd.f32 %v451, %v508
    %v510 = vand.u32 %v274, 4294901760
    %v511 = vsub.f32 %v274, %v510
    %v512 = vand.u32 %v511, 4294901760
    %513 = vmatmul.f32.gmra.mxu0 %v512
    %v514 = vpop.f32.mrf.mxu0
    %v515 = vadd.f32 %v456, %v514
    %v516 = vand.u32 %v277, 4294901760
    %v517 = vsub.f32 %v277, %v516
    %v518 = vand.u32 %v517, 4294901760
    %519 = vmatmul.f32.gmra.mxu0 %v518
    %v520 = vpop.f32.mrf.mxu0
    %v521 = vadd.f32 %v461, %v520
    %v522 = vand.u32 %v280, 4294901760
    %v523 = vsub.f32 %v280, %v522
    %v524 = vand.u32 %v523, 4294901760
    %525 = vmatmul.f32.gmra.mxu0 %v524
    %v526 = vpop.f32.mrf.mxu0
    %v527 = vadd.f32 %v466, %v526
    %528 = vdwg.mxu0
    %529 = vmatpush.msra.mxu0 0.0
    %530 = vmatpush.msra.mxu0 0.0
    %531 = vmatpush.msra.mxu0 0.0
    %532 = vmatpush.msra.mxu0 0.0
    %533 = vmatpush.msra.mxu0 0.0
    %534 = vmatpush.msra.mxu0 0.0
    %535 = vmatpush.msra.mxu0 0.0
    %536 = vmatpush.msra.mxu0 0.0
    %537 = vmatpush.msra.mxu0 0.0
    %538 = vmatpush.msra.mxu0 0.0
    %539 = vmatpush.msra.mxu0 0.0
    %540 = vmatpush.msra.mxu0 0.0
    %541 = vmatpush.msra.mxu0 0.0
    %542 = vmatpush.msra.mxu0 0.0
    %v543 = vand.u32 %v259, 4294901760
    %v544 = vsub.f32 %v259, %v543
    %v545 = vand.u32 %v544, 4294901760
    %546 = vmatpush.msra.mxu0 %v545
    %v547 = vand.u32 %v258, 4294901760
    %v548 = vsub.f32 %v258, %v547
    %v549 = vand.u32 %v548, 4294901760
    %550 = vmatpush.msra.mxu0 %v549
    %v551 = vand.u32 %v262, 4294901760
    %552 = vmatmul.f32.gmra.mxu0 %v551
    %v553 = vpop.f32.mrf.mxu0
    %v554 = vadd.f32 %v491, %v553
    %v555 = vand.u32 %v265, 4294901760
    %556 = vmatmul.f32.gmra.mxu0 %v555
    %v557 = vpop.f32.mrf.mxu0
    %v558 = vadd.f32 %v497, %v557
    %v559 = vand.u32 %v268, 4294901760
    %560 = vmatmul.f32.gmra.mxu0 %v559
    %v561 = vpop.f32.mrf.mxu0
    %v562 = vadd.f32 %v503, %v561
    %v563 = vand.u32 %v271, 4294901760
    %564 = vmatmul.f32.gmra.mxu0 %v563
    %v565 = vpop.f32.mrf.mxu0
    %v566 = vadd.f32 %v509, %v565
    %v567 = vand.u32 %v274, 4294901760
    %568 = vmatmul.f32.gmra.mxu0 %v567
    %v569 = vpop.f32.mrf.mxu0
    %v570 = vadd.f32 %v515, %v569
    %v571 = vand.u32 %v277, 4294901760
    %572 = vmatmul.f32.gmra.mxu0 %v571
    %v573 = vpop.f32.mrf.mxu0
    %v574 = vadd.f32 %v521, %v573
    %v575 = vand.u32 %v280, 4294901760
    %576 = vmatmul.f32.gmra.mxu0 %v575
    %v577 = vpop.f32.mrf.mxu0
    %v578 = vadd.f32 %v527, %v577
    %579 = vdwg.mxu0
    %580 = vmatpush.msra.mxu0 0.0
    %581 = vmatpush.msra.mxu0 0.0
    %582 = vmatpush.msra.mxu0 0.0
    %583 = vmatpush.msra.mxu0 0.0
    %584 = vmatpush.msra.mxu0 0.0
    %585 = vmatpush.msra.mxu0 0.0
    %586 = vmatpush.msra.mxu0 0.0
    %587 = vmatpush.msra.mxu0 0.0
    %588 = vmatpush.msra.mxu0 0.0
    %589 = vmatpush.msra.mxu0 0.0
    %590 = vmatpush.msra.mxu0 0.0
    %591 = vmatpush.msra.mxu0 0.0
    %592 = vmatpush.msra.mxu0 0.0
    %593 = vmatpush.msra.mxu0 0.0
    %v594 = vand.u32 %v259, 4294901760
    %595 = vmatpush.msra.mxu0 %v594
    %v596 = vand.u32 %v258, 4294901760
    %597 = vmatpush.msra.mxu0 %v596
    %v598 = vand.u32 %v262, 4294901760
    %599 = vmatmul.f32.gmra.mxu0 %v598
    %v600 = vpop.f32.mrf.mxu0
    %v601 = vadd.f32 %v554, %v600
    %v602 = vand.u32 %v265, 4294901760
    %603 = vmatmul.f32.gmra.mxu0 %v602
    %v604 = vpop.f32.mrf.mxu0
    %v605 = vadd.f32 %v558, %v604
    %v606 = vand.u32 %v268, 4294901760
    %607 = vmatmul.f32.gmra.mxu0 %v606
    %v608 = vpop.f32.mrf.mxu0
    %v609 = vadd.f32 %v562, %v608
    %v610 = vand.u32 %v271, 4294901760
    %611 = vmatmul.f32.gmra.mxu0 %v610
    %v612 = vpop.f32.mrf.mxu0
    %v613 = vadd.f32 %v566, %v612
    %v614 = vand.u32 %v274, 4294901760
    %615 = vmatmul.f32.gmra.mxu0 %v614
    %v616 = vpop.f32.mrf.mxu0
    %v617 = vadd.f32 %v570, %v616
    %v618 = vand.u32 %v277, 4294901760
    %619 = vmatmul.f32.gmra.mxu0 %v618
    %v620 = vpop.f32.mrf.mxu0
    %v621 = vadd.f32 %v574, %v620
    %v622 = vand.u32 %v280, 4294901760
    %623 = vmatmul.f32.gmra.mxu0 %v622
    %v624 = vpop.f32.mrf.mxu0
    %v625 = vadd.f32 %v578, %v624
    %626 = vdwg.mxu0
    %v627 = vld [vmem:[%s2] sm:$0xff]
    %v628 = vld [vmem:[%s2 + $0x8] sm:$0xff]
    %v629 = vld [vmem:[%s2 + $0x10] sm:$0xff]
    %v630 = vld [vmem:[%s2 + $0x18] sm:$0xff]
    %v631 = vld [vmem:[%s2 + $0x20] sm:$0xff]
    %v632 = vld [vmem:[%s2 + $0x28] sm:$0xff]
    %v633 = vld [vmem:[%s2 + $0x30] sm:$0xff]
    %635 = vrot.lane.b32.xlu0 %v250, 96
    %v636 = vpop.permute.xlu0 %635
    %vm638 = vcmask 64512
    %v640 = vsel %vm638, %v627, 0
    %v643 = vsel %vm638, %v628, 0
    %v646 = vsel %vm638, %v629, 0
    %v649 = vsel %vm638, %v630, 0
    %v652 = vsel %vm638, %v631, 0
    %v655 = vsel %vm638, %v632, 0
    %v658 = vsel %vm638, %v633, 0
    %660 = vmatpush.msra.mxu0 0.0
    %661 = vmatpush.msra.mxu0 0.0
    %662 = vmatpush.msra.mxu0 0.0
    %663 = vmatpush.msra.mxu0 0.0
    %664 = vmatpush.msra.mxu0 0.0
    %665 = vmatpush.msra.mxu0 0.0
    %666 = vmatpush.msra.mxu0 0.0
    %667 = vmatpush.msra.mxu0 0.0
    %668 = vmatpush.msra.mxu0 0.0
    %669 = vmatpush.msra.mxu0 0.0
    %670 = vmatpush.msra.mxu0 0.0
    %671 = vmatpush.msra.mxu0 0.0
    %672 = vmatpush.msra.mxu0 0.0
    %673 = vmatpush.msra.mxu0 0.0
    %674 = vmatpush.msra.mxu0 0.0
    %v675 = vand.u32 %v636, 4294901760
    %676 = vmatpush.msra.mxu0 %v675
    %v677 = vand.u32 %v640, 4294901760
    %v678 = vsub.f32 %v640, %v677
    %v679 = vand.u32 %v678, 4294901760
    %v680 = vsub.f32 %v678, %v679
    %v681 = vand.u32 %v680, 4294901760
    %682 = vmatmul.f32.gmra.mxu0 %v681
    %v683 = vpop.f32.mrf.mxu0
    %v684 = vadd.f32 0.0, %v683
    %v685 = vand.u32 %v643, 4294901760
    %v686 = vsub.f32 %v643, %v685
    %v687 = vand.u32 %v686, 4294901760
    %v688 = vsub.f32 %v686, %v687
    %v689 = vand.u32 %v688, 4294901760
    %690 = vmatmul.f32.gmra.mxu0 %v689
    %v691 = vpop.f32.mrf.mxu0
    %v692 = vadd.f32 0.0, %v691
    %v693 = vand.u32 %v646, 4294901760
    %v694 = vsub.f32 %v646, %v693
    %v695 = vand.u32 %v694, 4294901760
    %v696 = vsub.f32 %v694, %v695
    %v697 = vand.u32 %v696, 4294901760
    %698 = vmatmul.f32.gmra.mxu0 %v697
    %v699 = vpop.f32.mrf.mxu0
    %v700 = vadd.f32 0.0, %v699
    %v701 = vand.u32 %v649, 4294901760
    %v702 = vsub.f32 %v649, %v701
    %v703 = vand.u32 %v702, 4294901760
    %v704 = vsub.f32 %v702, %v703
    %v705 = vand.u32 %v704, 4294901760
    %706 = vmatmul.f32.gmra.mxu0 %v705
    %v707 = vpop.f32.mrf.mxu0
    %v708 = vadd.f32 0.0, %v707
    %v709 = vand.u32 %v652, 4294901760
    %v710 = vsub.f32 %v652, %v709
    %v711 = vand.u32 %v710, 4294901760
    %v712 = vsub.f32 %v710, %v711
    %v713 = vand.u32 %v712, 4294901760
    %714 = vmatmul.f32.gmra.mxu0 %v713
    %v715 = vpop.f32.mrf.mxu0
    %v716 = vadd.f32 0.0, %v715
    %v717 = vand.u32 %v655, 4294901760
    %v718 = vsub.f32 %v655, %v717
    %v719 = vand.u32 %v718, 4294901760
    %v720 = vsub.f32 %v718, %v719
    %v721 = vand.u32 %v720, 4294901760
    %722 = vmatmul.f32.gmra.mxu0 %v721
    %v723 = vpop.f32.mrf.mxu0
    %v724 = vadd.f32 0.0, %v723
    %v725 = vand.u32 %v658, 4294901760
    %v726 = vsub.f32 %v658, %v725
    %v727 = vand.u32 %v726, 4294901760
    %v728 = vsub.f32 %v726, %v727
    %v729 = vand.u32 %v728, 4294901760
    %730 = vmatmul.f32.gmra.mxu0 %v729
    %v731 = vpop.f32.mrf.mxu0
    %v732 = vadd.f32 0.0, %v731
    %733 = vdwg.mxu0
    %734 = vmatpush.msra.mxu0 0.0
    %735 = vmatpush.msra.mxu0 0.0
    %736 = vmatpush.msra.mxu0 0.0
    %737 = vmatpush.msra.mxu0 0.0
    %738 = vmatpush.msra.mxu0 0.0
    %739 = vmatpush.msra.mxu0 0.0
    %740 = vmatpush.msra.mxu0 0.0
    %741 = vmatpush.msra.mxu0 0.0
    %742 = vmatpush.msra.mxu0 0.0
    %743 = vmatpush.msra.mxu0 0.0
    %744 = vmatpush.msra.mxu0 0.0
    %745 = vmatpush.msra.mxu0 0.0
    %746 = vmatpush.msra.mxu0 0.0
    %747 = vmatpush.msra.mxu0 0.0
    %748 = vmatpush.msra.mxu0 0.0
    %v749 = vand.u32 %v636, 4294901760
    %v750 = vsub.f32 %v636, %v749
    %v751 = vand.u32 %v750, 4294901760
    %v752 = vsub.f32 %v750, %v751
    %v753 = vand.u32 %v752, 4294901760
    %754 = vmatpush.msra.mxu0 %v753
    %v755 = vand.u32 %v640, 4294901760
    %756 = vmatmul.f32.gmra.mxu0 %v755
    %v757 = vpop.f32.mrf.mxu0
    %v758 = vadd.f32 %v684, %v757
    %v759 = vand.u32 %v643, 4294901760
    %760 = vmatmul.f32.gmra.mxu0 %v759
    %v761 = vpop.f32.mrf.mxu0
    %v762 = vadd.f32 %v692, %v761
    %v763 = vand.u32 %v646, 4294901760
    %764 = vmatmul.f32.gmra.mxu0 %v763
    %v765 = vpop.f32.mrf.mxu0
    %v766 = vadd.f32 %v700, %v765
    %v767 = vand.u32 %v649, 4294901760
    %768 = vmatmul.f32.gmra.mxu0 %v767
    %v769 = vpop.f32.mrf.mxu0
    %v770 = vadd.f32 %v708, %v769
    %v771 = vand.u32 %v652, 4294901760
    %772 = vmatmul.f32.gmra.mxu0 %v771
    %v773 = vpop.f32.mrf.mxu0
    %v774 = vadd.f32 %v716, %v773
    %v775 = vand.u32 %v655, 4294901760
    %776 = vmatmul.f32.gmra.mxu0 %v775
    %v777 = vpop.f32.mrf.mxu0
    %v778 = vadd.f32 %v724, %v777
    %v779 = vand.u32 %v658, 4294901760
    %780 = vmatmul.f32.gmra.mxu0 %v779
    %v781 = vpop.f32.mrf.mxu0
    %v782 = vadd.f32 %v732, %v781
    %783 = vdwg.mxu0
    %784 = vmatpush.msra.mxu0 0.0
    %785 = vmatpush.msra.mxu0 0.0
    %786 = vmatpush.msra.mxu0 0.0
    %787 = vmatpush.msra.mxu0 0.0
    %788 = vmatpush.msra.mxu0 0.0
    %789 = vmatpush.msra.mxu0 0.0
    %790 = vmatpush.msra.mxu0 0.0
    %791 = vmatpush.msra.mxu0 0.0
    %792 = vmatpush.msra.mxu0 0.0
    %793 = vmatpush.msra.mxu0 0.0
    %794 = vmatpush.msra.mxu0 0.0
    %795 = vmatpush.msra.mxu0 0.0
    %796 = vmatpush.msra.mxu0 0.0
    %797 = vmatpush.msra.mxu0 0.0
    %798 = vmatpush.msra.mxu0 0.0
    %v799 = vand.u32 %v636, 4294901760
    %v800 = vsub.f32 %v636, %v799
    %801 = vmatpush.msra.mxu0 %v800
    %v802 = vand.u32 %v640, 4294901760
    %v803 = vsub.f32 %v640, %v802
    %804 = vmatmul.f32.gmra.mxu0 %v803
    %v805 = vpop.f32.mrf.mxu0
    %v806 = vadd.f32 %v758, %v805
    %v807 = vand.u32 %v643, 4294901760
    %v808 = vsub.f32 %v643, %v807
    %809 = vmatmul.f32.gmra.mxu0 %v808
    %v810 = vpop.f32.mrf.mxu0
    %v811 = vadd.f32 %v762, %v810
    %v812 = vand.u32 %v646, 4294901760
    %v813 = vsub.f32 %v646, %v812
    %814 = vmatmul.f32.gmra.mxu0 %v813
    %v815 = vpop.f32.mrf.mxu0
    %v816 = vadd.f32 %v766, %v815
    %v817 = vand.u32 %v649, 4294901760
    %v818 = vsub.f32 %v649, %v817
    %819 = vmatmul.f32.gmra.mxu0 %v818
    %v820 = vpop.f32.mrf.mxu0
    %v821 = vadd.f32 %v770, %v820
    %v822 = vand.u32 %v652, 4294901760
    %v823 = vsub.f32 %v652, %v822
    %824 = vmatmul.f32.gmra.mxu0 %v823
    %v825 = vpop.f32.mrf.mxu0
    %v826 = vadd.f32 %v774, %v825
    %v827 = vand.u32 %v655, 4294901760
    %v828 = vsub.f32 %v655, %v827
    %829 = vmatmul.f32.gmra.mxu0 %v828
    %v830 = vpop.f32.mrf.mxu0
    %v831 = vadd.f32 %v778, %v830
    %v832 = vand.u32 %v658, 4294901760
    %v833 = vsub.f32 %v658, %v832
    %834 = vmatmul.f32.gmra.mxu0 %v833
    %v835 = vpop.f32.mrf.mxu0
    %v836 = vadd.f32 %v782, %v835
    %837 = vdwg.mxu0
    %838 = vmatpush.msra.mxu0 0.0
    %839 = vmatpush.msra.mxu0 0.0
    %840 = vmatpush.msra.mxu0 0.0
    %841 = vmatpush.msra.mxu0 0.0
    %842 = vmatpush.msra.mxu0 0.0
    %843 = vmatpush.msra.mxu0 0.0
    %844 = vmatpush.msra.mxu0 0.0
    %845 = vmatpush.msra.mxu0 0.0
    %846 = vmatpush.msra.mxu0 0.0
    %847 = vmatpush.msra.mxu0 0.0
    %848 = vmatpush.msra.mxu0 0.0
    %849 = vmatpush.msra.mxu0 0.0
    %850 = vmatpush.msra.mxu0 0.0
    %851 = vmatpush.msra.mxu0 0.0
    %852 = vmatpush.msra.mxu0 0.0
    %v853 = vand.u32 %v636, 4294901760
    %854 = vmatpush.msra.mxu0 %v853
    %v855 = vand.u32 %v640, 4294901760
    %v856 = vsub.f32 %v640, %v855
    %v857 = vand.u32 %v856, 4294901760
    %858 = vmatmul.f32.gmra.mxu0 %v857
    %v859 = vpop.f32.mrf.mxu0
    %v860 = vadd.f32 %v806, %v859
    %v861 = vand.u32 %v643, 4294901760
    %v862 = vsub.f32 %v643, %v861
    %v863 = vand.u32 %v862, 4294901760
    %864 = vmatmul.f32.gmra.mxu0 %v863
    %v865 = vpop.f32.mrf.mxu0
    %v866 = vadd.f32 %v811, %v865
    %v867 = vand.u32 %v646, 4294901760
    %v868 = vsub.f32 %v646, %v867
    %v869 = vand.u32 %v868, 4294901760
    %870 = vmatmul.f32.gmra.mxu0 %v869
    %v871 = vpop.f32.mrf.mxu0
    %v872 = vadd.f32 %v816, %v871
    %v873 = vand.u32 %v649, 4294901760
    %v874 = vsub.f32 %v649, %v873
    %v875 = vand.u32 %v874, 4294901760
    %876 = vmatmul.f32.gmra.mxu0 %v875
    %v877 = vpop.f32.mrf.mxu0
    %v878 = vadd.f32 %v821, %v877
    %v879 = vand.u32 %v652, 4294901760
    %v880 = vsub.f32 %v652, %v879
    %v881 = vand.u32 %v880, 4294901760
    %882 = vmatmul.f32.gmra.mxu0 %v881
    %v883 = vpop.f32.mrf.mxu0
    %v884 = vadd.f32 %v826, %v883
    %v885 = vand.u32 %v655, 4294901760
    %v886 = vsub.f32 %v655, %v885
    %v887 = vand.u32 %v886, 4294901760
    %888 = vmatmul.f32.gmra.mxu0 %v887
    %v889 = vpop.f32.mrf.mxu0
    %v890 = vadd.f32 %v831, %v889
    %v891 = vand.u32 %v658, 4294901760
    %v892 = vsub.f32 %v658, %v891
    %v893 = vand.u32 %v892, 4294901760
    %894 = vmatmul.f32.gmra.mxu0 %v893
    %v895 = vpop.f32.mrf.mxu0
    %v896 = vadd.f32 %v836, %v895
    %897 = vdwg.mxu0
    %898 = vmatpush.msra.mxu0 0.0
    %899 = vmatpush.msra.mxu0 0.0
    %900 = vmatpush.msra.mxu0 0.0
    %901 = vmatpush.msra.mxu0 0.0
    %902 = vmatpush.msra.mxu0 0.0
    %903 = vmatpush.msra.mxu0 0.0
    %904 = vmatpush.msra.mxu0 0.0
    %905 = vmatpush.msra.mxu0 0.0
    %906 = vmatpush.msra.mxu0 0.0
    %907 = vmatpush.msra.mxu0 0.0
    %908 = vmatpush.msra.mxu0 0.0
    %909 = vmatpush.msra.mxu0 0.0
    %910 = vmatpush.msra.mxu0 0.0
    %911 = vmatpush.msra.mxu0 0.0
    %912 = vmatpush.msra.mxu0 0.0
    %v913 = vand.u32 %v636, 4294901760
    %v914 = vsub.f32 %v636, %v913
    %v915 = vand.u32 %v914, 4294901760
    %916 = vmatpush.msra.mxu0 %v915
    %v917 = vand.u32 %v640, 4294901760
    %918 = vmatmul.f32.gmra.mxu0 %v917
    %v919 = vpop.f32.mrf.mxu0
    %v920 = vadd.f32 %v860, %v919
    %v921 = vand.u32 %v643, 4294901760
    %922 = vmatmul.f32.gmra.mxu0 %v921
    %v923 = vpop.f32.mrf.mxu0
    %v924 = vadd.f32 %v866, %v923
    %v925 = vand.u32 %v646, 4294901760
    %926 = vmatmul.f32.gmra.mxu0 %v925
    %v927 = vpop.f32.mrf.mxu0
    %v928 = vadd.f32 %v872, %v927
    %v929 = vand.u32 %v649, 4294901760
    %930 = vmatmul.f32.gmra.mxu0 %v929
    %v931 = vpop.f32.mrf.mxu0
    %v932 = vadd.f32 %v878, %v931
    %v933 = vand.u32 %v652, 4294901760
    %934 = vmatmul.f32.gmra.mxu0 %v933
    %v935 = vpop.f32.mrf.mxu0
    %v936 = vadd.f32 %v884, %v935
    %v937 = vand.u32 %v655, 4294901760
    %938 = vmatmul.f32.gmra.mxu0 %v937
    %v939 = vpop.f32.mrf.mxu0
    %v940 = vadd.f32 %v890, %v939
    %v941 = vand.u32 %v658, 4294901760
    %942 = vmatmul.f32.gmra.mxu0 %v941
    %v943 = vpop.f32.mrf.mxu0
    %v944 = vadd.f32 %v896, %v943
    %945 = vdwg.mxu0
    %946 = vmatpush.msra.mxu0 0.0
    %947 = vmatpush.msra.mxu0 0.0
    %948 = vmatpush.msra.mxu0 0.0
    %949 = vmatpush.msra.mxu0 0.0
    %950 = vmatpush.msra.mxu0 0.0
    %951 = vmatpush.msra.mxu0 0.0
    %952 = vmatpush.msra.mxu0 0.0
    %953 = vmatpush.msra.mxu0 0.0
    %954 = vmatpush.msra.mxu0 0.0
    %955 = vmatpush.msra.mxu0 0.0
    %956 = vmatpush.msra.mxu0 0.0
    %957 = vmatpush.msra.mxu0 0.0
    %958 = vmatpush.msra.mxu0 0.0
    %959 = vmatpush.msra.mxu0 0.0
    %960 = vmatpush.msra.mxu0 0.0
    %v961 = vand.u32 %v636, 4294901760
    %962 = vmatpush.msra.mxu0 %v961
    %v963 = vand.u32 %v640, 4294901760
    %964 = vmatmul.f32.gmra.mxu0 %v963
    %v965 = vpop.f32.mrf.mxu0
    %v966 = vadd.f32 %v920, %v965
    %v967 = vand.u32 %v643, 4294901760
    %968 = vmatmul.f32.gmra.mxu0 %v967
    %v969 = vpop.f32.mrf.mxu0
    %v970 = vadd.f32 %v924, %v969
    %v971 = vand.u32 %v646, 4294901760
    %972 = vmatmul.f32.gmra.mxu0 %v971
    %v973 = vpop.f32.mrf.mxu0
    %v974 = vadd.f32 %v928, %v973
    %v975 = vand.u32 %v649, 4294901760
    %976 = vmatmul.f32.gmra.mxu0 %v975
    %v977 = vpop.f32.mrf.mxu0
    %v978 = vadd.f32 %v932, %v977
    %v979 = vand.u32 %v652, 4294901760
    %980 = vmatmul.f32.gmra.mxu0 %v979
    %v981 = vpop.f32.mrf.mxu0
    %v982 = vadd.f32 %v936, %v981
    %v983 = vand.u32 %v655, 4294901760
    %984 = vmatmul.f32.gmra.mxu0 %v983
    %v985 = vpop.f32.mrf.mxu0
    %v986 = vadd.f32 %v940, %v985
    %v987 = vand.u32 %v658, 4294901760
    %988 = vmatmul.f32.gmra.mxu0 %v987
    %v989 = vpop.f32.mrf.mxu0
    %v990 = vadd.f32 %v944, %v989
    %991 = vdwg.mxu0
    %v992 = vmul.f32 %v601, %v966
    %v993 = vmul.f32 %v605, %v970
    %v994 = vmul.f32 %v609, %v974
    %v995 = vmul.f32 %v613, %v978
    %v996 = vmul.f32 %v617, %v982
    %v997 = vmul.f32 %v621, %v986
    %v998 = vmul.f32 %v625, %v990
    %999 = vst.msk [vmem:[#allocation2] sm:$0xff] %vm54, %v992
    %1001 = vrot.lane.b32.xlu0 %v993, 32
    %v1002 = vpop.permute.xlu0 %1001
    %vm1004 = vcmask 523520
    %1005 = vst.msk [vmem:[#allocation2] sm:$0xff] %vm1004, %v1002
    %1007 = vrot.lane.b32.xlu0 %v994, 64
    %v1008 = vpop.permute.xlu0 %1007
    %vm1010 = vcmask 785920
    %1011 = vst.msk [vmem:[#allocation2] sm:$0xff] %vm1010, %v1008
    %1013 = vrot.lane.b32.xlu0 %v995, 96
    %v1014 = vpop.permute.xlu0 %1013
    %vm1016 = vcmask 1048320
    %1017 = vst.msk [vmem:[#allocation2] sm:$0xff] %vm1016, %v1014
    %1018 = vst.msk [vmem:[#allocation2 + $0x8] sm:$0xff] %vm54, %v996
    %1020 = vrot.lane.b32.xlu0 %v997, 32
    %v1021 = vpop.permute.xlu0 %1020
    %1023 = vst.msk [vmem:[#allocation2 + $0x8] sm:$0xff] %vm1004, %v1021
    %1025 = vrot.lane.b32.xlu0 %v998, 64
    %v1026 = vpop.permute.xlu0 %1025
    %1028 = vst.msk [vmem:[#allocation2 + $0x8] sm:$0xff] %vm1010, %v1026
    %v1029 = vld [vmem:[#allocation2] sm:$0xff]
    %v1030 = vld [vmem:[#allocation2 + $0x8] sm:$0xff]
    %v1031 = vld [vmem:[%s3] sm:$0xff]
    %v1032 = vld [vmem:[%s3 + $0x8] sm:$0xff]
    %v1033 = vld [vmem:[%s3 + $0x10] sm:$0xff]
    %v1034 = vld [vmem:[%s3 + $0x18] sm:$0xff]
    %v1035 = vld [vmem:[%s3 + $0x20] sm:$0xff]
    %v1036 = vld [vmem:[%s3 + $0x28] sm:$0xff]
    %v1037 = vld [vmem:[%s3 + $0x30] sm:$0xff]
    %v1038 = vld [vmem:[%s3 + $0x38] sm:$0xff]
    %v1039 = vld [vmem:[%s3 + $0x40] sm:$0x7f]
    %v1040 = vld [vmem:[%s3 + $0x48] sm:$0x7f]
    %v1041 = vld [vmem:[%s4] sm:$0xff]
    %v1042 = vld [vmem:[%s4 + $0x8] sm:$0xff]
    %v1043 = vld [vmem:[%s4 + $0x10] sm:$0xff]
    %v1044 = vld [vmem:[%s4 + $0x18] sm:$0xff]
    %v1045 = vld [vmem:[%s4 + $0x20] sm:$0xff]
    %v1046 = vld [vmem:[%s4 + $0x28] sm:$0xff]
    %v1047 = vld [vmem:[%s4 + $0x30] sm:$0xff]
    %v1048 = vld [vmem:[%s4 + $0x38] sm:$0xff]
    %v1049 = vld [vmem:[%s4 + $0x40] sm:$0xff]
    %v1050 = vld [vmem:[%s4 + $0x48] sm:$0xff]
    %v1051 = vld [vmem:[%s4 + $0x50] sm:$0xff]
    %v1052 = vld [vmem:[%s4 + $0x58] sm:$0xff]
    %v1053 = vld [vmem:[%s4 + $0x60] sm:$0xff]
    %v1054 = vld [vmem:[%s4 + $0x68] sm:$0xff]
    %v1055 = vld [vmem:[%s4 + $0x70] sm:$0xff]
    %v1056 = vld [vmem:[%s4 + $0x78] sm:$0xff]
    %v1057 = vld [vmem:[%s4 + $0x80] sm:$0xff]
    %v1058 = vld [vmem:[%s4 + $0x88] sm:$0xff]
    %v1059 = vld [vmem:[%s4 + $0x90] sm:$0xff]
    %v1060 = vld [vmem:[%s4 + $0x98] sm:$0xff]
    %v1061 = vld [vmem:[%s4 + $0xa0] sm:$0xff]
    %v1062 = vld [vmem:[%s4 + $0xa8] sm:$0xff]
    %v1063 = vld [vmem:[%s4 + $0xb0] sm:$0xff]
    %v1064 = vld [vmem:[%s4 + $0xb8] sm:$0xff]
    %v1065 = vld [vmem:[%s4 + $0xc0] sm:$0xff]
    %v1066 = vld [vmem:[%s4 + $0xc8] sm:$0xff]
    %v1067 = vld [vmem:[%s4 + $0xd0] sm:$0xff]
    %v1068 = vld [vmem:[%s4 + $0xd8] sm:$0xff]
    %v1070 = vsel %vm54, %v244, 0
    %1072 = vmatpush.msra.mxu0 0.0
    %1073 = vmatpush.msra.mxu0 0.0
    %1074 = vmatpush.msra.mxu0 0.0
    %1075 = vmatpush.msra.mxu0 0.0
    %1076 = vmatpush.msra.mxu0 0.0
    %1077 = vmatpush.msra.mxu0 0.0
    %1078 = vmatpush.msra.mxu0 0.0
    %1079 = vmatpush.msra.mxu0 0.0
    %1080 = vmatpush.msra.mxu0 0.0
    %1081 = vmatpush.msra.mxu0 0.0
    %1082 = vmatpush.msra.mxu0 0.0
    %1083 = vmatpush.msra.mxu0 0.0
    %v1084 = vand.u32 %v1037, 4294901760
    %1085 = vmatpush.msra.mxu0 %v1084
    %v1086 = vand.u32 %v1035, 4294901760
    %1087 = vmatpush.msra.mxu0 %v1086
    %v1088 = vand.u32 %v1033, 4294901760
    %1089 = vmatpush.msra.mxu0 %v1088
    %v1090 = vand.u32 %v1031, 4294901760
    %1091 = vmatpush.msra.mxu0 %v1090
    %v1092 = vand.u32 %v1070, 4294901760
    %v1093 = vsub.f32 %v1070, %v1092
    %v1094 = vand.u32 %v1093, 4294901760
    %v1095 = vsub.f32 %v1093, %v1094
    %v1096 = vand.u32 %v1095, 4294901760
    %1097 = vmatmul.f32.gmra.mxu0 %v1096
    %v1098 = vpop.f32.mrf.mxu0
    %v1099 = vadd.f32 0.0, %v1098
    %1100 = vdwg.mxu0
    %1101 = vmatpush.msra.mxu0 0.0
    %1102 = vmatpush.msra.mxu0 0.0
    %1103 = vmatpush.msra.mxu0 0.0
    %1104 = vmatpush.msra.mxu0 0.0
    %1105 = vmatpush.msra.mxu0 0.0
    %1106 = vmatpush.msra.mxu0 0.0
    %1107 = vmatpush.msra.mxu0 0.0
    %1108 = vmatpush.msra.mxu0 0.0
    %1109 = vmatpush.msra.mxu0 0.0
    %1110 = vmatpush.msra.mxu0 0.0
    %1111 = vmatpush.msra.mxu0 0.0
    %1112 = vmatpush.msra.mxu0 0.0
    %v1113 = vand.u32 %v1037, 4294901760
    %v1114 = vsub.f32 %v1037, %v1113
    %v1115 = vand.u32 %v1114, 4294901760
    %v1116 = vsub.f32 %v1114, %v1115
    %v1117 = vand.u32 %v1116, 4294901760
    %1118 = vmatpush.msra.mxu0 %v1117
    %v1119 = vand.u32 %v1035, 4294901760
    %v1120 = vsub.f32 %v1035, %v1119
    %v1121 = vand.u32 %v1120, 4294901760
    %v1122 = vsub.f32 %v1120, %v1121
    %v1123 = vand.u32 %v1122, 4294901760
    %1124 = vmatpush.msra.mxu0 %v1123
    %v1125 = vand.u32 %v1033, 4294901760
    %v1126 = vsub.f32 %v1033, %v1125
    %v1127 = vand.u32 %v1126, 4294901760
    %v1128 = vsub.f32 %v1126, %v1127
    %v1129 = vand.u32 %v1128, 4294901760
    %1130 = vmatpush.msra.mxu0 %v1129
    %v1131 = vand.u32 %v1031, 4294901760
    %v1132 = vsub.f32 %v1031, %v1131
    %v1133 = vand.u32 %v1132, 4294901760
    %v1134 = vsub.f32 %v1132, %v1133
    %v1135 = vand.u32 %v1134, 4294901760
    %1136 = vmatpush.msra.mxu0 %v1135
    %v1137 = vand.u32 %v1070, 4294901760
    %1138 = vmatmul.f32.gmra.mxu0 %v1137
    %v1139 = vpop.f32.mrf.mxu0
    %v1140 = vadd.f32 %v1099, %v1139
    %1141 = vdwg.mxu0
    %1142 = vmatpush.msra.mxu0 0.0
    %1143 = vmatpush.msra.mxu0 0.0
    %1144 = vmatpush.msra.mxu0 0.0
    %1145 = vmatpush.msra.mxu0 0.0
    %1146 = vmatpush.msra.mxu0 0.0
    %1147 = vmatpush.msra.mxu0 0.0
    %1148 = vmatpush.msra.mxu0 0.0
    %1149 = vmatpush.msra.mxu0 0.0
    %1150 = vmatpush.msra.mxu0 0.0
    %1151 = vmatpush.msra.mxu0 0.0
    %1152 = vmatpush.msra.mxu0 0.0
    %1153 = vmatpush.msra.mxu0 0.0
    %v1154 = vand.u32 %v1037, 4294901760
    %v1155 = vsub.f32 %v1037, %v1154
    %1156 = vmatpush.msra.mxu0 %v1155
    %v1157 = vand.u32 %v1035, 4294901760
    %v1158 = vsub.f32 %v1035, %v1157
    %1159 = vmatpush.msra.mxu0 %v1158
    %v1160 = vand.u32 %v1033, 4294901760
    %v1161 = vsub.f32 %v1033, %v1160
    %1162 = vmatpush.msra.mxu0 %v1161
    %v1163 = vand.u32 %v1031, 4294901760
    %v1164 = vsub.f32 %v1031, %v1163
    %1165 = vmatpush.msra.mxu0 %v1164
    %v1166 = vand.u32 %v1070, 4294901760
    %v1167 = vsub.f32 %v1070, %v1166
    %1168 = vmatmul.f32.gmra.mxu0 %v1167
    %v1169 = vpop.f32.mrf.mxu0
    %v1170 = vadd.f32 %v1140, %v1169
    %1171 = vdwg.mxu0
    %1172 = vmatpush.msra.mxu0 0.0
    %1173 = vmatpush.msra.mxu0 0.0
    %1174 = vmatpush.msra.mxu0 0.0
    %1175 = vmatpush.msra.mxu0 0.0
    %1176 = vmatpush.msra.mxu0 0.0
    %1177 = vmatpush.msra.mxu0 0.0
    %1178 = vmatpush.msra.mxu0 0.0
    %1179 = vmatpush.msra.mxu0 0.0
    %1180 = vmatpush.msra.mxu0 0.0
    %1181 = vmatpush.msra.mxu0 0.0
    %1182 = vmatpush.msra.mxu0 0.0
    %1183 = vmatpush.msra.mxu0 0.0
    %v1184 = vand.u32 %v1037, 4294901760
    %1185 = vmatpush.msra.mxu0 %v1184
    %v1186 = vand.u32 %v1035, 4294901760
    %1187 = vmatpush.msra.mxu0 %v1186
    %v1188 = vand.u32 %v1033, 4294901760
    %1189 = vmatpush.msra.mxu0 %v1188
    %v1190 = vand.u32 %v1031, 4294901760
    %1191 = vmatpush.msra.mxu0 %v1190
    %v1192 = vand.u32 %v1070, 4294901760
    %v1193 = vsub.f32 %v1070, %v1192
    %v1194 = vand.u32 %v1193, 4294901760
    %1195 = vmatmul.f32.gmra.mxu0 %v1194
    %v1196 = vpop.f32.mrf.mxu0
    %v1197 = vadd.f32 %v1170, %v1196
    %1198 = vdwg.mxu0
    %1199 = vmatpush.msra.mxu0 0.0
    %1200 = vmatpush.msra.mxu0 0.0
    %1201 = vmatpush.msra.mxu0 0.0
    %1202 = vmatpush.msra.mxu0 0.0
    %1203 = vmatpush.msra.mxu0 0.0
    %1204 = vmatpush.msra.mxu0 0.0
    %1205 = vmatpush.msra.mxu0 0.0
    %1206 = vmatpush.msra.mxu0 0.0
    %1207 = vmatpush.msra.mxu0 0.0
    %1208 = vmatpush.msra.mxu0 0.0
    %1209 = vmatpush.msra.mxu0 0.0
    %1210 = vmatpush.msra.mxu0 0.0
    %v1211 = vand.u32 %v1037, 4294901760
    %v1212 = vsub.f32 %v1037, %v1211
    %v1213 = vand.u32 %v1212, 4294901760
    %1214 = vmatpush.msra.mxu0 %v1213
    %v1215 = vand.u32 %v1035, 4294901760
    %v1216 = vsub.f32 %v1035, %v1215
    %v1217 = vand.u32 %v1216, 4294901760
    %1218 = vmatpush.msra.mxu0 %v1217
    %v1219 = vand.u32 %v1033, 4294901760
    %v1220 = vsub.f32 %v1033, %v1219
    %v1221 = vand.u32 %v1220, 4294901760
    %1222 = vmatpush.msra.mxu0 %v1221
    %v1223 = vand.u32 %v1031, 4294901760
    %v1224 = vsub.f32 %v1031, %v1223
    %v1225 = vand.u32 %v1224, 4294901760
    %1226 = vmatpush.msra.mxu0 %v1225
    %v1227 = vand.u32 %v1070, 4294901760
    %1228 = vmatmul.f32.gmra.mxu0 %v1227
    %v1229 = vpop.f32.mrf.mxu0
    %v1230 = vadd.f32 %v1197, %v1229
    %1231 = vdwg.mxu0
    %1232 = vmatpush.msra.mxu0 0.0
    %1233 = vmatpush.msra.mxu0 0.0
    %1234 = vmatpush.msra.mxu0 0.0
    %1235 = vmatpush.msra.mxu0 0.0
    %1236 = vmatpush.msra.mxu0 0.0
    %1237 = vmatpush.msra.mxu0 0.0
    %1238 = vmatpush.msra.mxu0 0.0
    %1239 = vmatpush.msra.mxu0 0.0
    %1240 = vmatpush.msra.mxu0 0.0
    %1241 = vmatpush.msra.mxu0 0.0
    %1242 = vmatpush.msra.mxu0 0.0
    %1243 = vmatpush.msra.mxu0 0.0
    %v1244 = vand.u32 %v1037, 4294901760
    %1245 = vmatpush.msra.mxu0 %v1244
    %v1246 = vand.u32 %v1035, 4294901760
    %1247 = vmatpush.msra.mxu0 %v1246
    %v1248 = vand.u32 %v1033, 4294901760
    %1249 = vmatpush.msra.mxu0 %v1248
    %v1250 = vand.u32 %v1031, 4294901760
    %1251 = vmatpush.msra.mxu0 %v1250
    %v1252 = vand.u32 %v1070, 4294901760
    %1253 = vmatmul.f32.gmra.mxu0 %v1252
    %v1254 = vpop.f32.mrf.mxu0
    %v1255 = vadd.f32 %v1230, %v1254
    %1256 = vdwg.mxu0
    %1257 = vmatpush.msra.mxu0 0.0
    %1258 = vmatpush.msra.mxu0 0.0
    %1259 = vmatpush.msra.mxu0 0.0
    %1260 = vmatpush.msra.mxu0 0.0
    %1261 = vmatpush.msra.mxu0 0.0
    %1262 = vmatpush.msra.mxu0 0.0
    %1263 = vmatpush.msra.mxu0 0.0
    %1264 = vmatpush.msra.mxu0 0.0
    %1265 = vmatpush.msra.mxu0 0.0
    %1266 = vmatpush.msra.mxu0 0.0
    %1267 = vmatpush.msra.mxu0 0.0
    %1268 = vmatpush.msra.mxu0 0.0
    %v1269 = vand.u32 %v1038, 4294901760
    %1270 = vmatpush.msra.mxu0 %v1269
    %v1271 = vand.u32 %v1036, 4294901760
    %1272 = vmatpush.msra.mxu0 %v1271
    %v1273 = vand.u32 %v1034, 4294901760
    %1274 = vmatpush.msra.mxu0 %v1273
    %v1275 = vand.u32 %v1032, 4294901760
    %1276 = vmatpush.msra.mxu0 %v1275
    %v1277 = vand.u32 %v1070, 4294901760
    %v1278 = vsub.f32 %v1070, %v1277
    %v1279 = vand.u32 %v1278, 4294901760
    %v1280 = vsub.f32 %v1278, %v1279
    %v1281 = vand.u32 %v1280, 4294901760
    %1282 = vmatmul.f32.gmra.mxu0 %v1281
    %v1283 = vpop.f32.mrf.mxu0
    %v1284 = vadd.f32 0.0, %v1283
    %1285 = vdwg.mxu0
    %1286 = vmatpush.msra.mxu0 0.0
    %1287 = vmatpush.msra.mxu0 0.0
    %1288 = vmatpush.msra.mxu0 0.0
    %1289 = vmatpush.msra.mxu0 0.0
    %1290 = vmatpush.msra.mxu0 0.0
    %1291 = vmatpush.msra.mxu0 0.0
    %1292 = vmatpush.msra.mxu0 0.0
    %1293 = vmatpush.msra.mxu0 0.0
    %1294 = vmatpush.msra.mxu0 0.0
    %1295 = vmatpush.msra.mxu0 0.0
    %1296 = vmatpush.msra.mxu0 0.0
    %1297 = vmatpush.msra.mxu0 0.0
    %v1298 = vand.u32 %v1038, 4294901760
    %v1299 = vsub.f32 %v1038, %v1298
    %v1300 = vand.u32 %v1299, 4294901760
    %v1301 = vsub.f32 %v1299, %v1300
    %v1302 = vand.u32 %v1301, 4294901760
    %1303 = vmatpush.msra.mxu0 %v1302
    %v1304 = vand.u32 %v1036, 4294901760
    %v1305 = vsub.f32 %v1036, %v1304
    %v1306 = vand.u32 %v1305, 4294901760
    %v1307 = vsub.f32 %v1305, %v1306
    %v1308 = vand.u32 %v1307, 4294901760
    %1309 = vmatpush.msra.mxu0 %v1308
    %v1310 = vand.u32 %v1034, 4294901760
    %v1311 = vsub.f32 %v1034, %v1310
    %v1312 = vand.u32 %v1311, 4294901760
    %v1313 = vsub.f32 %v1311, %v1312
    %v1314 = vand.u32 %v1313, 4294901760
    %1315 = vmatpush.msra.mxu0 %v1314
    %v1316 = vand.u32 %v1032, 4294901760
    %v1317 = vsub.f32 %v1032, %v1316
    %v1318 = vand.u32 %v1317, 4294901760
    %v1319 = vsub.f32 %v1317, %v1318
    %v1320 = vand.u32 %v1319, 4294901760
    %1321 = vmatpush.msra.mxu0 %v1320
    %v1322 = vand.u32 %v1070, 4294901760
    %1323 = vmatmul.f32.gmra.mxu0 %v1322
    %v1324 = vpop.f32.mrf.mxu0
    %v1325 = vadd.f32 %v1284, %v1324
    %1326 = vdwg.mxu0
    %1327 = vmatpush.msra.mxu0 0.0
    %1328 = vmatpush.msra.mxu0 0.0
    %1329 = vmatpush.msra.mxu0 0.0
    %1330 = vmatpush.msra.mxu0 0.0
    %1331 = vmatpush.msra.mxu0 0.0
    %1332 = vmatpush.msra.mxu0 0.0
    %1333 = vmatpush.msra.mxu0 0.0
    %1334 = vmatpush.msra.mxu0 0.0
    %1335 = vmatpush.msra.mxu0 0.0
    %1336 = vmatpush.msra.mxu0 0.0
    %1337 = vmatpush.msra.mxu0 0.0
    %1338 = vmatpush.msra.mxu0 0.0
    %v1339 = vand.u32 %v1038, 4294901760
    %v1340 = vsub.f32 %v1038, %v1339
    %1341 = vmatpush.msra.mxu0 %v1340
    %v1342 = vand.u32 %v1036, 4294901760
    %v1343 = vsub.f32 %v1036, %v1342
    %1344 = vmatpush.msra.mxu0 %v1343
    %v1345 = vand.u32 %v1034, 4294901760
    %v1346 = vsub.f32 %v1034, %v1345
    %1347 = vmatpush.msra.mxu0 %v1346
    %v1348 = vand.u32 %v1032, 4294901760
    %v1349 = vsub.f32 %v1032, %v1348
    %1350 = vmatpush.msra.mxu0 %v1349
    %v1351 = vand.u32 %v1070, 4294901760
    %v1352 = vsub.f32 %v1070, %v1351
    %1353 = vmatmul.f32.gmra.mxu0 %v1352
    %v1354 = vpop.f32.mrf.mxu0
    %v1355 = vadd.f32 %v1325, %v1354
    %1356 = vdwg.mxu0
    %1357 = vmatpush.msra.mxu0 0.0
    %1358 = vmatpush.msra.mxu0 0.0
    %1359 = vmatpush.msra.mxu0 0.0
    %1360 = vmatpush.msra.mxu0 0.0
    %1361 = vmatpush.msra.mxu0 0.0
    %1362 = vmatpush.msra.mxu0 0.0
    %1363 = vmatpush.msra.mxu0 0.0
    %1364 = vmatpush.msra.mxu0 0.0
    %1365 = vmatpush.msra.mxu0 0.0
    %1366 = vmatpush.msra.mxu0 0.0
    %1367 = vmatpush.msra.mxu0 0.0
    %1368 = vmatpush.msra.mxu0 0.0
    %v1369 = vand.u32 %v1038, 4294901760
    %1370 = vmatpush.msra.mxu0 %v1369
    %v1371 = vand.u32 %v1036, 4294901760
    %1372 = vmatpush.msra.mxu0 %v1371
    %v1373 = vand.u32 %v1034, 4294901760
    %1374 = vmatpush.msra.mxu0 %v1373
    %v1375 = vand.u32 %v1032, 4294901760
    %1376 = vmatpush.msra.mxu0 %v1375
    %v1377 = vand.u32 %v1070, 4294901760
    %v1378 = vsub.f32 %v1070, %v1377
    %v1379 = vand.u32 %v1378, 4294901760
    %1380 = vmatmul.f32.gmra.mxu0 %v1379
    %v1381 = vpop.f32.mrf.mxu0
    %v1382 = vadd.f32 %v1355, %v1381
    %1383 = vdwg.mxu0
    %1384 = vmatpush.msra.mxu0 0.0
    %1385 = vmatpush.msra.mxu0 0.0
    %1386 = vmatpush.msra.mxu0 0.0
    %1387 = vmatpush.msra.mxu0 0.0
    %1388 = vmatpush.msra.mxu0 0.0
    %1389 = vmatpush.msra.mxu0 0.0
    %1390 = vmatpush.msra.mxu0 0.0
    %1391 = vmatpush.msra.mxu0 0.0
    %1392 = vmatpush.msra.mxu0 0.0
    %1393 = vmatpush.msra.mxu0 0.0
    %1394 = vmatpush.msra.mxu0 0.0
    %1395 = vmatpush.msra.mxu0 0.0
    %v1396 = vand.u32 %v1038, 4294901760
    %v1397 = vsub.f32 %v1038, %v1396
    %v1398 = vand.u32 %v1397, 4294901760
    %1399 = vmatpush.msra.mxu0 %v1398
    %v1400 = vand.u32 %v1036, 4294901760
    %v1401 = vsub.f32 %v1036, %v1400
    %v1402 = vand.u32 %v1401, 4294901760
    %1403 = vmatpush.msra.mxu0 %v1402
    %v1404 = vand.u32 %v1034, 4294901760
    %v1405 = vsub.f32 %v1034, %v1404
    %v1406 = vand.u32 %v1405, 4294901760
    %1407 = vmatpush.msra.mxu0 %v1406
    %v1408 = vand.u32 %v1032, 4294901760
    %v1409 = vsub.f32 %v1032, %v1408
    %v1410 = vand.u32 %v1409, 4294901760
    %1411 = vmatpush.msra.mxu0 %v1410
    %v1412 = vand.u32 %v1070, 4294901760
    %1413 = vmatmul.f32.gmra.mxu0 %v1412
    %v1414 = vpop.f32.mrf.mxu0
    %v1415 = vadd.f32 %v1382, %v1414
    %1416 = vdwg.mxu0
    %1417 = vmatpush.msra.mxu0 0.0
    %1418 = vmatpush.msra.mxu0 0.0
    %1419 = vmatpush.msra.mxu0 0.0
    %1420 = vmatpush.msra.mxu0 0.0
    %1421 = vmatpush.msra.mxu0 0.0
    %1422 = vmatpush.msra.mxu0 0.0
    %1423 = vmatpush.msra.mxu0 0.0
    %1424 = vmatpush.msra.mxu0 0.0
    %1425 = vmatpush.msra.mxu0 0.0
    %1426 = vmatpush.msra.mxu0 0.0
    %1427 = vmatpush.msra.mxu0 0.0
    %1428 = vmatpush.msra.mxu0 0.0
    %v1429 = vand.u32 %v1038, 4294901760
    %1430 = vmatpush.msra.mxu0 %v1429
    %v1431 = vand.u32 %v1036, 4294901760
    %1432 = vmatpush.msra.mxu0 %v1431
    %v1433 = vand.u32 %v1034, 4294901760
    %1434 = vmatpush.msra.mxu0 %v1433
    %v1435 = vand.u32 %v1032, 4294901760
    %1436 = vmatpush.msra.mxu0 %v1435
    %v1437 = vand.u32 %v1070, 4294901760
    %1438 = vmatmul.f32.gmra.mxu0 %v1437
    %v1439 = vpop.f32.mrf.mxu0
    %v1440 = vadd.f32 %v1415, %v1439
    %1441 = vdwg.mxu0
    %v1442 = vmul.f32 %v1255, %v1029
    %v1443 = vmul.f32 %v1440, %v1030
    %1472 = vrot.lane.b32.xlu0 %v1041, 96
    %v1473 = vpop.permute.xlu0 %1472
    %1474 = vrot.lane.b32.xlu0 %v1042, 96
    %v1475 = vpop.permute.xlu0 %1474
    %1476 = vrot.lane.b32.xlu0 %v1043, 96
    %v1477 = vpop.permute.xlu0 %1476
    %1478 = vrot.lane.b32.xlu0 %v1044, 96
    %v1479 = vpop.permute.xlu0 %1478
    %1480 = vrot.lane.b32.xlu0 %v1045, 96
    %v1481 = vpop.permute.xlu0 %1480
    %1482 = vrot.lane.b32.xlu0 %v1046, 96
    %v1483 = vpop.permute.xlu0 %1482
    %1484 = vrot.lane.b32.xlu0 %v1047, 96
    %v1485 = vpop.permute.xlu0 %1484
    %1486 = vrot.lane.b32.xlu0 %v1048, 96
    %v1487 = vpop.permute.xlu0 %1486
    %1488 = vrot.lane.b32.xlu0 %v1049, 96
    %v1489 = vpop.permute.xlu0 %1488
    %1490 = vrot.lane.b32.xlu0 %v1050, 96
    %v1491 = vpop.permute.xlu0 %1490
    %1492 = vrot.lane.b32.xlu0 %v1051, 96
    %v1493 = vpop.permute.xlu0 %1492
    %1494 = vrot.lane.b32.xlu0 %v1052, 96
    %v1495 = vpop.permute.xlu0 %1494
    %1496 = vrot.lane.b32.xlu0 %v1053, 96
    %v1497 = vpop.permute.xlu0 %1496
    %1498 = vrot.lane.b32.xlu0 %v1054, 96
    %v1499 = vpop.permute.xlu0 %1498
    %1500 = vrot.lane.b32.xlu0 %v1055, 96
    %v1501 = vpop.permute.xlu0 %1500
    %1502 = vrot.lane.b32.xlu0 %v1056, 96
    %v1503 = vpop.permute.xlu0 %1502
    %1504 = vrot.lane.b32.xlu0 %v1057, 96
    %v1505 = vpop.permute.xlu0 %1504
    %1506 = vrot.lane.b32.xlu0 %v1058, 96
    %v1507 = vpop.permute.xlu0 %1506
    %1508 = vrot.lane.b32.xlu0 %v1059, 96
    %v1509 = vpop.permute.xlu0 %1508
    %1510 = vrot.lane.b32.xlu0 %v1060, 96
    %v1511 = vpop.permute.xlu0 %1510
    %1512 = vrot.lane.b32.xlu0 %v1061, 96
    %v1513 = vpop.permute.xlu0 %1512
    %1514 = vrot.lane.b32.xlu0 %v1062, 96
    %v1515 = vpop.permute.xlu0 %1514
    %1516 = vrot.lane.b32.xlu0 %v1063, 96
    %v1517 = vpop.permute.xlu0 %1516
    %1518 = vrot.lane.b32.xlu0 %v1064, 96
    %v1519 = vpop.permute.xlu0 %1518
    %1520 = vrot.lane.b32.xlu0 %v1065, 96
    %v1521 = vpop.permute.xlu0 %1520
    %1522 = vrot.lane.b32.xlu0 %v1066, 96
    %v1523 = vpop.permute.xlu0 %1522
    %1524 = vrot.lane.b32.xlu0 %v1067, 96
    %v1525 = vpop.permute.xlu0 %1524
    %1526 = vrot.lane.b32.xlu0 %v1068, 96
    %v1527 = vpop.permute.xlu0 %1526
    %vm1556 = vcmask 785408
    %v1558 = vsel %vm1556, %v1443, 0
    %v1560 = vand.u32 %v1503, 4294901760
    %1561 = vmatpush.msra.mxu0 %v1560
    %v1562 = vand.u32 %v1501, 4294901760
    %1563 = vmatpush.msra.mxu0 %v1562
    %v1564 = vand.u32 %v1499, 4294901760
    %1565 = vmatpush.msra.mxu0 %v1564
    %v1566 = vand.u32 %v1497, 4294901760
    %1567 = vmatpush.msra.mxu0 %v1566
    %v1568 = vand.u32 %v1495, 4294901760
    %1569 = vmatpush.msra.mxu0 %v1568
    %v1570 = vand.u32 %v1493, 4294901760
    %1571 = vmatpush.msra.mxu0 %v1570
    %v1572 = vand.u32 %v1491, 4294901760
    %1573 = vmatpush.msra.mxu0 %v1572
    %v1574 = vand.u32 %v1489, 4294901760
    %1575 = vmatpush.msra.mxu0 %v1574
    %v1576 = vand.u32 %v1487, 4294901760
    %1577 = vmatpush.msra.mxu0 %v1576
    %v1578 = vand.u32 %v1485, 4294901760
    %1579 = vmatpush.msra.mxu0 %v1578
    %v1580 = vand.u32 %v1483, 4294901760
    %1581 = vmatpush.msra.mxu0 %v1580
    %v1582 = vand.u32 %v1481, 4294901760
    %1583 = vmatpush.msra.mxu0 %v1582
    %v1584 = vand.u32 %v1479, 4294901760
    %1585 = vmatpush.msra.mxu0 %v1584
    %v1586 = vand.u32 %v1477, 4294901760
    %1587 = vmatpush.msra.mxu0 %v1586
    %v1588 = vand.u32 %v1475, 4294901760
    %1589 = vmatpush.msra.mxu0 %v1588
    %v1590 = vand.u32 %v1473, 4294901760
    %1591 = vmatpush.msra.mxu0 %v1590
    %v1592 = vand.u32 %v1442, 4294901760
    %v1593 = vsub.f32 %v1442, %v1592
    %v1594 = vand.u32 %v1593, 4294901760
    %v1595 = vsub.f32 %v1593, %v1594
    %v1596 = vand.u32 %v1595, 4294901760
    %1597 = vmatmul.f32.gmra.mxu0 %v1596
    %v1598 = vpop.f32.mrf.mxu0
    %v1599 = vadd.f32 0.0, %v1598
    %1600 = vdwg.mxu0
    %v1601 = vand.u32 %v1503, 4294901760
    %v1602 = vsub.f32 %v1503, %v1601
    %v1603 = vand.u32 %v1602, 4294901760
    %v1604 = vsub.f32 %v1602, %v1603
    %v1605 = vand.u32 %v1604, 4294901760
    %1606 = vmatpush.msra.mxu0 %v1605
    %v1607 = vand.u32 %v1501, 4294901760
    %v1608 = vsub.f32 %v1501, %v1607
    %v1609 = vand.u32 %v1608, 4294901760
    %v1610 = vsub.f32 %v1608, %v1609
    %v1611 = vand.u32 %v1610, 4294901760
    %1612 = vmatpush.msra.mxu0 %v1611
    %v1613 = vand.u32 %v1499, 4294901760
    %v1614 = vsub.f32 %v1499, %v1613
    %v1615 = vand.u32 %v1614, 4294901760
    %v1616 = vsub.f32 %v1614, %v1615
    %v1617 = vand.u32 %v1616, 4294901760
    %1618 = vmatpush.msra.mxu0 %v1617
    %v1619 = vand.u32 %v1497, 4294901760
    %v1620 = vsub.f32 %v1497, %v1619
    %v1621 = vand.u32 %v1620, 4294901760
    %v1622 = vsub.f32 %v1620, %v1621
    %v1623 = vand.u32 %v1622, 4294901760
    %1624 = vmatpush.msra.mxu0 %v1623
    %v1625 = vand.u32 %v1495, 4294901760
    %v1626 = vsub.f32 %v1495, %v1625
    %v1627 = vand.u32 %v1626, 4294901760
    %v1628 = vsub.f32 %v1626, %v1627
    %v1629 = vand.u32 %v1628, 4294901760
    %1630 = vmatpush.msra.mxu0 %v1629
    %v1631 = vand.u32 %v1493, 4294901760
    %v1632 = vsub.f32 %v1493, %v1631
    %v1633 = vand.u32 %v1632, 4294901760
    %v1634 = vsub.f32 %v1632, %v1633
    %v1635 = vand.u32 %v1634, 4294901760
    %1636 = vmatpush.msra.mxu0 %v1635
    %v1637 = vand.u32 %v1491, 4294901760
    %v1638 = vsub.f32 %v1491, %v1637
    %v1639 = vand.u32 %v1638, 4294901760
    %v1640 = vsub.f32 %v1638, %v1639
    %v1641 = vand.u32 %v1640, 4294901760
    %1642 = vmatpush.msra.mxu0 %v1641
    %v1643 = vand.u32 %v1489, 4294901760
    %v1644 = vsub.f32 %v1489, %v1643
    %v1645 = vand.u32 %v1644, 4294901760
    %v1646 = vsub.f32 %v1644, %v1645
    %v1647 = vand.u32 %v1646, 4294901760
    %1648 = vmatpush.msra.mxu0 %v1647
    %v1649 = vand.u32 %v1487, 4294901760
    %v1650 = vsub.f32 %v1487, %v1649
    %v1651 = vand.u32 %v1650, 4294901760
    %v1652 = vsub.f32 %v1650, %v1651
    %v1653 = vand.u32 %v1652, 4294901760
    %1654 = vmatpush.msra.mxu0 %v1653
    %v1655 = vand.u32 %v1485, 4294901760
    %v1656 = vsub.f32 %v1485, %v1655
    %v1657 = vand.u32 %v1656, 4294901760
    %v1658 = vsub.f32 %v1656, %v1657
    %v1659 = vand.u32 %v1658, 4294901760
    %1660 = vmatpush.msra.mxu0 %v1659
    %v1661 = vand.u32 %v1483, 4294901760
    %v1662 = vsub.f32 %v1483, %v1661
    %v1663 = vand.u32 %v1662, 4294901760
    %v1664 = vsub.f32 %v1662, %v1663
    %v1665 = vand.u32 %v1664, 4294901760
    %1666 = vmatpush.msra.mxu0 %v1665
    %v1667 = vand.u32 %v1481, 4294901760
    %v1668 = vsub.f32 %v1481, %v1667
    %v1669 = vand.u32 %v1668, 4294901760
    %v1670 = vsub.f32 %v1668, %v1669
    %v1671 = vand.u32 %v1670, 4294901760
    %1672 = vmatpush.msra.mxu0 %v1671
    %v1673 = vand.u32 %v1479, 4294901760
    %v1674 = vsub.f32 %v1479, %v1673
    %v1675 = vand.u32 %v1674, 4294901760
    %v1676 = vsub.f32 %v1674, %v1675
    %v1677 = vand.u32 %v1676, 4294901760
    %1678 = vmatpush.msra.mxu0 %v1677
    %v1679 = vand.u32 %v1477, 4294901760
    %v1680 = vsub.f32 %v1477, %v1679
    %v1681 = vand.u32 %v1680, 4294901760
    %v1682 = vsub.f32 %v1680, %v1681
    %v1683 = vand.u32 %v1682, 4294901760
    %1684 = vmatpush.msra.mxu0 %v1683
    %v1685 = vand.u32 %v1475, 4294901760
    %v1686 = vsub.f32 %v1475, %v1685
    %v1687 = vand.u32 %v1686, 4294901760
    %v1688 = vsub.f32 %v1686, %v1687
    %v1689 = vand.u32 %v1688, 4294901760
    %1690 = vmatpush.msra.mxu0 %v1689
    %v1691 = vand.u32 %v1473, 4294901760
    %v1692 = vsub.f32 %v1473, %v1691
    %v1693 = vand.u32 %v1692, 4294901760
    %v1694 = vsub.f32 %v1692, %v1693
    %v1695 = vand.u32 %v1694, 4294901760
    %1696 = vmatpush.msra.mxu0 %v1695
    %v1697 = vand.u32 %v1442, 4294901760
    %1698 = vmatmul.f32.gmra.mxu0 %v1697
    %v1699 = vpop.f32.mrf.mxu0
    %v1700 = vadd.f32 %v1599, %v1699
    %1701 = vdwg.mxu0
    %v1702 = vand.u32 %v1503, 4294901760
    %v1703 = vsub.f32 %v1503, %v1702
    %1704 = vmatpush.msra.mxu0 %v1703
    %v1705 = vand.u32 %v1501, 4294901760
    %v1706 = vsub.f32 %v1501, %v1705
    %1707 = vmatpush.msra.mxu0 %v1706
    %v1708 = vand.u32 %v1499, 4294901760
    %v1709 = vsub.f32 %v1499, %v1708
    %1710 = vmatpush.msra.mxu0 %v1709
    %v1711 = vand.u32 %v1497, 4294901760
    %v1712 = vsub.f32 %v1497, %v1711
    %1713 = vmatpush.msra.mxu0 %v1712
    %v1714 = vand.u32 %v1495, 4294901760
    %v1715 = vsub.f32 %v1495, %v1714
    %1716 = vmatpush.msra.mxu0 %v1715
    %v1717 = vand.u32 %v1493, 4294901760
    %v1718 = vsub.f32 %v1493, %v1717
    %1719 = vmatpush.msra.mxu0 %v1718
    %v1720 = vand.u32 %v1491, 4294901760
    %v1721 = vsub.f32 %v1491, %v1720
    %1722 = vmatpush.msra.mxu0 %v1721
    %v1723 = vand.u32 %v1489, 4294901760
    %v1724 = vsub.f32 %v1489, %v1723
    %1725 = vmatpush.msra.mxu0 %v1724
    %v1726 = vand.u32 %v1487, 4294901760
    %v1727 = vsub.f32 %v1487, %v1726
    %1728 = vmatpush.msra.mxu0 %v1727
    %v1729 = vand.u32 %v1485, 4294901760
    %v1730 = vsub.f32 %v1485, %v1729
    %1731 = vmatpush.msra.mxu0 %v1730
    %v1732 = vand.u32 %v1483, 4294901760
    %v1733 = vsub.f32 %v1483, %v1732
    %1734 = vmatpush.msra.mxu0 %v1733
    %v1735 = vand.u32 %v1481, 4294901760
    %v1736 = vsub.f32 %v1481, %v1735
    %1737 = vmatpush.msra.mxu0 %v1736
    %v1738 = vand.u32 %v1479, 4294901760
    %v1739 = vsub.f32 %v1479, %v1738
    %1740 = vmatpush.msra.mxu0 %v1739
    %v1741 = vand.u32 %v1477, 4294901760
    %v1742 = vsub.f32 %v1477, %v1741
    %1743 = vmatpush.msra.mxu0 %v1742
    %v1744 = vand.u32 %v1475, 4294901760
    %v1745 = vsub.f32 %v1475, %v1744
    %1746 = vmatpush.msra.mxu0 %v1745
    %v1747 = vand.u32 %v1473, 4294901760
    %v1748 = vsub.f32 %v1473, %v1747
    %1749 = vmatpush.msra.mxu0 %v1748
    %v1750 = vand.u32 %v1442, 4294901760
    %v1751 = vsub.f32 %v1442, %v1750
    %1752 = vmatmul.f32.gmra.mxu0 %v1751
    %v1753 = vpop.f32.mrf.mxu0
    %v1754 = vadd.f32 %v1700, %v1753
    %1755 = vdwg.mxu0
    %v1756 = vand.u32 %v1503, 4294901760
    %1757 = vmatpush.msra.mxu0 %v1756
    %v1758 = vand.u32 %v1501, 4294901760
    %1759 = vmatpush.msra.mxu0 %v1758
    %v1760 = vand.u32 %v1499, 4294901760
    %1761 = vmatpush.msra.mxu0 %v1760
    %v1762 = vand.u32 %v1497, 4294901760
    %1763 = vmatpush.msra.mxu0 %v1762
    %v1764 = vand.u32 %v1495, 4294901760
    %1765 = vmatpush.msra.mxu0 %v1764
    %v1766 = vand.u32 %v1493, 4294901760
    %1767 = vmatpush.msra.mxu0 %v1766
    %v1768 = vand.u32 %v1491, 4294901760
    %1769 = vmatpush.msra.mxu0 %v1768
    %v1770 = vand.u32 %v1489, 4294901760
    %1771 = vmatpush.msra.mxu0 %v1770
    %v1772 = vand.u32 %v1487, 4294901760
    %1773 = vmatpush.msra.mxu0 %v1772
    %v1774 = vand.u32 %v1485, 4294901760
    %1775 = vmatpush.msra.mxu0 %v1774
    %v1776 = vand.u32 %v1483, 4294901760
    %1777 = vmatpush.msra.mxu0 %v1776
    %v1778 = vand.u32 %v1481, 4294901760
    %1779 = vmatpush.msra.mxu0 %v1778
    %v1780 = vand.u32 %v1479, 4294901760
    %1781 = vmatpush.msra.mxu0 %v1780
    %v1782 = vand.u32 %v1477, 4294901760
    %1783 = vmatpush.msra.mxu0 %v1782
    %v1784 = vand.u32 %v1475, 4294901760
    %1785 = vmatpush.msra.mxu0 %v1784
    %v1786 = vand.u32 %v1473, 4294901760
    %1787 = vmatpush.msra.mxu0 %v1786
    %v1788 = vand.u32 %v1442, 4294901760
    %v1789 = vsub.f32 %v1442, %v1788
    %v1790 = vand.u32 %v1789, 4294901760
    %1791 = vmatmul.f32.gmra.mxu0 %v1790
    %v1792 = vpop.f32.mrf.mxu0
    %v1793 = vadd.f32 %v1754, %v1792
    %1794 = vdwg.mxu0
    %v1795 = vand.u32 %v1503, 4294901760
    %v1796 = vsub.f32 %v1503, %v1795
    %v1797 = vand.u32 %v1796, 4294901760
    %1798 = vmatpush.msra.mxu0 %v1797
    %v1799 = vand.u32 %v1501, 4294901760
    %v1800 = vsub.f32 %v1501, %v1799
    %v1801 = vand.u32 %v1800, 4294901760
    %1802 = vmatpush.msra.mxu0 %v1801
    %v1803 = vand.u32 %v1499, 4294901760
    %v1804 = vsub.f32 %v1499, %v1803
    %v1805 = vand.u32 %v1804, 4294901760
    %1806 = vmatpush.msra.mxu0 %v1805
    %v1807 = vand.u32 %v1497, 4294901760
    %v1808 = vsub.f32 %v1497, %v1807
    %v1809 = vand.u32 %v1808, 4294901760
    %1810 = vmatpush.msra.mxu0 %v1809
    %v1811 = vand.u32 %v1495, 4294901760
    %v1812 = vsub.f32 %v1495, %v1811
    %v1813 = vand.u32 %v1812, 4294901760
    %1814 = vmatpush.msra.mxu0 %v1813
    %v1815 = vand.u32 %v1493, 4294901760
    %v1816 = vsub.f32 %v1493, %v1815
    %v1817 = vand.u32 %v1816, 4294901760
    %1818 = vmatpush.msra.mxu0 %v1817
    %v1819 = vand.u32 %v1491, 4294901760
    %v1820 = vsub.f32 %v1491, %v1819
    %v1821 = vand.u32 %v1820, 4294901760
    %1822 = vmatpush.msra.mxu0 %v1821
    %v1823 = vand.u32 %v1489, 4294901760
    %v1824 = vsub.f32 %v1489, %v1823
    %v1825 = vand.u32 %v1824, 4294901760
    %1826 = vmatpush.msra.mxu0 %v1825
    %v1827 = vand.u32 %v1487, 4294901760
    %v1828 = vsub.f32 %v1487, %v1827
    %v1829 = vand.u32 %v1828, 4294901760
    %1830 = vmatpush.msra.mxu0 %v1829
    %v1831 = vand.u32 %v1485, 4294901760
    %v1832 = vsub.f32 %v1485, %v1831
    %v1833 = vand.u32 %v1832, 4294901760
    %1834 = vmatpush.msra.mxu0 %v1833
    %v1835 = vand.u32 %v1483, 4294901760
    %v1836 = vsub.f32 %v1483, %v1835
    %v1837 = vand.u32 %v1836, 4294901760
    %1838 = vmatpush.msra.mxu0 %v1837
    %v1839 = vand.u32 %v1481, 4294901760
    %v1840 = vsub.f32 %v1481, %v1839
    %v1841 = vand.u32 %v1840, 4294901760
    %1842 = vmatpush.msra.mxu0 %v1841
    %v1843 = vand.u32 %v1479, 4294901760
    %v1844 = vsub.f32 %v1479, %v1843
    %v1845 = vand.u32 %v1844, 4294901760
    %1846 = vmatpush.msra.mxu0 %v1845
    %v1847 = vand.u32 %v1477, 4294901760
    %v1848 = vsub.f32 %v1477, %v1847
    %v1849 = vand.u32 %v1848, 4294901760
    %1850 = vmatpush.msra.mxu0 %v1849
    %v1851 = vand.u32 %v1475, 4294901760
    %v1852 = vsub.f32 %v1475, %v1851
    %v1853 = vand.u32 %v1852, 4294901760
    %1854 = vmatpush.msra.mxu0 %v1853
    %v1855 = vand.u32 %v1473, 4294901760
    %v1856 = vsub.f32 %v1473, %v1855
    %v1857 = vand.u32 %v1856, 4294901760
    %1858 = vmatpush.msra.mxu0 %v1857
    %v1859 = vand.u32 %v1442, 4294901760
    %1860 = vmatmul.f32.gmra.mxu0 %v1859
    %v1861 = vpop.f32.mrf.mxu0
    %v1862 = vadd.f32 %v1793, %v1861
    %1863 = vdwg.mxu0
    %v1864 = vand.u32 %v1503, 4294901760
    %1865 = vmatpush.msra.mxu0 %v1864
    %v1866 = vand.u32 %v1501, 4294901760
    %1867 = vmatpush.msra.mxu0 %v1866
    %v1868 = vand.u32 %v1499, 4294901760
    %1869 = vmatpush.msra.mxu0 %v1868
    %v1870 = vand.u32 %v1497, 4294901760
    %1871 = vmatpush.msra.mxu0 %v1870
    %v1872 = vand.u32 %v1495, 4294901760
    %1873 = vmatpush.msra.mxu0 %v1872
    %v1874 = vand.u32 %v1493, 4294901760
    %1875 = vmatpush.msra.mxu0 %v1874
    %v1876 = vand.u32 %v1491, 4294901760
    %1877 = vmatpush.msra.mxu0 %v1876
    %v1878 = vand.u32 %v1489, 4294901760
    %1879 = vmatpush.msra.mxu0 %v1878
    %v1880 = vand.u32 %v1487, 4294901760
    %1881 = vmatpush.msra.mxu0 %v1880
    %v1882 = vand.u32 %v1485, 4294901760
    %1883 = vmatpush.msra.mxu0 %v1882
    %v1884 = vand.u32 %v1483, 4294901760
    %1885 = vmatpush.msra.mxu0 %v1884
    %v1886 = vand.u32 %v1481, 4294901760
    %1887 = vmatpush.msra.mxu0 %v1886
    %v1888 = vand.u32 %v1479, 4294901760
    %1889 = vmatpush.msra.mxu0 %v1888
    %v1890 = vand.u32 %v1477, 4294901760
    %1891 = vmatpush.msra.mxu0 %v1890
    %v1892 = vand.u32 %v1475, 4294901760
    %1893 = vmatpush.msra.mxu0 %v1892
    %v1894 = vand.u32 %v1473, 4294901760
    %1895 = vmatpush.msra.mxu0 %v1894
    %v1896 = vand.u32 %v1442, 4294901760
    %1897 = vmatmul.f32.gmra.mxu0 %v1896
    %v1898 = vpop.f32.mrf.mxu0
    %v1899 = vadd.f32 %v1862, %v1898
    %1900 = vdwg.mxu0
    %1901 = vmatpush.msra.mxu0 0.0
    %1902 = vmatpush.msra.mxu0 0.0
    %1903 = vmatpush.msra.mxu0 0.0
    %1904 = vmatpush.msra.mxu0 0.0
    %v1905 = vand.u32 %v1527, 4294901760
    %1906 = vmatpush.msra.mxu0 %v1905
    %v1907 = vand.u32 %v1525, 4294901760
    %1908 = vmatpush.msra.mxu0 %v1907
    %v1909 = vand.u32 %v1523, 4294901760
    %1910 = vmatpush.msra.mxu0 %v1909
    %v1911 = vand.u32 %v1521, 4294901760
    %1912 = vmatpush.msra.mxu0 %v1911
    %v1913 = vand.u32 %v1519, 4294901760
    %1914 = vmatpush.msra.mxu0 %v1913
    %v1915 = vand.u32 %v1517, 4294901760
    %1916 = vmatpush.msra.mxu0 %v1915
    %v1917 = vand.u32 %v1515, 4294901760
    %1918 = vmatpush.msra.mxu0 %v1917
    %v1919 = vand.u32 %v1513, 4294901760
    %1920 = vmatpush.msra.mxu0 %v1919
    %v1921 = vand.u32 %v1511, 4294901760
    %1922 = vmatpush.msra.mxu0 %v1921
    %v1923 = vand.u32 %v1509, 4294901760
    %1924 = vmatpush.msra.mxu0 %v1923
    %v1925 = vand.u32 %v1507, 4294901760
    %1926 = vmatpush.msra.mxu0 %v1925
    %v1927 = vand.u32 %v1505, 4294901760
    %1928 = vmatpush.msra.mxu0 %v1927
    %v1929 = vand.u32 %v1558, 4294901760
    %v1930 = vsub.f32 %v1558, %v1929
    %v1931 = vand.u32 %v1930, 4294901760
    %v1932 = vsub.f32 %v1930, %v1931
    %v1933 = vand.u32 %v1932, 4294901760
    %1934 = vmatmul.f32.gmra.mxu0 %v1933
    %v1935 = vpop.f32.mrf.mxu0
    %v1936 = vadd.f32 %v1899, %v1935
    %1937 = vdwg.mxu0
    %1938 = vmatpush.msra.mxu0 0.0
    %1939 = vmatpush.msra.mxu0 0.0
    %1940 = vmatpush.msra.mxu0 0.0
    %1941 = vmatpush.msra.mxu0 0.0
    %v1942 = vand.u32 %v1527, 4294901760
    %v1943 = vsub.f32 %v1527, %v1942
    %v1944 = vand.u32 %v1943, 4294901760
    %v1945 = vsub.f32 %v1943, %v1944
    %v1946 = vand.u32 %v1945, 4294901760
    %1947 = vmatpush.msra.mxu0 %v1946
    %v1948 = vand.u32 %v1525, 4294901760
    %v1949 = vsub.f32 %v1525, %v1948
    %v1950 = vand.u32 %v1949, 4294901760
    %v1951 = vsub.f32 %v1949, %v1950
    %v1952 = vand.u32 %v1951, 4294901760
    %1953 = vmatpush.msra.mxu0 %v1952
    %v1954 = vand.u32 %v1523, 4294901760
    %v1955 = vsub.f32 %v1523, %v1954
    %v1956 = vand.u32 %v1955, 4294901760
    %v1957 = vsub.f32 %v1955, %v1956
    %v1958 = vand.u32 %v1957, 4294901760
    %1959 = vmatpush.msra.mxu0 %v1958
    %v1960 = vand.u32 %v1521, 4294901760
    %v1961 = vsub.f32 %v1521, %v1960
    %v1962 = vand.u32 %v1961, 4294901760
    %v1963 = vsub.f32 %v1961, %v1962
    %v1964 = vand.u32 %v1963, 4294901760
    %1965 = vmatpush.msra.mxu0 %v1964
    %v1966 = vand.u32 %v1519, 4294901760
    %v1967 = vsub.f32 %v1519, %v1966
    %v1968 = vand.u32 %v1967, 4294901760
    %v1969 = vsub.f32 %v1967, %v1968
    %v1970 = vand.u32 %v1969, 4294901760
    %1971 = vmatpush.msra.mxu0 %v1970
    %v1972 = vand.u32 %v1517, 4294901760
    %v1973 = vsub.f32 %v1517, %v1972
    %v1974 = vand.u32 %v1973, 4294901760
    %v1975 = vsub.f32 %v1973, %v1974
    %v1976 = vand.u32 %v1975, 4294901760
    %1977 = vmatpush.msra.mxu0 %v1976
    %v1978 = vand.u32 %v1515, 4294901760
    %v1979 = vsub.f32 %v1515, %v1978
    %v1980 = vand.u32 %v1979, 4294901760
    %v1981 = vsub.f32 %v1979, %v1980
    %v1982 = vand.u32 %v1981, 4294901760
    %1983 = vmatpush.msra.mxu0 %v1982
    %v1984 = vand.u32 %v1513, 4294901760
    %v1985 = vsub.f32 %v1513, %v1984
    %v1986 = vand.u32 %v1985, 4294901760
    %v1987 = vsub.f32 %v1985, %v1986
    %v1988 = vand.u32 %v1987, 4294901760
    %1989 = vmatpush.msra.mxu0 %v1988
    %v1990 = vand.u32 %v1511, 4294901760
    %v1991 = vsub.f32 %v1511, %v1990
    %v1992 = vand.u32 %v1991, 4294901760
    %v1993 = vsub.f32 %v1991, %v1992
    %v1994 = vand.u32 %v1993, 4294901760
    %1995 = vmatpush.msra.mxu0 %v1994
    %v1996 = vand.u32 %v1509, 4294901760
    %v1997 = vsub.f32 %v1509, %v1996
    %v1998 = vand.u32 %v1997, 4294901760
    %v1999 = vsub.f32 %v1997, %v1998
    %v2000 = vand.u32 %v1999, 4294901760
    %2001 = vmatpush.msra.mxu0 %v2000
    %v2002 = vand.u32 %v1507, 4294901760
    %v2003 = vsub.f32 %v1507, %v2002
    %v2004 = vand.u32 %v2003, 4294901760
    %v2005 = vsub.f32 %v2003, %v2004
    %v2006 = vand.u32 %v2005, 4294901760
    %2007 = vmatpush.msra.mxu0 %v2006
    %v2008 = vand.u32 %v1505, 4294901760
    %v2009 = vsub.f32 %v1505, %v2008
    %v2010 = vand.u32 %v2009, 4294901760
    %v2011 = vsub.f32 %v2009, %v2010
    %v2012 = vand.u32 %v2011, 4294901760
    %2013 = vmatpush.msra.mxu0 %v2012
    %v2014 = vand.u32 %v1558, 4294901760
    %2015 = vmatmul.f32.gmra.mxu0 %v2014
    %v2016 = vpop.f32.mrf.mxu0
    %v2017 = vadd.f32 %v1936, %v2016
    %2018 = vdwg.mxu0
    %2019 = vmatpush.msra.mxu0 0.0
    %2020 = vmatpush.msra.mxu0 0.0
    %2021 = vmatpush.msra.mxu0 0.0
    %2022 = vmatpush.msra.mxu0 0.0
    %v2023 = vand.u32 %v1527, 4294901760
    %v2024 = vsub.f32 %v1527, %v2023
    %2025 = vmatpush.msra.mxu0 %v2024
    %v2026 = vand.u32 %v1525, 4294901760
    %v2027 = vsub.f32 %v1525, %v2026
    %2028 = vmatpush.msra.mxu0 %v2027
    %v2029 = vand.u32 %v1523, 4294901760
    %v2030 = vsub.f32 %v1523, %v2029
    %2031 = vmatpush.msra.mxu0 %v2030
    %v2032 = vand.u32 %v1521, 4294901760
    %v2033 = vsub.f32 %v1521, %v2032
    %2034 = vmatpush.msra.mxu0 %v2033
    %v2035 = vand.u32 %v1519, 4294901760
    %v2036 = vsub.f32 %v1519, %v2035
    %2037 = vmatpush.msra.mxu0 %v2036
    %v2038 = vand.u32 %v1517, 4294901760
    %v2039 = vsub.f32 %v1517, %v2038
    %2040 = vmatpush.msra.mxu0 %v2039
    %v2041 = vand.u32 %v1515, 4294901760
    %v2042 = vsub.f32 %v1515, %v2041
    %2043 = vmatpush.msra.mxu0 %v2042
    %v2044 = vand.u32 %v1513, 4294901760
    %v2045 = vsub.f32 %v1513, %v2044
    %2046 = vmatpush.msra.mxu0 %v2045
    %v2047 = vand.u32 %v1511, 4294901760
    %v2048 = vsub.f32 %v1511, %v2047
    %2049 = vmatpush.msra.mxu0 %v2048
    %v2050 = vand.u32 %v1509, 4294901760
    %v2051 = vsub.f32 %v1509, %v2050
    %2052 = vmatpush.msra.mxu0 %v2051
    %v2053 = vand.u32 %v1507, 4294901760
    %v2054 = vsub.f32 %v1507, %v2053
    %2055 = vmatpush.msra.mxu0 %v2054
    %v2056 = vand.u32 %v1505, 4294901760
    %v2057 = vsub.f32 %v1505, %v2056
    %2058 = vmatpush.msra.mxu0 %v2057
    %v2059 = vand.u32 %v1558, 4294901760
    %v2060 = vsub.f32 %v1558, %v2059
    %2061 = vmatmul.f32.gmra.mxu0 %v2060
    %v2062 = vpop.f32.mrf.mxu0
    %v2063 = vadd.f32 %v2017, %v2062
    %2064 = vdwg.mxu0
    %2065 = vmatpush.msra.mxu0 0.0
    %2066 = vmatpush.msra.mxu0 0.0
    %2067 = vmatpush.msra.mxu0 0.0
    %2068 = vmatpush.msra.mxu0 0.0
    %v2069 = vand.u32 %v1527, 4294901760
    %2070 = vmatpush.msra.mxu0 %v2069
    %v2071 = vand.u32 %v1525, 4294901760
    %2072 = vmatpush.msra.mxu0 %v2071
    %v2073 = vand.u32 %v1523, 4294901760
    %2074 = vmatpush.msra.mxu0 %v2073
    %v2075 = vand.u32 %v1521, 4294901760
    %2076 = vmatpush.msra.mxu0 %v2075
    %v2077 = vand.u32 %v1519, 4294901760
    %2078 = vmatpush.msra.mxu0 %v2077
    %v2079 = vand.u32 %v1517, 4294901760
    %2080 = vmatpush.msra.mxu0 %v2079
    %v2081 = vand.u32 %v1515, 4294901760
    %2082 = vmatpush.msra.mxu0 %v2081
    %v2083 = vand.u32 %v1513, 4294901760
    %2084 = vmatpush.msra.mxu0 %v2083
    %v2085 = vand.u32 %v1511, 4294901760
    %2086 = vmatpush.msra.mxu0 %v2085
    %v2087 = vand.u32 %v1509, 4294901760
    %2088 = vmatpush.msra.mxu0 %v2087
    %v2089 = vand.u32 %v1507, 4294901760
    %2090 = vmatpush.msra.mxu0 %v2089
    %v2091 = vand.u32 %v1505, 4294901760
    %2092 = vmatpush.msra.mxu0 %v2091
    %v2093 = vand.u32 %v1558, 4294901760
    %v2094 = vsub.f32 %v1558, %v2093
    %v2095 = vand.u32 %v2094, 4294901760
    %2096 = vmatmul.f32.gmra.mxu0 %v2095
    %v2097 = vpop.f32.mrf.mxu0
    %v2098 = vadd.f32 %v2063, %v2097
    %2099 = vdwg.mxu0
    %2100 = vmatpush.msra.mxu0 0.0
    %2101 = vmatpush.msra.mxu0 0.0
    %2102 = vmatpush.msra.mxu0 0.0
    %2103 = vmatpush.msra.mxu0 0.0
    %v2104 = vand.u32 %v1527, 4294901760
    %v2105 = vsub.f32 %v1527, %v2104
    %v2106 = vand.u32 %v2105, 4294901760
    %2107 = vmatpush.msra.mxu0 %v2106
    %v2108 = vand.u32 %v1525, 4294901760
    %v2109 = vsub.f32 %v1525, %v2108
    %v2110 = vand.u32 %v2109, 4294901760
    %2111 = vmatpush.msra.mxu0 %v2110
    %v2112 = vand.u32 %v1523, 4294901760
    %v2113 = vsub.f32 %v1523, %v2112
    %v2114 = vand.u32 %v2113, 4294901760
    %2115 = vmatpush.msra.mxu0 %v2114
    %v2116 = vand.u32 %v1521, 4294901760
    %v2117 = vsub.f32 %v1521, %v2116
    %v2118 = vand.u32 %v2117, 4294901760
    %2119 = vmatpush.msra.mxu0 %v2118
    %v2120 = vand.u32 %v1519, 4294901760
    %v2121 = vsub.f32 %v1519, %v2120
    %v2122 = vand.u32 %v2121, 4294901760
    %2123 = vmatpush.msra.mxu0 %v2122
    %v2124 = vand.u32 %v1517, 4294901760
    %v2125 = vsub.f32 %v1517, %v2124
    %v2126 = vand.u32 %v2125, 4294901760
    %2127 = vmatpush.msra.mxu0 %v2126
    %v2128 = vand.u32 %v1515, 4294901760
    %v2129 = vsub.f32 %v1515, %v2128
    %v2130 = vand.u32 %v2129, 4294901760
    %2131 = vmatpush.msra.mxu0 %v2130
    %v2132 = vand.u32 %v1513, 4294901760
    %v2133 = vsub.f32 %v1513, %v2132
    %v2134 = vand.u32 %v2133, 4294901760
    %2135 = vmatpush.msra.mxu0 %v2134
    %v2136 = vand.u32 %v1511, 4294901760
    %v2137 = vsub.f32 %v1511, %v2136
    %v2138 = vand.u32 %v2137, 4294901760
    %2139 = vmatpush.msra.mxu0 %v2138
    %v2140 = vand.u32 %v1509, 4294901760
    %v2141 = vsub.f32 %v1509, %v2140
    %v2142 = vand.u32 %v2141, 4294901760
    %2143 = vmatpush.msra.mxu0 %v2142
    %v2144 = vand.u32 %v1507, 4294901760
    %v2145 = vsub.f32 %v1507, %v2144
    %v2146 = vand.u32 %v2145, 4294901760
    %2147 = vmatpush.msra.mxu0 %v2146
    %v2148 = vand.u32 %v1505, 4294901760
    %v2149 = vsub.f32 %v1505, %v2148
    %v2150 = vand.u32 %v2149, 4294901760
    %2151 = vmatpush.msra.mxu0 %v2150
    %v2152 = vand.u32 %v1558, 4294901760
    %2153 = vmatmul.f32.gmra.mxu0 %v2152
    %v2154 = vpop.f32.mrf.mxu0
    %v2155 = vadd.f32 %v2098, %v2154
    %2156 = vdwg.mxu0
    %2157 = vmatpush.msra.mxu0 0.0
    %2158 = vmatpush.msra.mxu0 0.0
    %2159 = vmatpush.msra.mxu0 0.0
    %2160 = vmatpush.msra.mxu0 0.0
    %v2161 = vand.u32 %v1527, 4294901760
    %2162 = vmatpush.msra.mxu0 %v2161
    %v2163 = vand.u32 %v1525, 4294901760
    %2164 = vmatpush.msra.mxu0 %v2163
    %v2165 = vand.u32 %v1523, 4294901760
    %2166 = vmatpush.msra.mxu0 %v2165
    %v2167 = vand.u32 %v1521, 4294901760
    %2168 = vmatpush.msra.mxu0 %v2167
    %v2169 = vand.u32 %v1519, 4294901760
    %2170 = vmatpush.msra.mxu0 %v2169
    %v2171 = vand.u32 %v1517, 4294901760
    %2172 = vmatpush.msra.mxu0 %v2171
    %v2173 = vand.u32 %v1515, 4294901760
    %2174 = vmatpush.msra.mxu0 %v2173
    %v2175 = vand.u32 %v1513, 4294901760
    %2176 = vmatpush.msra.mxu0 %v2175
    %v2177 = vand.u32 %v1511, 4294901760
    %2178 = vmatpush.msra.mxu0 %v2177
    %v2179 = vand.u32 %v1509, 4294901760
    %2180 = vmatpush.msra.mxu0 %v2179
    %v2181 = vand.u32 %v1507, 4294901760
    %2182 = vmatpush.msra.mxu0 %v2181
    %v2183 = vand.u32 %v1505, 4294901760
    %2184 = vmatpush.msra.mxu0 %v2183
    %v2185 = vand.u32 %v1558, 4294901760
    %2186 = vmatmul.f32.gmra.mxu0 %v2185
    %v2187 = vpop.f32.mrf.mxu0
    %v2188 = vadd.f32 %v2155, %v2187
    %2189 = vdwg.mxu0
    %vm2190 = vcmask 56320
    %v2191 = vsel %vm2190, %v2188, -inf
    %2192 = vmax.xlane.f32.xlu0 %v2191
    %v2193 = vpop.xlane.xlu0 %2192
    %v2194 = vsub.f32 %v2188, %v2193
    %v2195 = vmul.f32 %v2194, 1.442695
    %v2196 = vpow.pop %v2195
    %v2197 = vsel %vm2190, %v2196, 0.0
    %2198 = vadd.xlane.f32.xlu0 %v2197
    %v2199 = vpop.xlane.xlu0 %2198
    %v2200 = vrcp.pop %v2199
    %v2201 = vmul.f32 %v2199, %v2200
    %v2202 = vsub.f32 1.0, %v2201
    %v2203 = vmul.f32 %v2200, %v2202
    %v2204 = vadd.f32 %v2200, %v2203
    %vm2205 = vweird.f32 %v2199
    %vm2206 = vweird.f32 %v2200
    %vm2207 = vmor %vm2205, %vm2206
    %v2208 = vsel %vm2207, %v2200, %v2204
    %v2209 = vand.u32 2147483647, %v2199
    %vm2210 = vcmp.eq.f32.partialorder %v2209, 8.507059e+37
    %v2211 = vand.u32 %v2199, 2147483648
    %v2212 = vor.u32 1.1754944e-38, %v2211
    %v2213 = vsel %vm2210, %v2212, %v2208
    %v2214 = vmul.f32 %v2196, %v2213
    %v2216 = vsel %vm2190, %v2214, 0
    %vm2218 = vcmask 1046528
    %v2220 = vsel %vm2218, %v1039, 0
    %v2223 = vsel %vm2218, %v1040, 0
    %2225 = vmatpush.msra.mxu0 0.0
    %2226 = vmatpush.msra.mxu0 0.0
    %2227 = vmatpush.msra.mxu0 0.0
    %2228 = vmatpush.msra.mxu0 0.0
    %2229 = vmatpush.msra.mxu0 0.0
    %2230 = vmatpush.msra.mxu0 0.0
    %2231 = vmatpush.msra.mxu0 0.0
    %2232 = vmatpush.msra.mxu0 0.0
    %2233 = vmatpush.msra.mxu0 0.0
    %2234 = vmatpush.msra.mxu0 0.0
    %2235 = vmatpush.msra.mxu0 0.0
    %2236 = vmatpush.msra.mxu0 0.0
    %2237 = vmatpush.msra.mxu0 0.0
    %2238 = vmatpush.msra.mxu0 0.0
    %2239 = vmatpush.msra.mxu0 0.0
    %v2240 = vand.u32 %v2220, 4294901760
    %2241 = vmatpush.msra.mxu0 %v2240
    %v2242 = vand.u32 %v2216, 4294901760
    %v2243 = vsub.f32 %v2216, %v2242
    %v2244 = vand.u32 %v2243, 4294901760
    %v2245 = vsub.f32 %v2243, %v2244
    %v2246 = vand.u32 %v2245, 4294901760
    %2247 = vmatmul.f32.gmra.mxu0 %v2246
    %v2248 = vpop.f32.mrf.mxu0
    %v2249 = vadd.f32 0.0, %v2248
    %2250 = vdwg.mxu0
    %2251 = vmatpush.msra.mxu0 0.0
    %2252 = vmatpush.msra.mxu0 0.0
    %2253 = vmatpush.msra.mxu0 0.0
    %2254 = vmatpush.msra.mxu0 0.0
    %2255 = vmatpush.msra.mxu0 0.0
    %2256 = vmatpush.msra.mxu0 0.0
    %2257 = vmatpush.msra.mxu0 0.0
    %2258 = vmatpush.msra.mxu0 0.0
    %2259 = vmatpush.msra.mxu0 0.0
    %2260 = vmatpush.msra.mxu0 0.0
    %2261 = vmatpush.msra.mxu0 0.0
    %2262 = vmatpush.msra.mxu0 0.0
    %2263 = vmatpush.msra.mxu0 0.0
    %2264 = vmatpush.msra.mxu0 0.0
    %2265 = vmatpush.msra.mxu0 0.0
    %v2266 = vand.u32 %v2220, 4294901760
    %v2267 = vsub.f32 %v2220, %v2266
    %v2268 = vand.u32 %v2267, 4294901760
    %v2269 = vsub.f32 %v2267, %v2268
    %v2270 = vand.u32 %v2269, 4294901760
    %2271 = vmatpush.msra.mxu0 %v2270
    %v2272 = vand.u32 %v2216, 4294901760
    %2273 = vmatmul.f32.gmra.mxu0 %v2272
    %v2274 = vpop.f32.mrf.mxu0
    %v2275 = vadd.f32 %v2249, %v2274
    %2276 = vdwg.mxu0
    %2277 = vmatpush.msra.mxu0 0.0
    %2278 = vmatpush.msra.mxu0 0.0
    %2279 = vmatpush.msra.mxu0 0.0
    %2280 = vmatpush.msra.mxu0 0.0
    %2281 = vmatpush.msra.mxu0 0.0
    %2282 = vmatpush.msra.mxu0 0.0
    %2283 = vmatpush.msra.mxu0 0.0
    %2284 = vmatpush.msra.mxu0 0.0
    %2285 = vmatpush.msra.mxu0 0.0
    %2286 = vmatpush.msra.mxu0 0.0
    %2287 = vmatpush.msra.mxu0 0.0
    %2288 = vmatpush.msra.mxu0 0.0
    %2289 = vmatpush.msra.mxu0 0.0
    %2290 = vmatpush.msra.mxu0 0.0
    %2291 = vmatpush.msra.mxu0 0.0
    %v2292 = vand.u32 %v2220, 4294901760
    %v2293 = vsub.f32 %v2220, %v2292
    %2294 = vmatpush.msra.mxu0 %v2293
    %v2295 = vand.u32 %v2216, 4294901760
    %v2296 = vsub.f32 %v2216, %v2295
    %2297 = vmatmul.f32.gmra.mxu0 %v2296
    %v2298 = vpop.f32.mrf.mxu0
    %v2299 = vadd.f32 %v2275, %v2298
    %2300 = vdwg.mxu0
    %2301 = vmatpush.msra.mxu0 0.0
    %2302 = vmatpush.msra.mxu0 0.0
    %2303 = vmatpush.msra.mxu0 0.0
    %2304 = vmatpush.msra.mxu0 0.0
    %2305 = vmatpush.msra.mxu0 0.0
    %2306 = vmatpush.msra.mxu0 0.0
    %2307 = vmatpush.msra.mxu0 0.0
    %2308 = vmatpush.msra.mxu0 0.0
    %2309 = vmatpush.msra.mxu0 0.0
    %2310 = vmatpush.msra.mxu0 0.0
    %2311 = vmatpush.msra.mxu0 0.0
    %2312 = vmatpush.msra.mxu0 0.0
    %2313 = vmatpush.msra.mxu0 0.0
    %2314 = vmatpush.msra.mxu0 0.0
    %2315 = vmatpush.msra.mxu0 0.0
    %v2316 = vand.u32 %v2220, 4294901760
    %2317 = vmatpush.msra.mxu0 %v2316
    %v2318 = vand.u32 %v2216, 4294901760
    %v2319 = vsub.f32 %v2216, %v2318
    %v2320 = vand.u32 %v2319, 4294901760
    %2321 = vmatmul.f32.gmra.mxu0 %v2320
    %v2322 = vpop.f32.mrf.mxu0
    %v2323 = vadd.f32 %v2299, %v2322
    %2324 = vdwg.mxu0
    %2325 = vmatpush.msra.mxu0 0.0
    %2326 = vmatpush.msra.mxu0 0.0
    %2327 = vmatpush.msra.mxu0 0.0
    %2328 = vmatpush.msra.mxu0 0.0
    %2329 = vmatpush.msra.mxu0 0.0
    %2330 = vmatpush.msra.mxu0 0.0
    %2331 = vmatpush.msra.mxu0 0.0
    %2332 = vmatpush.msra.mxu0 0.0
    %2333 = vmatpush.msra.mxu0 0.0
    %2334 = vmatpush.msra.mxu0 0.0
    %2335 = vmatpush.msra.mxu0 0.0
    %2336 = vmatpush.msra.mxu0 0.0
    %2337 = vmatpush.msra.mxu0 0.0
    %2338 = vmatpush.msra.mxu0 0.0
    %2339 = vmatpush.msra.mxu0 0.0
    %v2340 = vand.u32 %v2220, 4294901760
    %v2341 = vsub.f32 %v2220, %v2340
    %v2342 = vand.u32 %v2341, 4294901760
    %2343 = vmatpush.msra.mxu0 %v2342
    %v2344 = vand.u32 %v2216, 4294901760
    %2345 = vmatmul.f32.gmra.mxu0 %v2344
    %v2346 = vpop.f32.mrf.mxu0
    %v2347 = vadd.f32 %v2323, %v2346
    %2348 = vdwg.mxu0
    %2349 = vmatpush.msra.mxu0 0.0
    %2350 = vmatpush.msra.mxu0 0.0
    %2351 = vmatpush.msra.mxu0 0.0
    %2352 = vmatpush.msra.mxu0 0.0
    %2353 = vmatpush.msra.mxu0 0.0
    %2354 = vmatpush.msra.mxu0 0.0
    %2355 = vmatpush.msra.mxu0 0.0
    %2356 = vmatpush.msra.mxu0 0.0
    %2357 = vmatpush.msra.mxu0 0.0
    %2358 = vmatpush.msra.mxu0 0.0
    %2359 = vmatpush.msra.mxu0 0.0
    %2360 = vmatpush.msra.mxu0 0.0
    %2361 = vmatpush.msra.mxu0 0.0
    %2362 = vmatpush.msra.mxu0 0.0
    %2363 = vmatpush.msra.mxu0 0.0
    %v2364 = vand.u32 %v2220, 4294901760
    %2365 = vmatpush.msra.mxu0 %v2364
    %v2366 = vand.u32 %v2216, 4294901760
    %2367 = vmatmul.f32.gmra.mxu0 %v2366
    %v2368 = vpop.f32.mrf.mxu0
    %v2369 = vadd.f32 %v2347, %v2368
    %2370 = vdwg.mxu0
    %2371 = vmatpush.msra.mxu0 0.0
    %2372 = vmatpush.msra.mxu0 0.0
    %2373 = vmatpush.msra.mxu0 0.0
    %2374 = vmatpush.msra.mxu0 0.0
    %2375 = vmatpush.msra.mxu0 0.0
    %2376 = vmatpush.msra.mxu0 0.0
    %2377 = vmatpush.msra.mxu0 0.0
    %2378 = vmatpush.msra.mxu0 0.0
    %2379 = vmatpush.msra.mxu0 0.0
    %2380 = vmatpush.msra.mxu0 0.0
    %2381 = vmatpush.msra.mxu0 0.0
    %2382 = vmatpush.msra.mxu0 0.0
    %2383 = vmatpush.msra.mxu0 0.0
    %2384 = vmatpush.msra.mxu0 0.0
    %2385 = vmatpush.msra.mxu0 0.0
    %v2386 = vand.u32 %v2223, 4294901760
    %2387 = vmatpush.msra.mxu0 %v2386
    %v2388 = vand.u32 %v2216, 4294901760
    %v2389 = vsub.f32 %v2216, %v2388
    %v2390 = vand.u32 %v2389, 4294901760
    %v2391 = vsub.f32 %v2389, %v2390
    %v2392 = vand.u32 %v2391, 4294901760
    %2393 = vmatmul.f32.gmra.mxu0 %v2392
    %v2394 = vpop.f32.mrf.mxu0
    %v2395 = vadd.f32 0.0, %v2394
    %2396 = vdwg.mxu0
    %2397 = vmatpush.msra.mxu0 0.0
    %2398 = vmatpush.msra.mxu0 0.0
    %2399 = vmatpush.msra.mxu0 0.0
    %2400 = vmatpush.msra.mxu0 0.0
    %2401 = vmatpush.msra.mxu0 0.0
    %2402 = vmatpush.msra.mxu0 0.0
    %2403 = vmatpush.msra.mxu0 0.0
    %2404 = vmatpush.msra.mxu0 0.0
    %2405 = vmatpush.msra.mxu0 0.0
    %2406 = vmatpush.msra.mxu0 0.0
    %2407 = vmatpush.msra.mxu0 0.0
    %2408 = vmatpush.msra.mxu0 0.0
    %2409 = vmatpush.msra.mxu0 0.0
    %2410 = vmatpush.msra.mxu0 0.0
    %2411 = vmatpush.msra.mxu0 0.0
    %v2412 = vand.u32 %v2223, 4294901760
    %v2413 = vsub.f32 %v2223, %v2412
    %v2414 = vand.u32 %v2413, 4294901760
    %v2415 = vsub.f32 %v2413, %v2414
    %v2416 = vand.u32 %v2415, 4294901760
    %2417 = vmatpush.msra.mxu0 %v2416
    %v2418 = vand.u32 %v2216, 4294901760
    %2419 = vmatmul.f32.gmra.mxu0 %v2418
    %v2420 = vpop.f32.mrf.mxu0
    %v2421 = vadd.f32 %v2395, %v2420
    %2422 = vdwg.mxu0
    %2423 = vmatpush.msra.mxu0 0.0
    %2424 = vmatpush.msra.mxu0 0.0
    %2425 = vmatpush.msra.mxu0 0.0
    %2426 = vmatpush.msra.mxu0 0.0
    %2427 = vmatpush.msra.mxu0 0.0
    %2428 = vmatpush.msra.mxu0 0.0
    %2429 = vmatpush.msra.mxu0 0.0
    %2430 = vmatpush.msra.mxu0 0.0
    %2431 = vmatpush.msra.mxu0 0.0
    %2432 = vmatpush.msra.mxu0 0.0
    %2433 = vmatpush.msra.mxu0 0.0
    %2434 = vmatpush.msra.mxu0 0.0
    %2435 = vmatpush.msra.mxu0 0.0
    %2436 = vmatpush.msra.mxu0 0.0
    %2437 = vmatpush.msra.mxu0 0.0
    %v2438 = vand.u32 %v2223, 4294901760
    %v2439 = vsub.f32 %v2223, %v2438
    %2440 = vmatpush.msra.mxu0 %v2439
    %v2441 = vand.u32 %v2216, 4294901760
    %v2442 = vsub.f32 %v2216, %v2441
    %2443 = vmatmul.f32.gmra.mxu0 %v2442
    %v2444 = vpop.f32.mrf.mxu0
    %v2445 = vadd.f32 %v2421, %v2444
    %2446 = vdwg.mxu0
    %2447 = vmatpush.msra.mxu0 0.0
    %2448 = vmatpush.msra.mxu0 0.0
    %2449 = vmatpush.msra.mxu0 0.0
    %2450 = vmatpush.msra.mxu0 0.0
    %2451 = vmatpush.msra.mxu0 0.0
    %2452 = vmatpush.msra.mxu0 0.0
    %2453 = vmatpush.msra.mxu0 0.0
    %2454 = vmatpush.msra.mxu0 0.0
    %2455 = vmatpush.msra.mxu0 0.0
    %2456 = vmatpush.msra.mxu0 0.0
    %2457 = vmatpush.msra.mxu0 0.0
    %2458 = vmatpush.msra.mxu0 0.0
    %2459 = vmatpush.msra.mxu0 0.0
    %2460 = vmatpush.msra.mxu0 0.0
    %2461 = vmatpush.msra.mxu0 0.0
    %v2462 = vand.u32 %v2223, 4294901760
    %2463 = vmatpush.msra.mxu0 %v2462
    %v2464 = vand.u32 %v2216, 4294901760
    %v2465 = vsub.f32 %v2216, %v2464
    %v2466 = vand.u32 %v2465, 4294901760
    %2467 = vmatmul.f32.gmra.mxu0 %v2466
    %v2468 = vpop.f32.mrf.mxu0
    %v2469 = vadd.f32 %v2445, %v2468
    %2470 = vdwg.mxu0
    %2471 = vmatpush.msra.mxu0 0.0
    %2472 = vmatpush.msra.mxu0 0.0
    %2473 = vmatpush.msra.mxu0 0.0
    %2474 = vmatpush.msra.mxu0 0.0
    %2475 = vmatpush.msra.mxu0 0.0
    %2476 = vmatpush.msra.mxu0 0.0
    %2477 = vmatpush.msra.mxu0 0.0
    %2478 = vmatpush.msra.mxu0 0.0
    %2479 = vmatpush.msra.mxu0 0.0
    %2480 = vmatpush.msra.mxu0 0.0
    %2481 = vmatpush.msra.mxu0 0.0
    %2482 = vmatpush.msra.mxu0 0.0
    %2483 = vmatpush.msra.mxu0 0.0
    %2484 = vmatpush.msra.mxu0 0.0
    %2485 = vmatpush.msra.mxu0 0.0
    %v2486 = vand.u32 %v2223, 4294901760
    %v2487 = vsub.f32 %v2223, %v2486
    %v2488 = vand.u32 %v2487, 4294901760
    %2489 = vmatpush.msra.mxu0 %v2488
    %v2490 = vand.u32 %v2216, 4294901760
    %2491 = vmatmul.f32.gmra.mxu0 %v2490
    %v2492 = vpop.f32.mrf.mxu0
    %v2493 = vadd.f32 %v2469, %v2492
    %2494 = vdwg.mxu0
    %2495 = vmatpush.msra.mxu0 0.0
    %2496 = vmatpush.msra.mxu0 0.0
    %2497 = vmatpush.msra.mxu0 0.0
    %2498 = vmatpush.msra.mxu0 0.0
    %2499 = vmatpush.msra.mxu0 0.0
    %2500 = vmatpush.msra.mxu0 0.0
    %2501 = vmatpush.msra.mxu0 0.0
    %2502 = vmatpush.msra.mxu0 0.0
    %2503 = vmatpush.msra.mxu0 0.0
    %2504 = vmatpush.msra.mxu0 0.0
    %2505 = vmatpush.msra.mxu0 0.0
    %2506 = vmatpush.msra.mxu0 0.0
    %2507 = vmatpush.msra.mxu0 0.0
    %2508 = vmatpush.msra.mxu0 0.0
    %2509 = vmatpush.msra.mxu0 0.0
    %v2510 = vand.u32 %v2223, 4294901760
    %2511 = vmatpush.msra.mxu0 %v2510
    %v2512 = vand.u32 %v2216, 4294901760
    %2513 = vmatmul.f32.gmra.mxu0 %v2512
    %v2514 = vpop.f32.mrf.mxu0
    %v2515 = vadd.f32 %v2493, %v2514
    %2516 = vdwg.mxu0
    %v2517 = vmul.f32 %v2369, %v1029
    %v2518 = vmul.f32 %v2515, %v1030
    %v2520 = vsel %vm1556, %v2518, 0
    %v2522 = vand.u32 %v1056, 4294901760
    %2523 = vmatpush.msra.mxu0 %v2522
    %v2524 = vand.u32 %v1055, 4294901760
    %2525 = vmatpush.msra.mxu0 %v2524
    %v2526 = vand.u32 %v1054, 4294901760
    %2527 = vmatpush.msra.mxu0 %v2526
    %v2528 = vand.u32 %v1053, 4294901760
    %2529 = vmatpush.msra.mxu0 %v2528
    %v2530 = vand.u32 %v1052, 4294901760
    %2531 = vmatpush.msra.mxu0 %v2530
    %v2532 = vand.u32 %v1051, 4294901760
    %2533 = vmatpush.msra.mxu0 %v2532
    %v2534 = vand.u32 %v1050, 4294901760
    %2535 = vmatpush.msra.mxu0 %v2534
    %v2536 = vand.u32 %v1049, 4294901760
    %2537 = vmatpush.msra.mxu0 %v2536
    %v2538 = vand.u32 %v1048, 4294901760
    %2539 = vmatpush.msra.mxu0 %v2538
    %v2540 = vand.u32 %v1047, 4294901760
    %2541 = vmatpush.msra.mxu0 %v2540
    %v2542 = vand.u32 %v1046, 4294901760
    %2543 = vmatpush.msra.mxu0 %v2542
    %v2544 = vand.u32 %v1045, 4294901760
    %2545 = vmatpush.msra.mxu0 %v2544
    %v2546 = vand.u32 %v1044, 4294901760
    %2547 = vmatpush.msra.mxu0 %v2546
    %v2548 = vand.u32 %v1043, 4294901760
    %2549 = vmatpush.msra.mxu0 %v2548
    %v2550 = vand.u32 %v1042, 4294901760
    %2551 = vmatpush.msra.mxu0 %v2550
    %v2552 = vand.u32 %v1041, 4294901760
    %2553 = vmatpush.msra.mxu0 %v2552
    %v2554 = vand.u32 %v2517, 4294901760
    %v2555 = vsub.f32 %v2517, %v2554
    %v2556 = vand.u32 %v2555, 4294901760
    %v2557 = vsub.f32 %v2555, %v2556
    %v2558 = vand.u32 %v2557, 4294901760
    %2559 = vmatmul.f32.gmra.mxu0 %v2558
    %v2560 = vpop.f32.mrf.mxu0
    %v2561 = vadd.f32 0.0, %v2560
    %2562 = vdwg.mxu0
    %v2563 = vand.u32 %v1056, 4294901760
    %v2564 = vsub.f32 %v1056, %v2563
    %v2565 = vand.u32 %v2564, 4294901760
    %v2566 = vsub.f32 %v2564, %v2565
    %v2567 = vand.u32 %v2566, 4294901760
    %2568 = vmatpush.msra.mxu0 %v2567
    %v2569 = vand.u32 %v1055, 4294901760
    %v2570 = vsub.f32 %v1055, %v2569
    %v2571 = vand.u32 %v2570, 4294901760
    %v2572 = vsub.f32 %v2570, %v2571
    %v2573 = vand.u32 %v2572, 4294901760
    %2574 = vmatpush.msra.mxu0 %v2573
    %v2575 = vand.u32 %v1054, 4294901760
    %v2576 = vsub.f32 %v1054, %v2575
    %v2577 = vand.u32 %v2576, 4294901760
    %v2578 = vsub.f32 %v2576, %v2577
    %v2579 = vand.u32 %v2578, 4294901760
    %2580 = vmatpush.msra.mxu0 %v2579
    %v2581 = vand.u32 %v1053, 4294901760
    %v2582 = vsub.f32 %v1053, %v2581
    %v2583 = vand.u32 %v2582, 4294901760
    %v2584 = vsub.f32 %v2582, %v2583
    %v2585 = vand.u32 %v2584, 4294901760
    %2586 = vmatpush.msra.mxu0 %v2585
    %v2587 = vand.u32 %v1052, 4294901760
    %v2588 = vsub.f32 %v1052, %v2587
    %v2589 = vand.u32 %v2588, 4294901760
    %v2590 = vsub.f32 %v2588, %v2589
    %v2591 = vand.u32 %v2590, 4294901760
    %2592 = vmatpush.msra.mxu0 %v2591
    %v2593 = vand.u32 %v1051, 4294901760
    %v2594 = vsub.f32 %v1051, %v2593
    %v2595 = vand.u32 %v2594, 4294901760
    %v2596 = vsub.f32 %v2594, %v2595
    %v2597 = vand.u32 %v2596, 4294901760
    %2598 = vmatpush.msra.mxu0 %v2597
    %v2599 = vand.u32 %v1050, 4294901760
    %v2600 = vsub.f32 %v1050, %v2599
    %v2601 = vand.u32 %v2600, 4294901760
    %v2602 = vsub.f32 %v2600, %v2601
    %v2603 = vand.u32 %v2602, 4294901760
    %2604 = vmatpush.msra.mxu0 %v2603
    %v2605 = vand.u32 %v1049, 4294901760
    %v2606 = vsub.f32 %v1049, %v2605
    %v2607 = vand.u32 %v2606, 4294901760
    %v2608 = vsub.f32 %v2606, %v2607
    %v2609 = vand.u32 %v2608, 4294901760
    %2610 = vmatpush.msra.mxu0 %v2609
    %v2611 = vand.u32 %v1048, 4294901760
    %v2612 = vsub.f32 %v1048, %v2611
    %v2613 = vand.u32 %v2612, 4294901760
    %v2614 = vsub.f32 %v2612, %v2613
    %v2615 = vand.u32 %v2614, 4294901760
    %2616 = vmatpush.msra.mxu0 %v2615
    %v2617 = vand.u32 %v1047, 4294901760
    %v2618 = vsub.f32 %v1047, %v2617
    %v2619 = vand.u32 %v2618, 4294901760
    %v2620 = vsub.f32 %v2618, %v2619
    %v2621 = vand.u32 %v2620, 4294901760
    %2622 = vmatpush.msra.mxu0 %v2621
    %v2623 = vand.u32 %v1046, 4294901760
    %v2624 = vsub.f32 %v1046, %v2623
    %v2625 = vand.u32 %v2624, 4294901760
    %v2626 = vsub.f32 %v2624, %v2625
    %v2627 = vand.u32 %v2626, 4294901760
    %2628 = vmatpush.msra.mxu0 %v2627
    %v2629 = vand.u32 %v1045, 4294901760
    %v2630 = vsub.f32 %v1045, %v2629
    %v2631 = vand.u32 %v2630, 4294901760
    %v2632 = vsub.f32 %v2630, %v2631
    %v2633 = vand.u32 %v2632, 4294901760
    %2634 = vmatpush.msra.mxu0 %v2633
    %v2635 = vand.u32 %v1044, 4294901760
    %v2636 = vsub.f32 %v1044, %v2635
    %v2637 = vand.u32 %v2636, 4294901760
    %v2638 = vsub.f32 %v2636, %v2637
    %v2639 = vand.u32 %v2638, 4294901760
    %2640 = vmatpush.msra.mxu0 %v2639
    %v2641 = vand.u32 %v1043, 4294901760
    %v2642 = vsub.f32 %v1043, %v2641
    %v2643 = vand.u32 %v2642, 4294901760
    %v2644 = vsub.f32 %v2642, %v2643
    %v2645 = vand.u32 %v2644, 4294901760
    %2646 = vmatpush.msra.mxu0 %v2645
    %v2647 = vand.u32 %v1042, 4294901760
    %v2648 = vsub.f32 %v1042, %v2647
    %v2649 = vand.u32 %v2648, 4294901760
    %v2650 = vsub.f32 %v2648, %v2649
    %v2651 = vand.u32 %v2650, 4294901760
    %2652 = vmatpush.msra.mxu0 %v2651
    %v2653 = vand.u32 %v1041, 4294901760
    %v2654 = vsub.f32 %v1041, %v2653
    %v2655 = vand.u32 %v2654, 4294901760
    %v2656 = vsub.f32 %v2654, %v2655
    %v2657 = vand.u32 %v2656, 4294901760
    %2658 = vmatpush.msra.mxu0 %v2657
    %v2659 = vand.u32 %v2517, 4294901760
    %2660 = vmatmul.f32.gmra.mxu0 %v2659
    %v2661 = vpop.f32.mrf.mxu0
    %v2662 = vadd.f32 %v2561, %v2661
    %2663 = vdwg.mxu0
    %v2664 = vand.u32 %v1056, 4294901760
    %v2665 = vsub.f32 %v1056, %v2664
    %2666 = vmatpush.msra.mxu0 %v2665
    %v2667 = vand.u32 %v1055, 4294901760
    %v2668 = vsub.f32 %v1055, %v2667
    %2669 = vmatpush.msra.mxu0 %v2668
    %v2670 = vand.u32 %v1054, 4294901760
    %v2671 = vsub.f32 %v1054, %v2670
    %2672 = vmatpush.msra.mxu0 %v2671
    %v2673 = vand.u32 %v1053, 4294901760
    %v2674 = vsub.f32 %v1053, %v2673
    %2675 = vmatpush.msra.mxu0 %v2674
    %v2676 = vand.u32 %v1052, 4294901760
    %v2677 = vsub.f32 %v1052, %v2676
    %2678 = vmatpush.msra.mxu0 %v2677
    %v2679 = vand.u32 %v1051, 4294901760
    %v2680 = vsub.f32 %v1051, %v2679
    %2681 = vmatpush.msra.mxu0 %v2680
    %v2682 = vand.u32 %v1050, 4294901760
    %v2683 = vsub.f32 %v1050, %v2682
    %2684 = vmatpush.msra.mxu0 %v2683
    %v2685 = vand.u32 %v1049, 4294901760
    %v2686 = vsub.f32 %v1049, %v2685
    %2687 = vmatpush.msra.mxu0 %v2686
    %v2688 = vand.u32 %v1048, 4294901760
    %v2689 = vsub.f32 %v1048, %v2688
    %2690 = vmatpush.msra.mxu0 %v2689
    %v2691 = vand.u32 %v1047, 4294901760
    %v2692 = vsub.f32 %v1047, %v2691
    %2693 = vmatpush.msra.mxu0 %v2692
    %v2694 = vand.u32 %v1046, 4294901760
    %v2695 = vsub.f32 %v1046, %v2694
    %2696 = vmatpush.msra.mxu0 %v2695
    %v2697 = vand.u32 %v1045, 4294901760
    %v2698 = vsub.f32 %v1045, %v2697
    %2699 = vmatpush.msra.mxu0 %v2698
    %v2700 = vand.u32 %v1044, 4294901760
    %v2701 = vsub.f32 %v1044, %v2700
    %2702 = vmatpush.msra.mxu0 %v2701
    %v2703 = vand.u32 %v1043, 4294901760
    %v2704 = vsub.f32 %v1043, %v2703
    %2705 = vmatpush.msra.mxu0 %v2704
    %v2706 = vand.u32 %v1042, 4294901760
    %v2707 = vsub.f32 %v1042, %v2706
    %2708 = vmatpush.msra.mxu0 %v2707
    %v2709 = vand.u32 %v1041, 4294901760
    %v2710 = vsub.f32 %v1041, %v2709
    %2711 = vmatpush.msra.mxu0 %v2710
    %v2712 = vand.u32 %v2517, 4294901760
    %v2713 = vsub.f32 %v2517, %v2712
    %2714 = vmatmul.f32.gmra.mxu0 %v2713
    %v2715 = vpop.f32.mrf.mxu0
    %v2716 = vadd.f32 %v2662, %v2715
    %2717 = vdwg.mxu0
    %v2718 = vand.u32 %v1056, 4294901760
    %2719 = vmatpush.msra.mxu0 %v2718
    %v2720 = vand.u32 %v1055, 4294901760
    %2721 = vmatpush.msra.mxu0 %v2720
    %v2722 = vand.u32 %v1054, 4294901760
    %2723 = vmatpush.msra.mxu0 %v2722
    %v2724 = vand.u32 %v1053, 4294901760
    %2725 = vmatpush.msra.mxu0 %v2724
    %v2726 = vand.u32 %v1052, 4294901760
    %2727 = vmatpush.msra.mxu0 %v2726
    %v2728 = vand.u32 %v1051, 4294901760
    %2729 = vmatpush.msra.mxu0 %v2728
    %v2730 = vand.u32 %v1050, 4294901760
    %2731 = vmatpush.msra.mxu0 %v2730
    %v2732 = vand.u32 %v1049, 4294901760
    %2733 = vmatpush.msra.mxu0 %v2732
    %v2734 = vand.u32 %v1048, 4294901760
    %2735 = vmatpush.msra.mxu0 %v2734
    %v2736 = vand.u32 %v1047, 4294901760
    %2737 = vmatpush.msra.mxu0 %v2736
    %v2738 = vand.u32 %v1046, 4294901760
    %2739 = vmatpush.msra.mxu0 %v2738
    %v2740 = vand.u32 %v1045, 4294901760
    %2741 = vmatpush.msra.mxu0 %v2740
    %v2742 = vand.u32 %v1044, 4294901760
    %2743 = vmatpush.msra.mxu0 %v2742
    %v2744 = vand.u32 %v1043, 4294901760
    %2745 = vmatpush.msra.mxu0 %v2744
    %v2746 = vand.u32 %v1042, 4294901760
    %2747 = vmatpush.msra.mxu0 %v2746
    %v2748 = vand.u32 %v1041, 4294901760
    %2749 = vmatpush.msra.mxu0 %v2748
    %v2750 = vand.u32 %v2517, 4294901760
    %v2751 = vsub.f32 %v2517, %v2750
    %v2752 = vand.u32 %v2751, 4294901760
    %2753 = vmatmul.f32.gmra.mxu0 %v2752
    %v2754 = vpop.f32.mrf.mxu0
    %v2755 = vadd.f32 %v2716, %v2754
    %2756 = vdwg.mxu0
    %v2757 = vand.u32 %v1056, 4294901760
    %v2758 = vsub.f32 %v1056, %v2757
    %v2759 = vand.u32 %v2758, 4294901760
    %2760 = vmatpush.msra.mxu0 %v2759
    %v2761 = vand.u32 %v1055, 4294901760
    %v2762 = vsub.f32 %v1055, %v2761
    %v2763 = vand.u32 %v2762, 4294901760
    %2764 = vmatpush.msra.mxu0 %v2763
    %v2765 = vand.u32 %v1054, 4294901760
    %v2766 = vsub.f32 %v1054, %v2765
    %v2767 = vand.u32 %v2766, 4294901760
    %2768 = vmatpush.msra.mxu0 %v2767
    %v2769 = vand.u32 %v1053, 4294901760
    %v2770 = vsub.f32 %v1053, %v2769
    %v2771 = vand.u32 %v2770, 4294901760
    %2772 = vmatpush.msra.mxu0 %v2771
    %v2773 = vand.u32 %v1052, 4294901760
    %v2774 = vsub.f32 %v1052, %v2773
    %v2775 = vand.u32 %v2774, 4294901760
    %2776 = vmatpush.msra.mxu0 %v2775
    %v2777 = vand.u32 %v1051, 4294901760
    %v2778 = vsub.f32 %v1051, %v2777
    %v2779 = vand.u32 %v2778, 4294901760
    %2780 = vmatpush.msra.mxu0 %v2779
    %v2781 = vand.u32 %v1050, 4294901760
    %v2782 = vsub.f32 %v1050, %v2781
    %v2783 = vand.u32 %v2782, 4294901760
    %2784 = vmatpush.msra.mxu0 %v2783
    %v2785 = vand.u32 %v1049, 4294901760
    %v2786 = vsub.f32 %v1049, %v2785
    %v2787 = vand.u32 %v2786, 4294901760
    %2788 = vmatpush.msra.mxu0 %v2787
    %v2789 = vand.u32 %v1048, 4294901760
    %v2790 = vsub.f32 %v1048, %v2789
    %v2791 = vand.u32 %v2790, 4294901760
    %2792 = vmatpush.msra.mxu0 %v2791
    %v2793 = vand.u32 %v1047, 4294901760
    %v2794 = vsub.f32 %v1047, %v2793
    %v2795 = vand.u32 %v2794, 4294901760
    %2796 = vmatpush.msra.mxu0 %v2795
    %v2797 = vand.u32 %v1046, 4294901760
    %v2798 = vsub.f32 %v1046, %v2797
    %v2799 = vand.u32 %v2798, 4294901760
    %2800 = vmatpush.msra.mxu0 %v2799
    %v2801 = vand.u32 %v1045, 4294901760
    %v2802 = vsub.f32 %v1045, %v2801
    %v2803 = vand.u32 %v2802, 4294901760
    %2804 = vmatpush.msra.mxu0 %v2803
    %v2805 = vand.u32 %v1044, 4294901760
    %v2806 = vsub.f32 %v1044, %v2805
    %v2807 = vand.u32 %v2806, 4294901760
    %2808 = vmatpush.msra.mxu0 %v2807
    %v2809 = vand.u32 %v1043, 4294901760
    %v2810 = vsub.f32 %v1043, %v2809
    %v2811 = vand.u32 %v2810, 4294901760
    %2812 = vmatpush.msra.mxu0 %v2811
    %v2813 = vand.u32 %v1042, 4294901760
    %v2814 = vsub.f32 %v1042, %v2813
    %v2815 = vand.u32 %v2814, 4294901760
    %2816 = vmatpush.msra.mxu0 %v2815
    %v2817 = vand.u32 %v1041, 4294901760
    %v2818 = vsub.f32 %v1041, %v2817
    %v2819 = vand.u32 %v2818, 4294901760
    %2820 = vmatpush.msra.mxu0 %v2819
    %v2821 = vand.u32 %v2517, 4294901760
    %2822 = vmatmul.f32.gmra.mxu0 %v2821
    %v2823 = vpop.f32.mrf.mxu0
    %v2824 = vadd.f32 %v2755, %v2823
    %2825 = vdwg.mxu0
    %v2826 = vand.u32 %v1056, 4294901760
    %2827 = vmatpush.msra.mxu0 %v2826
    %v2828 = vand.u32 %v1055, 4294901760
    %2829 = vmatpush.msra.mxu0 %v2828
    %v2830 = vand.u32 %v1054, 4294901760
    %2831 = vmatpush.msra.mxu0 %v2830
    %v2832 = vand.u32 %v1053, 4294901760
    %2833 = vmatpush.msra.mxu0 %v2832
    %v2834 = vand.u32 %v1052, 4294901760
    %2835 = vmatpush.msra.mxu0 %v2834
    %v2836 = vand.u32 %v1051, 4294901760
    %2837 = vmatpush.msra.mxu0 %v2836
    %v2838 = vand.u32 %v1050, 4294901760
    %2839 = vmatpush.msra.mxu0 %v2838
    %v2840 = vand.u32 %v1049, 4294901760
    %2841 = vmatpush.msra.mxu0 %v2840
    %v2842 = vand.u32 %v1048, 4294901760
    %2843 = vmatpush.msra.mxu0 %v2842
    %v2844 = vand.u32 %v1047, 4294901760
    %2845 = vmatpush.msra.mxu0 %v2844
    %v2846 = vand.u32 %v1046, 4294901760
    %2847 = vmatpush.msra.mxu0 %v2846
    %v2848 = vand.u32 %v1045, 4294901760
    %2849 = vmatpush.msra.mxu0 %v2848
    %v2850 = vand.u32 %v1044, 4294901760
    %2851 = vmatpush.msra.mxu0 %v2850
    %v2852 = vand.u32 %v1043, 4294901760
    %2853 = vmatpush.msra.mxu0 %v2852
    %v2854 = vand.u32 %v1042, 4294901760
    %2855 = vmatpush.msra.mxu0 %v2854
    %v2856 = vand.u32 %v1041, 4294901760
    %2857 = vmatpush.msra.mxu0 %v2856
    %v2858 = vand.u32 %v2517, 4294901760
    %2859 = vmatmul.f32.gmra.mxu0 %v2858
    %v2860 = vpop.f32.mrf.mxu0
    %v2861 = vadd.f32 %v2824, %v2860
    %2862 = vdwg.mxu0
    %2863 = vmatpush.msra.mxu0 0.0
    %2864 = vmatpush.msra.mxu0 0.0
    %2865 = vmatpush.msra.mxu0 0.0
    %2866 = vmatpush.msra.mxu0 0.0
    %v2867 = vand.u32 %v1068, 4294901760
    %2868 = vmatpush.msra.mxu0 %v2867
    %v2869 = vand.u32 %v1067, 4294901760
    %2870 = vmatpush.msra.mxu0 %v2869
    %v2871 = vand.u32 %v1066, 4294901760
    %2872 = vmatpush.msra.mxu0 %v2871
    %v2873 = vand.u32 %v1065, 4294901760
    %2874 = vmatpush.msra.mxu0 %v2873
    %v2875 = vand.u32 %v1064, 4294901760
    %2876 = vmatpush.msra.mxu0 %v2875
    %v2877 = vand.u32 %v1063, 4294901760
    %2878 = vmatpush.msra.mxu0 %v2877
    %v2879 = vand.u32 %v1062, 4294901760
    %2880 = vmatpush.msra.mxu0 %v2879
    %v2881 = vand.u32 %v1061, 4294901760
    %2882 = vmatpush.msra.mxu0 %v2881
    %v2883 = vand.u32 %v1060, 4294901760
    %2884 = vmatpush.msra.mxu0 %v2883
    %v2885 = vand.u32 %v1059, 4294901760
    %2886 = vmatpush.msra.mxu0 %v2885
    %v2887 = vand.u32 %v1058, 4294901760
    %2888 = vmatpush.msra.mxu0 %v2887
    %v2889 = vand.u32 %v1057, 4294901760
    %2890 = vmatpush.msra.mxu0 %v2889
    %v2891 = vand.u32 %v2520, 4294901760
    %v2892 = vsub.f32 %v2520, %v2891
    %v2893 = vand.u32 %v2892, 4294901760
    %v2894 = vsub.f32 %v2892, %v2893
    %v2895 = vand.u32 %v2894, 4294901760
    %2896 = vmatmul.f32.gmra.mxu0 %v2895
    %v2897 = vpop.f32.mrf.mxu0
    %v2898 = vadd.f32 %v2861, %v2897
    %2899 = vdwg.mxu0
    %2900 = vmatpush.msra.mxu0 0.0
    %2901 = vmatpush.msra.mxu0 0.0
    %2902 = vmatpush.msra.mxu0 0.0
    %2903 = vmatpush.msra.mxu0 0.0
    %v2904 = vand.u32 %v1068, 4294901760
    %v2905 = vsub.f32 %v1068, %v2904
    %v2906 = vand.u32 %v2905, 4294901760
    %v2907 = vsub.f32 %v2905, %v2906
    %v2908 = vand.u32 %v2907, 4294901760
    %2909 = vmatpush.msra.mxu0 %v2908
    %v2910 = vand.u32 %v1067, 4294901760
    %v2911 = vsub.f32 %v1067, %v2910
    %v2912 = vand.u32 %v2911, 4294901760
    %v2913 = vsub.f32 %v2911, %v2912
    %v2914 = vand.u32 %v2913, 4294901760
    %2915 = vmatpush.msra.mxu0 %v2914
    %v2916 = vand.u32 %v1066, 4294901760
    %v2917 = vsub.f32 %v1066, %v2916
    %v2918 = vand.u32 %v2917, 4294901760
    %v2919 = vsub.f32 %v2917, %v2918
    %v2920 = vand.u32 %v2919, 4294901760
    %2921 = vmatpush.msra.mxu0 %v2920
    %v2922 = vand.u32 %v1065, 4294901760
    %v2923 = vsub.f32 %v1065, %v2922
    %v2924 = vand.u32 %v2923, 4294901760
    %v2925 = vsub.f32 %v2923, %v2924
    %v2926 = vand.u32 %v2925, 4294901760
    %2927 = vmatpush.msra.mxu0 %v2926
    %v2928 = vand.u32 %v1064, 4294901760
    %v2929 = vsub.f32 %v1064, %v2928
    %v2930 = vand.u32 %v2929, 4294901760
    %v2931 = vsub.f32 %v2929, %v2930
    %v2932 = vand.u32 %v2931, 4294901760
    %2933 = vmatpush.msra.mxu0 %v2932
    %v2934 = vand.u32 %v1063, 4294901760
    %v2935 = vsub.f32 %v1063, %v2934
    %v2936 = vand.u32 %v2935, 4294901760
    %v2937 = vsub.f32 %v2935, %v2936
    %v2938 = vand.u32 %v2937, 4294901760
    %2939 = vmatpush.msra.mxu0 %v2938
    %v2940 = vand.u32 %v1062, 4294901760
    %v2941 = vsub.f32 %v1062, %v2940
    %v2942 = vand.u32 %v2941, 4294901760
    %v2943 = vsub.f32 %v2941, %v2942
    %v2944 = vand.u32 %v2943, 4294901760
    %2945 = vmatpush.msra.mxu0 %v2944
    %v2946 = vand.u32 %v1061, 4294901760
    %v2947 = vsub.f32 %v1061, %v2946
    %v2948 = vand.u32 %v2947, 4294901760
    %v2949 = vsub.f32 %v2947, %v2948
    %v2950 = vand.u32 %v2949, 4294901760
    %2951 = vmatpush.msra.mxu0 %v2950
    %v2952 = vand.u32 %v1060, 4294901760
    %v2953 = vsub.f32 %v1060, %v2952
    %v2954 = vand.u32 %v2953, 4294901760
    %v2955 = vsub.f32 %v2953, %v2954
    %v2956 = vand.u32 %v2955, 4294901760
    %2957 = vmatpush.msra.mxu0 %v2956
    %v2958 = vand.u32 %v1059, 4294901760
    %v2959 = vsub.f32 %v1059, %v2958
    %v2960 = vand.u32 %v2959, 4294901760
    %v2961 = vsub.f32 %v2959, %v2960
    %v2962 = vand.u32 %v2961, 4294901760
    %2963 = vmatpush.msra.mxu0 %v2962
    %v2964 = vand.u32 %v1058, 4294901760
    %v2965 = vsub.f32 %v1058, %v2964
    %v2966 = vand.u32 %v2965, 4294901760
    %v2967 = vsub.f32 %v2965, %v2966
    %v2968 = vand.u32 %v2967, 4294901760
    %2969 = vmatpush.msra.mxu0 %v2968
    %v2970 = vand.u32 %v1057, 4294901760
    %v2971 = vsub.f32 %v1057, %v2970
    %v2972 = vand.u32 %v2971, 4294901760
    %v2973 = vsub.f32 %v2971, %v2972
    %v2974 = vand.u32 %v2973, 4294901760
    %2975 = vmatpush.msra.mxu0 %v2974
    %v2976 = vand.u32 %v2520, 4294901760
    %2977 = vmatmul.f32.gmra.mxu0 %v2976
    %v2978 = vpop.f32.mrf.mxu0
    %v2979 = vadd.f32 %v2898, %v2978
    %2980 = vdwg.mxu0
    %2981 = vmatpush.msra.mxu0 0.0
    %2982 = vmatpush.msra.mxu0 0.0
    %2983 = vmatpush.msra.mxu0 0.0
    %2984 = vmatpush.msra.mxu0 0.0
    %v2985 = vand.u32 %v1068, 4294901760
    %v2986 = vsub.f32 %v1068, %v2985
    %2987 = vmatpush.msra.mxu0 %v2986
    %v2988 = vand.u32 %v1067, 4294901760
    %v2989 = vsub.f32 %v1067, %v2988
    %2990 = vmatpush.msra.mxu0 %v2989
    %v2991 = vand.u32 %v1066, 4294901760
    %v2992 = vsub.f32 %v1066, %v2991
    %2993 = vmatpush.msra.mxu0 %v2992
    %v2994 = vand.u32 %v1065, 4294901760
    %v2995 = vsub.f32 %v1065, %v2994
    %2996 = vmatpush.msra.mxu0 %v2995
    %v2997 = vand.u32 %v1064, 4294901760
    %v2998 = vsub.f32 %v1064, %v2997
    %2999 = vmatpush.msra.mxu0 %v2998
    %v3000 = vand.u32 %v1063, 4294901760
    %v3001 = vsub.f32 %v1063, %v3000
    %3002 = vmatpush.msra.mxu0 %v3001
    %v3003 = vand.u32 %v1062, 4294901760
    %v3004 = vsub.f32 %v1062, %v3003
    %3005 = vmatpush.msra.mxu0 %v3004
    %v3006 = vand.u32 %v1061, 4294901760
    %v3007 = vsub.f32 %v1061, %v3006
    %3008 = vmatpush.msra.mxu0 %v3007
    %v3009 = vand.u32 %v1060, 4294901760
    %v3010 = vsub.f32 %v1060, %v3009
    %3011 = vmatpush.msra.mxu0 %v3010
    %v3012 = vand.u32 %v1059, 4294901760
    %v3013 = vsub.f32 %v1059, %v3012
    %3014 = vmatpush.msra.mxu0 %v3013
    %v3015 = vand.u32 %v1058, 4294901760
    %v3016 = vsub.f32 %v1058, %v3015
    %3017 = vmatpush.msra.mxu0 %v3016
    %v3018 = vand.u32 %v1057, 4294901760
    %v3019 = vsub.f32 %v1057, %v3018
    %3020 = vmatpush.msra.mxu0 %v3019
    %v3021 = vand.u32 %v2520, 4294901760
    %v3022 = vsub.f32 %v2520, %v3021
    %3023 = vmatmul.f32.gmra.mxu0 %v3022
    %v3024 = vpop.f32.mrf.mxu0
    %v3025 = vadd.f32 %v2979, %v3024
    %3026 = vdwg.mxu0
    %3027 = vmatpush.msra.mxu0 0.0
    %3028 = vmatpush.msra.mxu0 0.0
    %3029 = vmatpush.msra.mxu0 0.0
    %3030 = vmatpush.msra.mxu0 0.0
    %v3031 = vand.u32 %v1068, 4294901760
    %3032 = vmatpush.msra.mxu0 %v3031
    %v3033 = vand.u32 %v1067, 4294901760
    %3034 = vmatpush.msra.mxu0 %v3033
    %v3035 = vand.u32 %v1066, 4294901760
    %3036 = vmatpush.msra.mxu0 %v3035
    %v3037 = vand.u32 %v1065, 4294901760
    %3038 = vmatpush.msra.mxu0 %v3037
    %v3039 = vand.u32 %v1064, 4294901760
    %3040 = vmatpush.msra.mxu0 %v3039
    %v3041 = vand.u32 %v1063, 4294901760
    %3042 = vmatpush.msra.mxu0 %v3041
    %v3043 = vand.u32 %v1062, 4294901760
    %3044 = vmatpush.msra.mxu0 %v3043
    %v3045 = vand.u32 %v1061, 4294901760
    %3046 = vmatpush.msra.mxu0 %v3045
    %v3047 = vand.u32 %v1060, 4294901760
    %3048 = vmatpush.msra.mxu0 %v3047
    %v3049 = vand.u32 %v1059, 4294901760
    %3050 = vmatpush.msra.mxu0 %v3049
    %v3051 = vand.u32 %v1058, 4294901760
    %3052 = vmatpush.msra.mxu0 %v3051
    %v3053 = vand.u32 %v1057, 4294901760
    %3054 = vmatpush.msra.mxu0 %v3053
    %v3055 = vand.u32 %v2520, 4294901760
    %v3056 = vsub.f32 %v2520, %v3055
    %v3057 = vand.u32 %v3056, 4294901760
    %3058 = vmatmul.f32.gmra.mxu0 %v3057
    %v3059 = vpop.f32.mrf.mxu0
    %v3060 = vadd.f32 %v3025, %v3059
    %3061 = vdwg.mxu0
    %3062 = vmatpush.msra.mxu0 0.0
    %3063 = vmatpush.msra.mxu0 0.0
    %3064 = vmatpush.msra.mxu0 0.0
    %3065 = vmatpush.msra.mxu0 0.0
    %v3066 = vand.u32 %v1068, 4294901760
    %v3067 = vsub.f32 %v1068, %v3066
    %v3068 = vand.u32 %v3067, 4294901760
    %3069 = vmatpush.msra.mxu0 %v3068
    %v3070 = vand.u32 %v1067, 4294901760
    %v3071 = vsub.f32 %v1067, %v3070
    %v3072 = vand.u32 %v3071, 4294901760
    %3073 = vmatpush.msra.mxu0 %v3072
    %v3074 = vand.u32 %v1066, 4294901760
    %v3075 = vsub.f32 %v1066, %v3074
    %v3076 = vand.u32 %v3075, 4294901760
    %3077 = vmatpush.msra.mxu0 %v3076
    %v3078 = vand.u32 %v1065, 4294901760
    %v3079 = vsub.f32 %v1065, %v3078
    %v3080 = vand.u32 %v3079, 4294901760
    %3081 = vmatpush.msra.mxu0 %v3080
    %v3082 = vand.u32 %v1064, 4294901760
    %v3083 = vsub.f32 %v1064, %v3082
    %v3084 = vand.u32 %v3083, 4294901760
    %3085 = vmatpush.msra.mxu0 %v3084
    %v3086 = vand.u32 %v1063, 4294901760
    %v3087 = vsub.f32 %v1063, %v3086
    %v3088 = vand.u32 %v3087, 4294901760
    %3089 = vmatpush.msra.mxu0 %v3088
    %v3090 = vand.u32 %v1062, 4294901760
    %v3091 = vsub.f32 %v1062, %v3090
    %v3092 = vand.u32 %v3091, 4294901760
    %3093 = vmatpush.msra.mxu0 %v3092
    %v3094 = vand.u32 %v1061, 4294901760
    %v3095 = vsub.f32 %v1061, %v3094
    %v3096 = vand.u32 %v3095, 4294901760
    %3097 = vmatpush.msra.mxu0 %v3096
    %v3098 = vand.u32 %v1060, 4294901760
    %v3099 = vsub.f32 %v1060, %v3098
    %v3100 = vand.u32 %v3099, 4294901760
    %3101 = vmatpush.msra.mxu0 %v3100
    %v3102 = vand.u32 %v1059, 4294901760
    %v3103 = vsub.f32 %v1059, %v3102
    %v3104 = vand.u32 %v3103, 4294901760
    %3105 = vmatpush.msra.mxu0 %v3104
    %v3106 = vand.u32 %v1058, 4294901760
    %v3107 = vsub.f32 %v1058, %v3106
    %v3108 = vand.u32 %v3107, 4294901760
    %3109 = vmatpush.msra.mxu0 %v3108
    %v3110 = vand.u32 %v1057, 4294901760
    %v3111 = vsub.f32 %v1057, %v3110
    %v3112 = vand.u32 %v3111, 4294901760
    %3113 = vmatpush.msra.mxu0 %v3112
    %v3114 = vand.u32 %v2520, 4294901760
    %3115 = vmatmul.f32.gmra.mxu0 %v3114
    %v3116 = vpop.f32.mrf.mxu0
    %v3117 = vadd.f32 %v3060, %v3116
    %3118 = vdwg.mxu0
    %3119 = vmatpush.msra.mxu0 0.0
    %3120 = vmatpush.msra.mxu0 0.0
    %3121 = vmatpush.msra.mxu0 0.0
    %3122 = vmatpush.msra.mxu0 0.0
    %v3123 = vand.u32 %v1068, 4294901760
    %3124 = vmatpush.msra.mxu0 %v3123
    %v3125 = vand.u32 %v1067, 4294901760
    %3126 = vmatpush.msra.mxu0 %v3125
    %v3127 = vand.u32 %v1066, 4294901760
    %3128 = vmatpush.msra.mxu0 %v3127
    %v3129 = vand.u32 %v1065, 4294901760
    %3130 = vmatpush.msra.mxu0 %v3129
    %v3131 = vand.u32 %v1064, 4294901760
    %3132 = vmatpush.msra.mxu0 %v3131
    %v3133 = vand.u32 %v1063, 4294901760
    %3134 = vmatpush.msra.mxu0 %v3133
    %v3135 = vand.u32 %v1062, 4294901760
    %3136 = vmatpush.msra.mxu0 %v3135
    %v3137 = vand.u32 %v1061, 4294901760
    %3138 = vmatpush.msra.mxu0 %v3137
    %v3139 = vand.u32 %v1060, 4294901760
    %3140 = vmatpush.msra.mxu0 %v3139
    %v3141 = vand.u32 %v1059, 4294901760
    %3142 = vmatpush.msra.mxu0 %v3141
    %v3143 = vand.u32 %v1058, 4294901760
    %3144 = vmatpush.msra.mxu0 %v3143
    %v3145 = vand.u32 %v1057, 4294901760
    %3146 = vmatpush.msra.mxu0 %v3145
    %v3147 = vand.u32 %v2520, 4294901760
    %3148 = vmatmul.f32.gmra.mxu0 %v3147
    %v3149 = vpop.f32.mrf.mxu0
    %v3150 = vadd.f32 %v3117, %v3149
    %3151 = vdwg.mxu0
    %v3152 = vadd.f32 %v244, %v3150
    %v3153 = vmax.f32 %v3152, 0.0
    %v3154 = vand.u32 2147483647, %v3152
    %v3155 = vsub.f32 0.0, %v3154
    %v3156 = vmul.f32 %v3155, 1.442695
    %v3157 = vpow.pop %v3156
    %v3158 = vadd.f32 %v3157, 1.0
    %v3159 = vlog2.pop %v3158
    %v3160 = vmul.f32 %v3159, 0.6931472
    %v3161 = vmul.f32 -0.5, %v3157
    %v3162 = vadd.f32 %v3161, 1.0
    %v3163 = vmul.f32 %v3162, %v3157
    %v3164 = vand.u32 2147483647, %v3157
    %vm3165 = vcmp.lt.f32.partialorder %v3164, 0.0004427343
    %v3166 = vsel %vm3165, %v3163, %v3160
    %v3167 = vadd.f32 %v3153, %v3166
    %s3168 = scalar_lea.vmem %s7, 32
    %v3169 = vld [vmem:[%s3168] sm:$0xff]
    %v3170 = vld [vmem:[%s3168 + $0x8] sm:$0xff]
    %v3171 = vld [vmem:[%s3168 + $0x10] sm:$0xff]
    %v3172 = vld [vmem:[%s3168 + $0x18] sm:$0xff]
    %v3173 = vperm.slane %v34, 3
    %v3175 = vsel %vm54, %v3167, 0
    %3177 = vmatpush.msra.mxu0 0.0
    %3178 = vmatpush.msra.mxu0 0.0
    %3179 = vmatpush.msra.mxu0 0.0
    %3180 = vmatpush.msra.mxu0 0.0
    %3181 = vmatpush.msra.mxu0 0.0
    %3182 = vmatpush.msra.mxu0 0.0
    %3183 = vmatpush.msra.mxu0 0.0
    %3184 = vmatpush.msra.mxu0 0.0
    %3185 = vmatpush.msra.mxu0 0.0
    %3186 = vmatpush.msra.mxu0 0.0
    %3187 = vmatpush.msra.mxu0 0.0
    %3188 = vmatpush.msra.mxu0 0.0
    %v3189 = vand.u32 %v3172, 4294901760
    %3190 = vmatpush.msra.mxu0 %v3189
    %v3191 = vand.u32 %v3171, 4294901760
    %3192 = vmatpush.msra.mxu0 %v3191
    %v3193 = vand.u32 %v3170, 4294901760
    %3194 = vmatpush.msra.mxu0 %v3193
    %v3195 = vand.u32 %v3169, 4294901760
    %3196 = vmatpush.msra.mxu0 %v3195
    %v3197 = vand.u32 %v3175, 4294901760
    %v3198 = vsub.f32 %v3175, %v3197
    %v3199 = vand.u32 %v3198, 4294901760
    %v3200 = vsub.f32 %v3198, %v3199
    %v3201 = vand.u32 %v3200, 4294901760
    %3202 = vmatmul.f32.gmra.mxu0 %v3201
    %v3203 = vpop.f32.mrf.mxu0
    %v3204 = vadd.f32 %v3173, %v3203
    %3205 = vdwg.mxu0
    %3206 = vmatpush.msra.mxu0 0.0
    %3207 = vmatpush.msra.mxu0 0.0
    %3208 = vmatpush.msra.mxu0 0.0
    %3209 = vmatpush.msra.mxu0 0.0
    %3210 = vmatpush.msra.mxu0 0.0
    %3211 = vmatpush.msra.mxu0 0.0
    %3212 = vmatpush.msra.mxu0 0.0
    %3213 = vmatpush.msra.mxu0 0.0
    %3214 = vmatpush.msra.mxu0 0.0
    %3215 = vmatpush.msra.mxu0 0.0
    %3216 = vmatpush.msra.mxu0 0.0
    %3217 = vmatpush.msra.mxu0 0.0
    %v3218 = vand.u32 %v3172, 4294901760
    %v3219 = vsub.f32 %v3172, %v3218
    %v3220 = vand.u32 %v3219, 4294901760
    %v3221 = vsub.f32 %v3219, %v3220
    %v3222 = vand.u32 %v3221, 4294901760
    %3223 = vmatpush.msra.mxu0 %v3222
    %v3224 = vand.u32 %v3171, 4294901760
    %v3225 = vsub.f32 %v3171, %v3224
    %v3226 = vand.u32 %v3225, 4294901760
    %v3227 = vsub.f32 %v3225, %v3226
    %v3228 = vand.u32 %v3227, 4294901760
    %3229 = vmatpush.msra.mxu0 %v3228
    %v3230 = vand.u32 %v3170, 4294901760
    %v3231 = vsub.f32 %v3170, %v3230
    %v3232 = vand.u32 %v3231, 4294901760
    %v3233 = vsub.f32 %v3231, %v3232
    %v3234 = vand.u32 %v3233, 4294901760
    %3235 = vmatpush.msra.mxu0 %v3234
    %v3236 = vand.u32 %v3169, 4294901760
    %v3237 = vsub.f32 %v3169, %v3236
    %v3238 = vand.u32 %v3237, 4294901760
    %v3239 = vsub.f32 %v3237, %v3238
    %v3240 = vand.u32 %v3239, 4294901760
    %3241 = vmatpush.msra.mxu0 %v3240
    %v3242 = vand.u32 %v3175, 4294901760
    %3243 = vmatmul.f32.gmra.mxu0 %v3242
    %v3244 = vpop.f32.mrf.mxu0
    %v3245 = vadd.f32 %v3204, %v3244
    %3246 = vdwg.mxu0
    %3247 = vmatpush.msra.mxu0 0.0
    %3248 = vmatpush.msra.mxu0 0.0
    %3249 = vmatpush.msra.mxu0 0.0
    %3250 = vmatpush.msra.mxu0 0.0
    %3251 = vmatpush.msra.mxu0 0.0
    %3252 = vmatpush.msra.mxu0 0.0
    %3253 = vmatpush.msra.mxu0 0.0
    %3254 = vmatpush.msra.mxu0 0.0
    %3255 = vmatpush.msra.mxu0 0.0
    %3256 = vmatpush.msra.mxu0 0.0
    %3257 = vmatpush.msra.mxu0 0.0
    %3258 = vmatpush.msra.mxu0 0.0
    %v3259 = vand.u32 %v3172, 4294901760
    %v3260 = vsub.f32 %v3172, %v3259
    %3261 = vmatpush.msra.mxu0 %v3260
    %v3262 = vand.u32 %v3171, 4294901760
    %v3263 = vsub.f32 %v3171, %v3262
    %3264 = vmatpush.msra.mxu0 %v3263
    %v3265 = vand.u32 %v3170, 4294901760
    %v3266 = vsub.f32 %v3170, %v3265
    %3267 = vmatpush.msra.mxu0 %v3266
    %v3268 = vand.u32 %v3169, 4294901760
    %v3269 = vsub.f32 %v3169, %v3268
    %3270 = vmatpush.msra.mxu0 %v3269
    %v3271 = vand.u32 %v3175, 4294901760
    %v3272 = vsub.f32 %v3175, %v3271
    %3273 = vmatmul.f32.gmra.mxu0 %v3272
    %v3274 = vpop.f32.mrf.mxu0
    %v3275 = vadd.f32 %v3245, %v3274
    %3276 = vdwg.mxu0
    %3277 = vmatpush.msra.mxu0 0.0
    %3278 = vmatpush.msra.mxu0 0.0
    %3279 = vmatpush.msra.mxu0 0.0
    %3280 = vmatpush.msra.mxu0 0.0
    %3281 = vmatpush.msra.mxu0 0.0
    %3282 = vmatpush.msra.mxu0 0.0
    %3283 = vmatpush.msra.mxu0 0.0
    %3284 = vmatpush.msra.mxu0 0.0
    %3285 = vmatpush.msra.mxu0 0.0
    %3286 = vmatpush.msra.mxu0 0.0
    %3287 = vmatpush.msra.mxu0 0.0
    %3288 = vmatpush.msra.mxu0 0.0
    %v3289 = vand.u32 %v3172, 4294901760
    %3290 = vmatpush.msra.mxu0 %v3289
    %v3291 = vand.u32 %v3171, 4294901760
    %3292 = vmatpush.msra.mxu0 %v3291
    %v3293 = vand.u32 %v3170, 4294901760
    %3294 = vmatpush.msra.mxu0 %v3293
    %v3295 = vand.u32 %v3169, 4294901760
    %3296 = vmatpush.msra.mxu0 %v3295
    %v3297 = vand.u32 %v3175, 4294901760
    %v3298 = vsub.f32 %v3175, %v3297
    %v3299 = vand.u32 %v3298, 4294901760
    %3300 = vmatmul.f32.gmra.mxu0 %v3299
    %v3301 = vpop.f32.mrf.mxu0
    %v3302 = vadd.f32 %v3275, %v3301
    %3303 = vdwg.mxu0
    %3304 = vmatpush.msra.mxu0 0.0
    %3305 = vmatpush.msra.mxu0 0.0
    %3306 = vmatpush.msra.mxu0 0.0
    %3307 = vmatpush.msra.mxu0 0.0
    %3308 = vmatpush.msra.mxu0 0.0
    %3309 = vmatpush.msra.mxu0 0.0
    %3310 = vmatpush.msra.mxu0 0.0
    %3311 = vmatpush.msra.mxu0 0.0
    %3312 = vmatpush.msra.mxu0 0.0
    %3313 = vmatpush.msra.mxu0 0.0
    %3314 = vmatpush.msra.mxu0 0.0
    %3315 = vmatpush.msra.mxu0 0.0
    %v3316 = vand.u32 %v3172, 4294901760
    %v3317 = vsub.f32 %v3172, %v3316
    %v3318 = vand.u32 %v3317, 4294901760
    %3319 = vmatpush.msra.mxu0 %v3318
    %v3320 = vand.u32 %v3171, 4294901760
    %v3321 = vsub.f32 %v3171, %v3320
    %v3322 = vand.u32 %v3321, 4294901760
    %3323 = vmatpush.msra.mxu0 %v3322
    %v3324 = vand.u32 %v3170, 4294901760
    %v3325 = vsub.f32 %v3170, %v3324
    %v3326 = vand.u32 %v3325, 4294901760
    %3327 = vmatpush.msra.mxu0 %v3326
    %v3328 = vand.u32 %v3169, 4294901760
    %v3329 = vsub.f32 %v3169, %v3328
    %v3330 = vand.u32 %v3329, 4294901760
    %3331 = vmatpush.msra.mxu0 %v3330
    %v3332 = vand.u32 %v3175, 4294901760
    %3333 = vmatmul.f32.gmra.mxu0 %v3332
    %v3334 = vpop.f32.mrf.mxu0
    %v3335 = vadd.f32 %v3302, %v3334
    %3336 = vdwg.mxu0
    %3337 = vmatpush.msra.mxu0 0.0
    %3338 = vmatpush.msra.mxu0 0.0
    %3339 = vmatpush.msra.mxu0 0.0
    %3340 = vmatpush.msra.mxu0 0.0
    %3341 = vmatpush.msra.mxu0 0.0
    %3342 = vmatpush.msra.mxu0 0.0
    %3343 = vmatpush.msra.mxu0 0.0
    %3344 = vmatpush.msra.mxu0 0.0
    %3345 = vmatpush.msra.mxu0 0.0
    %3346 = vmatpush.msra.mxu0 0.0
    %3347 = vmatpush.msra.mxu0 0.0
    %3348 = vmatpush.msra.mxu0 0.0
    %v3349 = vand.u32 %v3172, 4294901760
    %3350 = vmatpush.msra.mxu0 %v3349
    %v3351 = vand.u32 %v3171, 4294901760
    %3352 = vmatpush.msra.mxu0 %v3351
    %v3353 = vand.u32 %v3170, 4294901760
    %3354 = vmatpush.msra.mxu0 %v3353
    %v3355 = vand.u32 %v3169, 4294901760
    %3356 = vmatpush.msra.mxu0 %v3355
    %v3357 = vand.u32 %v3175, 4294901760
    %3358 = vmatmul.f32.gmra.mxu0 %v3357
    %v3359 = vpop.f32.mrf.mxu0
    %v3360 = vadd.f32 %v3335, %v3359
    %3361 = vdwg.mxu0
    %s3362 = scalar_lea.vmem %s7, 64
    %v3363 = vld [vmem:[%s3362] sm:$0xff]
    %v3364 = vld [vmem:[%s3362 + $0x8] sm:$0xff]
    %v3365 = vld [vmem:[%s3362 + $0x10] sm:$0xff]
    %v3366 = vld [vmem:[%s3362 + $0x18] sm:$0xff]
    %v3367 = vperm.slane %v34, 4
    %v3369 = vsel %vm54, %v3360, 0
    %3371 = vmatpush.msra.mxu0 0.0
    %3372 = vmatpush.msra.mxu0 0.0
    %3373 = vmatpush.msra.mxu0 0.0
    %3374 = vmatpush.msra.mxu0 0.0
    %3375 = vmatpush.msra.mxu0 0.0
    %3376 = vmatpush.msra.mxu0 0.0
    %3377 = vmatpush.msra.mxu0 0.0
    %3378 = vmatpush.msra.mxu0 0.0
    %3379 = vmatpush.msra.mxu0 0.0
    %3380 = vmatpush.msra.mxu0 0.0
    %3381 = vmatpush.msra.mxu0 0.0
    %3382 = vmatpush.msra.mxu0 0.0
    %v3383 = vand.u32 %v3366, 4294901760
    %3384 = vmatpush.msra.mxu0 %v3383
    %v3385 = vand.u32 %v3365, 4294901760
    %3386 = vmatpush.msra.mxu0 %v3385
    %v3387 = vand.u32 %v3364, 4294901760
    %3388 = vmatpush.msra.mxu0 %v3387
    %v3389 = vand.u32 %v3363, 4294901760
    %3390 = vmatpush.msra.mxu0 %v3389
    %v3391 = vand.u32 %v3369, 4294901760
    %v3392 = vsub.f32 %v3369, %v3391
    %v3393 = vand.u32 %v3392, 4294901760
    %v3394 = vsub.f32 %v3392, %v3393
    %v3395 = vand.u32 %v3394, 4294901760
    %3396 = vmatmul.f32.gmra.mxu0 %v3395
    %v3397 = vpop.f32.mrf.mxu0
    %v3398 = vadd.f32 %v3367, %v3397
    %3399 = vdwg.mxu0
    %3400 = vmatpush.msra.mxu0 0.0
    %3401 = vmatpush.msra.mxu0 0.0
    %3402 = vmatpush.msra.mxu0 0.0
    %3403 = vmatpush.msra.mxu0 0.0
    %3404 = vmatpush.msra.mxu0 0.0
    %3405 = vmatpush.msra.mxu0 0.0
    %3406 = vmatpush.msra.mxu0 0.0
    %3407 = vmatpush.msra.mxu0 0.0
    %3408 = vmatpush.msra.mxu0 0.0
    %3409 = vmatpush.msra.mxu0 0.0
    %3410 = vmatpush.msra.mxu0 0.0
    %3411 = vmatpush.msra.mxu0 0.0
    %v3412 = vand.u32 %v3366, 4294901760
    %v3413 = vsub.f32 %v3366, %v3412
    %v3414 = vand.u32 %v3413, 4294901760
    %v3415 = vsub.f32 %v3413, %v3414
    %v3416 = vand.u32 %v3415, 4294901760
    %3417 = vmatpush.msra.mxu0 %v3416
    %v3418 = vand.u32 %v3365, 4294901760
    %v3419 = vsub.f32 %v3365, %v3418
    %v3420 = vand.u32 %v3419, 4294901760
    %v3421 = vsub.f32 %v3419, %v3420
    %v3422 = vand.u32 %v3421, 4294901760
    %3423 = vmatpush.msra.mxu0 %v3422
    %v3424 = vand.u32 %v3364, 4294901760
    %v3425 = vsub.f32 %v3364, %v3424
    %v3426 = vand.u32 %v3425, 4294901760
    %v3427 = vsub.f32 %v3425, %v3426
    %v3428 = vand.u32 %v3427, 4294901760
    %3429 = vmatpush.msra.mxu0 %v3428
    %v3430 = vand.u32 %v3363, 4294901760
    %v3431 = vsub.f32 %v3363, %v3430
    %v3432 = vand.u32 %v3431, 4294901760
    %v3433 = vsub.f32 %v3431, %v3432
    %v3434 = vand.u32 %v3433, 4294901760
    %3435 = vmatpush.msra.mxu0 %v3434
    %v3436 = vand.u32 %v3369, 4294901760
    %3437 = vmatmul.f32.gmra.mxu0 %v3436
    %v3438 = vpop.f32.mrf.mxu0
    %v3439 = vadd.f32 %v3398, %v3438
    %3440 = vdwg.mxu0
    %3441 = vmatpush.msra.mxu0 0.0
    %3442 = vmatpush.msra.mxu0 0.0
    %3443 = vmatpush.msra.mxu0 0.0
    %3444 = vmatpush.msra.mxu0 0.0
    %3445 = vmatpush.msra.mxu0 0.0
    %3446 = vmatpush.msra.mxu0 0.0
    %3447 = vmatpush.msra.mxu0 0.0
    %3448 = vmatpush.msra.mxu0 0.0
    %3449 = vmatpush.msra.mxu0 0.0
    %3450 = vmatpush.msra.mxu0 0.0
    %3451 = vmatpush.msra.mxu0 0.0
    %3452 = vmatpush.msra.mxu0 0.0
    %v3453 = vand.u32 %v3366, 4294901760
    %v3454 = vsub.f32 %v3366, %v3453
    %3455 = vmatpush.msra.mxu0 %v3454
    %v3456 = vand.u32 %v3365, 4294901760
    %v3457 = vsub.f32 %v3365, %v3456
    %3458 = vmatpush.msra.mxu0 %v3457
    %v3459 = vand.u32 %v3364, 4294901760
    %v3460 = vsub.f32 %v3364, %v3459
    %3461 = vmatpush.msra.mxu0 %v3460
    %v3462 = vand.u32 %v3363, 4294901760
    %v3463 = vsub.f32 %v3363, %v3462
    %3464 = vmatpush.msra.mxu0 %v3463
    %v3465 = vand.u32 %v3369, 4294901760
    %v3466 = vsub.f32 %v3369, %v3465
    %3467 = vmatmul.f32.gmra.mxu0 %v3466
    %v3468 = vpop.f32.mrf.mxu0
    %v3469 = vadd.f32 %v3439, %v3468
    %3470 = vdwg.mxu0
    %3471 = vmatpush.msra.mxu0 0.0
    %3472 = vmatpush.msra.mxu0 0.0
    %3473 = vmatpush.msra.mxu0 0.0
    %3474 = vmatpush.msra.mxu0 0.0
    %3475 = vmatpush.msra.mxu0 0.0
    %3476 = vmatpush.msra.mxu0 0.0
    %3477 = vmatpush.msra.mxu0 0.0
    %3478 = vmatpush.msra.mxu0 0.0
    %3479 = vmatpush.msra.mxu0 0.0
    %3480 = vmatpush.msra.mxu0 0.0
    %3481 = vmatpush.msra.mxu0 0.0
    %3482 = vmatpush.msra.mxu0 0.0
    %v3483 = vand.u32 %v3366, 4294901760
    %3484 = vmatpush.msra.mxu0 %v3483
    %v3485 = vand.u32 %v3365, 4294901760
    %3486 = vmatpush.msra.mxu0 %v3485
    %v3487 = vand.u32 %v3364, 4294901760
    %3488 = vmatpush.msra.mxu0 %v3487
    %v3489 = vand.u32 %v3363, 4294901760
    %3490 = vmatpush.msra.mxu0 %v3489
    %v3491 = vand.u32 %v3369, 4294901760
    %v3492 = vsub.f32 %v3369, %v3491
    %v3493 = vand.u32 %v3492, 4294901760
    %3494 = vmatmul.f32.gmra.mxu0 %v3493
    %v3495 = vpop.f32.mrf.mxu0
    %v3496 = vadd.f32 %v3469, %v3495
    %3497 = vdwg.mxu0
    %3498 = vmatpush.msra.mxu0 0.0
    %3499 = vmatpush.msra.mxu0 0.0
    %3500 = vmatpush.msra.mxu0 0.0
    %3501 = vmatpush.msra.mxu0 0.0
    %3502 = vmatpush.msra.mxu0 0.0
    %3503 = vmatpush.msra.mxu0 0.0
    %3504 = vmatpush.msra.mxu0 0.0
    %3505 = vmatpush.msra.mxu0 0.0
    %3506 = vmatpush.msra.mxu0 0.0
    %3507 = vmatpush.msra.mxu0 0.0
    %3508 = vmatpush.msra.mxu0 0.0
    %3509 = vmatpush.msra.mxu0 0.0
    %v3510 = vand.u32 %v3366, 4294901760
    %v3511 = vsub.f32 %v3366, %v3510
    %v3512 = vand.u32 %v3511, 4294901760
    %3513 = vmatpush.msra.mxu0 %v3512
    %v3514 = vand.u32 %v3365, 4294901760
    %v3515 = vsub.f32 %v3365, %v3514
    %v3516 = vand.u32 %v3515, 4294901760
    %3517 = vmatpush.msra.mxu0 %v3516
    %v3518 = vand.u32 %v3364, 4294901760
    %v3519 = vsub.f32 %v3364, %v3518
    %v3520 = vand.u32 %v3519, 4294901760
    %3521 = vmatpush.msra.mxu0 %v3520
    %v3522 = vand.u32 %v3363, 4294901760
    %v3523 = vsub.f32 %v3363, %v3522
    %v3524 = vand.u32 %v3523, 4294901760
    %3525 = vmatpush.msra.mxu0 %v3524
    %v3526 = vand.u32 %v3369, 4294901760
    %3527 = vmatmul.f32.gmra.mxu0 %v3526
    %v3528 = vpop.f32.mrf.mxu0
    %v3529 = vadd.f32 %v3496, %v3528
    %3530 = vdwg.mxu0
    %3531 = vmatpush.msra.mxu0 0.0
    %3532 = vmatpush.msra.mxu0 0.0
    %3533 = vmatpush.msra.mxu0 0.0
    %3534 = vmatpush.msra.mxu0 0.0
    %3535 = vmatpush.msra.mxu0 0.0
    %3536 = vmatpush.msra.mxu0 0.0
    %3537 = vmatpush.msra.mxu0 0.0
    %3538 = vmatpush.msra.mxu0 0.0
    %3539 = vmatpush.msra.mxu0 0.0
    %3540 = vmatpush.msra.mxu0 0.0
    %3541 = vmatpush.msra.mxu0 0.0
    %3542 = vmatpush.msra.mxu0 0.0
    %v3543 = vand.u32 %v3366, 4294901760
    %3544 = vmatpush.msra.mxu0 %v3543
    %v3545 = vand.u32 %v3365, 4294901760
    %3546 = vmatpush.msra.mxu0 %v3545
    %v3547 = vand.u32 %v3364, 4294901760
    %3548 = vmatpush.msra.mxu0 %v3547
    %v3549 = vand.u32 %v3363, 4294901760
    %3550 = vmatpush.msra.mxu0 %v3549
    %v3551 = vand.u32 %v3369, 4294901760
    %3552 = vmatmul.f32.gmra.mxu0 %v3551
    %v3553 = vpop.f32.mrf.mxu0
    %v3554 = vadd.f32 %v3529, %v3553
    %3555 = vdwg.mxu0
    %v3556 = vadd.f32 %v3152, %v3554
    %v3557 = vmax.f32 %v3556, 0.0
    %v3558 = vand.u32 2147483647, %v3556
    %v3559 = vsub.f32 0.0, %v3558
    %v3560 = vmul.f32 %v3559, 1.442695
    %v3561 = vpow.pop %v3560
    %v3562 = vadd.f32 %v3561, 1.0
    %v3563 = vlog2.pop %v3562
    %v3564 = vmul.f32 %v3563, 0.6931472
    %v3565 = vmul.f32 -0.5, %v3561
    %v3566 = vadd.f32 %v3565, 1.0
    %v3567 = vmul.f32 %v3566, %v3561
    %v3568 = vand.u32 2147483647, %v3561
    %vm3569 = vcmp.lt.f32.partialorder %v3568, 0.0004427343
    %v3570 = vsel %vm3569, %v3567, %v3564
    %v3571 = vadd.f32 %v3557, %v3570
    %s3572 = scalar_lea.vmem %s7, 96
    %v3573 = vld [vmem:[%s3572] sm:$0xff]
    %v3574 = vld [vmem:[%s3572 + $0x8] sm:$0xff]
    %v3575 = vld [vmem:[%s3572 + $0x10] sm:$0xff]
    %v3576 = vld [vmem:[%s3572 + $0x18] sm:$0xff]
    %v3577 = vperm.slane %v34, 5
    %v3579 = vsel %vm54, %v3571, 0
    %3581 = vmatpush.msra.mxu0 0.0
    %3582 = vmatpush.msra.mxu0 0.0
    %3583 = vmatpush.msra.mxu0 0.0
    %3584 = vmatpush.msra.mxu0 0.0
    %3585 = vmatpush.msra.mxu0 0.0
    %3586 = vmatpush.msra.mxu0 0.0
    %3587 = vmatpush.msra.mxu0 0.0
    %3588 = vmatpush.msra.mxu0 0.0
    %3589 = vmatpush.msra.mxu0 0.0
    %3590 = vmatpush.msra.mxu0 0.0
    %3591 = vmatpush.msra.mxu0 0.0
    %3592 = vmatpush.msra.mxu0 0.0
    %v3593 = vand.u32 %v3576, 4294901760
    %3594 = vmatpush.msra.mxu0 %v3593
    %v3595 = vand.u32 %v3575, 4294901760
    %3596 = vmatpush.msra.mxu0 %v3595
    %v3597 = vand.u32 %v3574, 4294901760
    %3598 = vmatpush.msra.mxu0 %v3597
    %v3599 = vand.u32 %v3573, 4294901760
    %3600 = vmatpush.msra.mxu0 %v3599
    %v3601 = vand.u32 %v3579, 4294901760
    %v3602 = vsub.f32 %v3579, %v3601
    %v3603 = vand.u32 %v3602, 4294901760
    %v3604 = vsub.f32 %v3602, %v3603
    %v3605 = vand.u32 %v3604, 4294901760
    %3606 = vmatmul.f32.gmra.mxu0 %v3605
    %v3607 = vpop.f32.mrf.mxu0
    %v3608 = vadd.f32 %v3577, %v3607
    %3609 = vdwg.mxu0
    %3610 = vmatpush.msra.mxu0 0.0
    %3611 = vmatpush.msra.mxu0 0.0
    %3612 = vmatpush.msra.mxu0 0.0
    %3613 = vmatpush.msra.mxu0 0.0
    %3614 = vmatpush.msra.mxu0 0.0
    %3615 = vmatpush.msra.mxu0 0.0
    %3616 = vmatpush.msra.mxu0 0.0
    %3617 = vmatpush.msra.mxu0 0.0
    %3618 = vmatpush.msra.mxu0 0.0
    %3619 = vmatpush.msra.mxu0 0.0
    %3620 = vmatpush.msra.mxu0 0.0
    %3621 = vmatpush.msra.mxu0 0.0
    %v3622 = vand.u32 %v3576, 4294901760
    %v3623 = vsub.f32 %v3576, %v3622
    %v3624 = vand.u32 %v3623, 4294901760
    %v3625 = vsub.f32 %v3623, %v3624
    %v3626 = vand.u32 %v3625, 4294901760
    %3627 = vmatpush.msra.mxu0 %v3626
    %v3628 = vand.u32 %v3575, 4294901760
    %v3629 = vsub.f32 %v3575, %v3628
    %v3630 = vand.u32 %v3629, 4294901760
    %v3631 = vsub.f32 %v3629, %v3630
    %v3632 = vand.u32 %v3631, 4294901760
    %3633 = vmatpush.msra.mxu0 %v3632
    %v3634 = vand.u32 %v3574, 4294901760
    %v3635 = vsub.f32 %v3574, %v3634
    %v3636 = vand.u32 %v3635, 4294901760
    %v3637 = vsub.f32 %v3635, %v3636
    %v3638 = vand.u32 %v3637, 4294901760
    %3639 = vmatpush.msra.mxu0 %v3638
    %v3640 = vand.u32 %v3573, 4294901760
    %v3641 = vsub.f32 %v3573, %v3640
    %v3642 = vand.u32 %v3641, 4294901760
    %v3643 = vsub.f32 %v3641, %v3642
    %v3644 = vand.u32 %v3643, 4294901760
    %3645 = vmatpush.msra.mxu0 %v3644
    %v3646 = vand.u32 %v3579, 4294901760
    %3647 = vmatmul.f32.gmra.mxu0 %v3646
    %v3648 = vpop.f32.mrf.mxu0
    %v3649 = vadd.f32 %v3608, %v3648
    %3650 = vdwg.mxu0
    %3651 = vmatpush.msra.mxu0 0.0
    %3652 = vmatpush.msra.mxu0 0.0
    %3653 = vmatpush.msra.mxu0 0.0
    %3654 = vmatpush.msra.mxu0 0.0
    %3655 = vmatpush.msra.mxu0 0.0
    %3656 = vmatpush.msra.mxu0 0.0
    %3657 = vmatpush.msra.mxu0 0.0
    %3658 = vmatpush.msra.mxu0 0.0
    %3659 = vmatpush.msra.mxu0 0.0
    %3660 = vmatpush.msra.mxu0 0.0
    %3661 = vmatpush.msra.mxu0 0.0
    %3662 = vmatpush.msra.mxu0 0.0
    %v3663 = vand.u32 %v3576, 4294901760
    %v3664 = vsub.f32 %v3576, %v3663
    %3665 = vmatpush.msra.mxu0 %v3664
    %v3666 = vand.u32 %v3575, 4294901760
    %v3667 = vsub.f32 %v3575, %v3666
    %3668 = vmatpush.msra.mxu0 %v3667
    %v3669 = vand.u32 %v3574, 4294901760
    %v3670 = vsub.f32 %v3574, %v3669
    %3671 = vmatpush.msra.mxu0 %v3670
    %v3672 = vand.u32 %v3573, 4294901760
    %v3673 = vsub.f32 %v3573, %v3672
    %3674 = vmatpush.msra.mxu0 %v3673
    %v3675 = vand.u32 %v3579, 4294901760
    %v3676 = vsub.f32 %v3579, %v3675
    %3677 = vmatmul.f32.gmra.mxu0 %v3676
    %v3678 = vpop.f32.mrf.mxu0
    %v3679 = vadd.f32 %v3649, %v3678
    %3680 = vdwg.mxu0
    %3681 = vmatpush.msra.mxu0 0.0
    %3682 = vmatpush.msra.mxu0 0.0
    %3683 = vmatpush.msra.mxu0 0.0
    %3684 = vmatpush.msra.mxu0 0.0
    %3685 = vmatpush.msra.mxu0 0.0
    %3686 = vmatpush.msra.mxu0 0.0
    %3687 = vmatpush.msra.mxu0 0.0
    %3688 = vmatpush.msra.mxu0 0.0
    %3689 = vmatpush.msra.mxu0 0.0
    %3690 = vmatpush.msra.mxu0 0.0
    %3691 = vmatpush.msra.mxu0 0.0
    %3692 = vmatpush.msra.mxu0 0.0
    %v3693 = vand.u32 %v3576, 4294901760
    %3694 = vmatpush.msra.mxu0 %v3693
    %v3695 = vand.u32 %v3575, 4294901760
    %3696 = vmatpush.msra.mxu0 %v3695
    %v3697 = vand.u32 %v3574, 4294901760
    %3698 = vmatpush.msra.mxu0 %v3697
    %v3699 = vand.u32 %v3573, 4294901760
    %3700 = vmatpush.msra.mxu0 %v3699
    %v3701 = vand.u32 %v3579, 4294901760
    %v3702 = vsub.f32 %v3579, %v3701
    %v3703 = vand.u32 %v3702, 4294901760
    %3704 = vmatmul.f32.gmra.mxu0 %v3703
    %v3705 = vpop.f32.mrf.mxu0
    %v3706 = vadd.f32 %v3679, %v3705
    %3707 = vdwg.mxu0
    %3708 = vmatpush.msra.mxu0 0.0
    %3709 = vmatpush.msra.mxu0 0.0
    %3710 = vmatpush.msra.mxu0 0.0
    %3711 = vmatpush.msra.mxu0 0.0
    %3712 = vmatpush.msra.mxu0 0.0
    %3713 = vmatpush.msra.mxu0 0.0
    %3714 = vmatpush.msra.mxu0 0.0
    %3715 = vmatpush.msra.mxu0 0.0
    %3716 = vmatpush.msra.mxu0 0.0
    %3717 = vmatpush.msra.mxu0 0.0
    %3718 = vmatpush.msra.mxu0 0.0
    %3719 = vmatpush.msra.mxu0 0.0
    %v3720 = vand.u32 %v3576, 4294901760
    %v3721 = vsub.f32 %v3576, %v3720
    %v3722 = vand.u32 %v3721, 4294901760
    %3723 = vmatpush.msra.mxu0 %v3722
    %v3724 = vand.u32 %v3575, 4294901760
    %v3725 = vsub.f32 %v3575, %v3724
    %v3726 = vand.u32 %v3725, 4294901760
    %3727 = vmatpush.msra.mxu0 %v3726
    %v3728 = vand.u32 %v3574, 4294901760
    %v3729 = vsub.f32 %v3574, %v3728
    %v3730 = vand.u32 %v3729, 4294901760
    %3731 = vmatpush.msra.mxu0 %v3730
    %v3732 = vand.u32 %v3573, 4294901760
    %v3733 = vsub.f32 %v3573, %v3732
    %v3734 = vand.u32 %v3733, 4294901760
    %3735 = vmatpush.msra.mxu0 %v3734
    %v3736 = vand.u32 %v3579, 4294901760
    %3737 = vmatmul.f32.gmra.mxu0 %v3736
    %v3738 = vpop.f32.mrf.mxu0
    %v3739 = vadd.f32 %v3706, %v3738
    %3740 = vdwg.mxu0
    %3741 = vmatpush.msra.mxu0 0.0
    %3742 = vmatpush.msra.mxu0 0.0
    %3743 = vmatpush.msra.mxu0 0.0
    %3744 = vmatpush.msra.mxu0 0.0
    %3745 = vmatpush.msra.mxu0 0.0
    %3746 = vmatpush.msra.mxu0 0.0
    %3747 = vmatpush.msra.mxu0 0.0
    %3748 = vmatpush.msra.mxu0 0.0
    %3749 = vmatpush.msra.mxu0 0.0
    %3750 = vmatpush.msra.mxu0 0.0
    %3751 = vmatpush.msra.mxu0 0.0
    %3752 = vmatpush.msra.mxu0 0.0
    %v3753 = vand.u32 %v3576, 4294901760
    %3754 = vmatpush.msra.mxu0 %v3753
    %v3755 = vand.u32 %v3575, 4294901760
    %3756 = vmatpush.msra.mxu0 %v3755
    %v3757 = vand.u32 %v3574, 4294901760
    %3758 = vmatpush.msra.mxu0 %v3757
    %v3759 = vand.u32 %v3573, 4294901760
    %3760 = vmatpush.msra.mxu0 %v3759
    %v3761 = vand.u32 %v3579, 4294901760
    %3762 = vmatmul.f32.gmra.mxu0 %v3761
    %v3763 = vpop.f32.mrf.mxu0
    %v3764 = vadd.f32 %v3739, %v3763
    %3765 = vdwg.mxu0
    %s3766 = scalar_lea.vmem %s7, 128
    %v3767 = vld [vmem:[%s3766] sm:$0xff]
    %v3768 = vld [vmem:[%s3766 + $0x8] sm:$0xff]
    %v3769 = vld [vmem:[%s3766 + $0x10] sm:$0xff]
    %v3770 = vld [vmem:[%s3766 + $0x18] sm:$0xff]
    %v3771 = vperm.slane %v34, 6
    %v3773 = vsel %vm54, %v3764, 0
    %3775 = vmatpush.msra.mxu0 0.0
    %3776 = vmatpush.msra.mxu0 0.0
    %3777 = vmatpush.msra.mxu0 0.0
    %3778 = vmatpush.msra.mxu0 0.0
    %3779 = vmatpush.msra.mxu0 0.0
    %3780 = vmatpush.msra.mxu0 0.0
    %3781 = vmatpush.msra.mxu0 0.0
    %3782 = vmatpush.msra.mxu0 0.0
    %3783 = vmatpush.msra.mxu0 0.0
    %3784 = vmatpush.msra.mxu0 0.0
    %3785 = vmatpush.msra.mxu0 0.0
    %3786 = vmatpush.msra.mxu0 0.0
    %v3787 = vand.u32 %v3770, 4294901760
    %3788 = vmatpush.msra.mxu0 %v3787
    %v3789 = vand.u32 %v3769, 4294901760
    %3790 = vmatpush.msra.mxu0 %v3789
    %v3791 = vand.u32 %v3768, 4294901760
    %3792 = vmatpush.msra.mxu0 %v3791
    %v3793 = vand.u32 %v3767, 4294901760
    %3794 = vmatpush.msra.mxu0 %v3793
    %v3795 = vand.u32 %v3773, 4294901760
    %v3796 = vsub.f32 %v3773, %v3795
    %v3797 = vand.u32 %v3796, 4294901760
    %v3798 = vsub.f32 %v3796, %v3797
    %v3799 = vand.u32 %v3798, 4294901760
    %3800 = vmatmul.f32.gmra.mxu0 %v3799
    %v3801 = vpop.f32.mrf.mxu0
    %v3802 = vadd.f32 %v3771, %v3801
    %3803 = vdwg.mxu0
    %3804 = vmatpush.msra.mxu0 0.0
    %3805 = vmatpush.msra.mxu0 0.0
    %3806 = vmatpush.msra.mxu0 0.0
    %3807 = vmatpush.msra.mxu0 0.0
    %3808 = vmatpush.msra.mxu0 0.0
    %3809 = vmatpush.msra.mxu0 0.0
    %3810 = vmatpush.msra.mxu0 0.0
    %3811 = vmatpush.msra.mxu0 0.0
    %3812 = vmatpush.msra.mxu0 0.0
    %3813 = vmatpush.msra.mxu0 0.0
    %3814 = vmatpush.msra.mxu0 0.0
    %3815 = vmatpush.msra.mxu0 0.0
    %v3816 = vand.u32 %v3770, 4294901760
    %v3817 = vsub.f32 %v3770, %v3816
    %v3818 = vand.u32 %v3817, 4294901760
    %v3819 = vsub.f32 %v3817, %v3818
    %v3820 = vand.u32 %v3819, 4294901760
    %3821 = vmatpush.msra.mxu0 %v3820
    %v3822 = vand.u32 %v3769, 4294901760
    %v3823 = vsub.f32 %v3769, %v3822
    %v3824 = vand.u32 %v3823, 4294901760
    %v3825 = vsub.f32 %v3823, %v3824
    %v3826 = vand.u32 %v3825, 4294901760
    %3827 = vmatpush.msra.mxu0 %v3826
    %v3828 = vand.u32 %v3768, 4294901760
    %v3829 = vsub.f32 %v3768, %v3828
    %v3830 = vand.u32 %v3829, 4294901760
    %v3831 = vsub.f32 %v3829, %v3830
    %v3832 = vand.u32 %v3831, 4294901760
    %3833 = vmatpush.msra.mxu0 %v3832
    %v3834 = vand.u32 %v3767, 4294901760
    %v3835 = vsub.f32 %v3767, %v3834
    %v3836 = vand.u32 %v3835, 4294901760
    %v3837 = vsub.f32 %v3835, %v3836
    %v3838 = vand.u32 %v3837, 4294901760
    %3839 = vmatpush.msra.mxu0 %v3838
    %v3840 = vand.u32 %v3773, 4294901760
    %3841 = vmatmul.f32.gmra.mxu0 %v3840
    %v3842 = vpop.f32.mrf.mxu0
    %v3843 = vadd.f32 %v3802, %v3842
    %3844 = vdwg.mxu0
    %3845 = vmatpush.msra.mxu0 0.0
    %3846 = vmatpush.msra.mxu0 0.0
    %3847 = vmatpush.msra.mxu0 0.0
    %3848 = vmatpush.msra.mxu0 0.0
    %3849 = vmatpush.msra.mxu0 0.0
    %3850 = vmatpush.msra.mxu0 0.0
    %3851 = vmatpush.msra.mxu0 0.0
    %3852 = vmatpush.msra.mxu0 0.0
    %3853 = vmatpush.msra.mxu0 0.0
    %3854 = vmatpush.msra.mxu0 0.0
    %3855 = vmatpush.msra.mxu0 0.0
    %3856 = vmatpush.msra.mxu0 0.0
    %v3857 = vand.u32 %v3770, 4294901760
    %v3858 = vsub.f32 %v3770, %v3857
    %3859 = vmatpush.msra.mxu0 %v3858
    %v3860 = vand.u32 %v3769, 4294901760
    %v3861 = vsub.f32 %v3769, %v3860
    %3862 = vmatpush.msra.mxu0 %v3861
    %v3863 = vand.u32 %v3768, 4294901760
    %v3864 = vsub.f32 %v3768, %v3863
    %3865 = vmatpush.msra.mxu0 %v3864
    %v3866 = vand.u32 %v3767, 4294901760
    %v3867 = vsub.f32 %v3767, %v3866
    %3868 = vmatpush.msra.mxu0 %v3867
    %v3869 = vand.u32 %v3773, 4294901760
    %v3870 = vsub.f32 %v3773, %v3869
    %3871 = vmatmul.f32.gmra.mxu0 %v3870
    %v3872 = vpop.f32.mrf.mxu0
    %v3873 = vadd.f32 %v3843, %v3872
    %3874 = vdwg.mxu0
    %3875 = vmatpush.msra.mxu0 0.0
    %3876 = vmatpush.msra.mxu0 0.0
    %3877 = vmatpush.msra.mxu0 0.0
    %3878 = vmatpush.msra.mxu0 0.0
    %3879 = vmatpush.msra.mxu0 0.0
    %3880 = vmatpush.msra.mxu0 0.0
    %3881 = vmatpush.msra.mxu0 0.0
    %3882 = vmatpush.msra.mxu0 0.0
    %3883 = vmatpush.msra.mxu0 0.0
    %3884 = vmatpush.msra.mxu0 0.0
    %3885 = vmatpush.msra.mxu0 0.0
    %3886 = vmatpush.msra.mxu0 0.0
    %v3887 = vand.u32 %v3770, 4294901760
    %3888 = vmatpush.msra.mxu0 %v3887
    %v3889 = vand.u32 %v3769, 4294901760
    %3890 = vmatpush.msra.mxu0 %v3889
    %v3891 = vand.u32 %v3768, 4294901760
    %3892 = vmatpush.msra.mxu0 %v3891
    %v3893 = vand.u32 %v3767, 4294901760
    %3894 = vmatpush.msra.mxu0 %v3893
    %v3895 = vand.u32 %v3773, 4294901760
    %v3896 = vsub.f32 %v3773, %v3895
    %v3897 = vand.u32 %v3896, 4294901760
    %3898 = vmatmul.f32.gmra.mxu0 %v3897
    %v3899 = vpop.f32.mrf.mxu0
    %v3900 = vadd.f32 %v3873, %v3899
    %3901 = vdwg.mxu0
    %3902 = vmatpush.msra.mxu0 0.0
    %3903 = vmatpush.msra.mxu0 0.0
    %3904 = vmatpush.msra.mxu0 0.0
    %3905 = vmatpush.msra.mxu0 0.0
    %3906 = vmatpush.msra.mxu0 0.0
    %3907 = vmatpush.msra.mxu0 0.0
    %3908 = vmatpush.msra.mxu0 0.0
    %3909 = vmatpush.msra.mxu0 0.0
    %3910 = vmatpush.msra.mxu0 0.0
    %3911 = vmatpush.msra.mxu0 0.0
    %3912 = vmatpush.msra.mxu0 0.0
    %3913 = vmatpush.msra.mxu0 0.0
    %v3914 = vand.u32 %v3770, 4294901760
    %v3915 = vsub.f32 %v3770, %v3914
    %v3916 = vand.u32 %v3915, 4294901760
    %3917 = vmatpush.msra.mxu0 %v3916
    %v3918 = vand.u32 %v3769, 4294901760
    %v3919 = vsub.f32 %v3769, %v3918
    %v3920 = vand.u32 %v3919, 4294901760
    %3921 = vmatpush.msra.mxu0 %v3920
    %v3922 = vand.u32 %v3768, 4294901760
    %v3923 = vsub.f32 %v3768, %v3922
    %v3924 = vand.u32 %v3923, 4294901760
    %3925 = vmatpush.msra.mxu0 %v3924
    %v3926 = vand.u32 %v3767, 4294901760
    %v3927 = vsub.f32 %v3767, %v3926
    %v3928 = vand.u32 %v3927, 4294901760
    %3929 = vmatpush.msra.mxu0 %v3928
    %v3930 = vand.u32 %v3773, 4294901760
    %3931 = vmatmul.f32.gmra.mxu0 %v3930
    %v3932 = vpop.f32.mrf.mxu0
    %v3933 = vadd.f32 %v3900, %v3932
    %3934 = vdwg.mxu0
    %3935 = vmatpush.msra.mxu0 0.0
    %3936 = vmatpush.msra.mxu0 0.0
    %3937 = vmatpush.msra.mxu0 0.0
    %3938 = vmatpush.msra.mxu0 0.0
    %3939 = vmatpush.msra.mxu0 0.0
    %3940 = vmatpush.msra.mxu0 0.0
    %3941 = vmatpush.msra.mxu0 0.0
    %3942 = vmatpush.msra.mxu0 0.0
    %3943 = vmatpush.msra.mxu0 0.0
    %3944 = vmatpush.msra.mxu0 0.0
    %3945 = vmatpush.msra.mxu0 0.0
    %3946 = vmatpush.msra.mxu0 0.0
    %v3947 = vand.u32 %v3770, 4294901760
    %3948 = vmatpush.msra.mxu0 %v3947
    %v3949 = vand.u32 %v3769, 4294901760
    %3950 = vmatpush.msra.mxu0 %v3949
    %v3951 = vand.u32 %v3768, 4294901760
    %3952 = vmatpush.msra.mxu0 %v3951
    %v3953 = vand.u32 %v3767, 4294901760
    %3954 = vmatpush.msra.mxu0 %v3953
    %v3955 = vand.u32 %v3773, 4294901760
    %3956 = vmatmul.f32.gmra.mxu0 %v3955
    %v3957 = vpop.f32.mrf.mxu0
    %v3958 = vadd.f32 %v3933, %v3957
    %3959 = vdwg.mxu0
    %v3960 = vadd.f32 %v3556, %v3958
    %v3961 = vmax.f32 %v3960, 0.0
    %v3962 = vand.u32 2147483647, %v3960
    %v3963 = vsub.f32 0.0, %v3962
    %v3964 = vmul.f32 %v3963, 1.442695
    %v3965 = vpow.pop %v3964
    %v3966 = vadd.f32 %v3965, 1.0
    %v3967 = vlog2.pop %v3966
    %v3968 = vmul.f32 %v3967, 0.6931472
    %v3969 = vmul.f32 -0.5, %v3965
    %v3970 = vadd.f32 %v3969, 1.0
    %v3971 = vmul.f32 %v3970, %v3965
    %v3972 = vand.u32 2147483647, %v3965
    %vm3973 = vcmp.lt.f32.partialorder %v3972, 0.0004427343
    %v3974 = vsel %vm3973, %v3971, %v3968
    %v3975 = vadd.f32 %v3961, %v3974
    %v3976 = vperm.slane %v34, 7
    %v3977 = vmul.f32 %v3976, %v33
    %v3978 = vld [vmem:[%s7] sm:$0xff]
    %v3979 = vld [vmem:[%s7 + $0x8] sm:$0xff]
    %v3980 = vld [vmem:[%s7 + $0x10] sm:$0xff]
    %v3981 = vld [vmem:[%s7 + $0x18] sm:$0xff]
    %v3983 = vsel %vm54, %v3975, 0
    %3985 = vmatpush.msra.mxu0 0.0
    %3986 = vmatpush.msra.mxu0 0.0
    %3987 = vmatpush.msra.mxu0 0.0
    %3988 = vmatpush.msra.mxu0 0.0
    %3989 = vmatpush.msra.mxu0 0.0
    %3990 = vmatpush.msra.mxu0 0.0
    %3991 = vmatpush.msra.mxu0 0.0
    %3992 = vmatpush.msra.mxu0 0.0
    %3993 = vmatpush.msra.mxu0 0.0
    %3994 = vmatpush.msra.mxu0 0.0
    %3995 = vmatpush.msra.mxu0 0.0
    %3996 = vmatpush.msra.mxu0 0.0
    %v3997 = vand.u32 %v3981, 4294901760
    %3998 = vmatpush.msra.mxu0 %v3997
    %v3999 = vand.u32 %v3980, 4294901760
    %4000 = vmatpush.msra.mxu0 %v3999
    %v4001 = vand.u32 %v3979, 4294901760
    %4002 = vmatpush.msra.mxu0 %v4001
    %v4003 = vand.u32 %v3978, 4294901760
    %4004 = vmatpush.msra.mxu0 %v4003
    %v4005 = vand.u32 %v3983, 4294901760
    %v4006 = vsub.f32 %v3983, %v4005
    %v4007 = vand.u32 %v4006, 4294901760
    %v4008 = vsub.f32 %v4006, %v4007
    %v4009 = vand.u32 %v4008, 4294901760
    %4010 = vmatmul.f32.gmra.mxu0 %v4009
    %v4011 = vpop.f32.mrf.mxu0
    %v4012 = vadd.f32 0.0, %v4011
    %4013 = vdwg.mxu0
    %4014 = vmatpush.msra.mxu0 0.0
    %4015 = vmatpush.msra.mxu0 0.0
    %4016 = vmatpush.msra.mxu0 0.0
    %4017 = vmatpush.msra.mxu0 0.0
    %4018 = vmatpush.msra.mxu0 0.0
    %4019 = vmatpush.msra.mxu0 0.0
    %4020 = vmatpush.msra.mxu0 0.0
    %4021 = vmatpush.msra.mxu0 0.0
    %4022 = vmatpush.msra.mxu0 0.0
    %4023 = vmatpush.msra.mxu0 0.0
    %4024 = vmatpush.msra.mxu0 0.0
    %4025 = vmatpush.msra.mxu0 0.0
    %v4026 = vand.u32 %v3981, 4294901760
    %v4027 = vsub.f32 %v3981, %v4026
    %v4028 = vand.u32 %v4027, 4294901760
    %v4029 = vsub.f32 %v4027, %v4028
    %v4030 = vand.u32 %v4029, 4294901760
    %4031 = vmatpush.msra.mxu0 %v4030
    %v4032 = vand.u32 %v3980, 4294901760
    %v4033 = vsub.f32 %v3980, %v4032
    %v4034 = vand.u32 %v4033, 4294901760
    %v4035 = vsub.f32 %v4033, %v4034
    %v4036 = vand.u32 %v4035, 4294901760
    %4037 = vmatpush.msra.mxu0 %v4036
    %v4038 = vand.u32 %v3979, 4294901760
    %v4039 = vsub.f32 %v3979, %v4038
    %v4040 = vand.u32 %v4039, 4294901760
    %v4041 = vsub.f32 %v4039, %v4040
    %v4042 = vand.u32 %v4041, 4294901760
    %4043 = vmatpush.msra.mxu0 %v4042
    %v4044 = vand.u32 %v3978, 4294901760
    %v4045 = vsub.f32 %v3978, %v4044
    %v4046 = vand.u32 %v4045, 4294901760
    %v4047 = vsub.f32 %v4045, %v4046
    %v4048 = vand.u32 %v4047, 4294901760
    %4049 = vmatpush.msra.mxu0 %v4048
    %v4050 = vand.u32 %v3983, 4294901760
    %4051 = vmatmul.f32.gmra.mxu0 %v4050
    %v4052 = vpop.f32.mrf.mxu0
    %v4053 = vadd.f32 %v4012, %v4052
    %4054 = vdwg.mxu0
    %4055 = vmatpush.msra.mxu0 0.0
    %4056 = vmatpush.msra.mxu0 0.0
    %4057 = vmatpush.msra.mxu0 0.0
    %4058 = vmatpush.msra.mxu0 0.0
    %4059 = vmatpush.msra.mxu0 0.0
    %4060 = vmatpush.msra.mxu0 0.0
    %4061 = vmatpush.msra.mxu0 0.0
    %4062 = vmatpush.msra.mxu0 0.0
    %4063 = vmatpush.msra.mxu0 0.0
    %4064 = vmatpush.msra.mxu0 0.0
    %4065 = vmatpush.msra.mxu0 0.0
    %4066 = vmatpush.msra.mxu0 0.0
    %v4067 = vand.u32 %v3981, 4294901760
    %v4068 = vsub.f32 %v3981, %v4067
    %4069 = vmatpush.msra.mxu0 %v4068
    %v4070 = vand.u32 %v3980, 4294901760
    %v4071 = vsub.f32 %v3980, %v4070
    %4072 = vmatpush.msra.mxu0 %v4071
    %v4073 = vand.u32 %v3979, 4294901760
    %v4074 = vsub.f32 %v3979, %v4073
    %4075 = vmatpush.msra.mxu0 %v4074
    %v4076 = vand.u32 %v3978, 4294901760
    %v4077 = vsub.f32 %v3978, %v4076
    %4078 = vmatpush.msra.mxu0 %v4077
    %v4079 = vand.u32 %v3983, 4294901760
    %v4080 = vsub.f32 %v3983, %v4079
    %4081 = vmatmul.f32.gmra.mxu0 %v4080
    %v4082 = vpop.f32.mrf.mxu0
    %v4083 = vadd.f32 %v4053, %v4082
    %4084 = vdwg.mxu0
    %4085 = vmatpush.msra.mxu0 0.0
    %4086 = vmatpush.msra.mxu0 0.0
    %4087 = vmatpush.msra.mxu0 0.0
    %4088 = vmatpush.msra.mxu0 0.0
    %4089 = vmatpush.msra.mxu0 0.0
    %4090 = vmatpush.msra.mxu0 0.0
    %4091 = vmatpush.msra.mxu0 0.0
    %4092 = vmatpush.msra.mxu0 0.0
    %4093 = vmatpush.msra.mxu0 0.0
    %4094 = vmatpush.msra.mxu0 0.0
    %4095 = vmatpush.msra.mxu0 0.0
    %4096 = vmatpush.msra.mxu0 0.0
    %v4097 = vand.u32 %v3981, 4294901760
    %4098 = vmatpush.msra.mxu0 %v4097
    %v4099 = vand.u32 %v3980, 4294901760
    %4100 = vmatpush.msra.mxu0 %v4099
    %v4101 = vand.u32 %v3979, 4294901760
    %4102 = vmatpush.msra.mxu0 %v4101
    %v4103 = vand.u32 %v3978, 4294901760
    %4104 = vmatpush.msra.mxu0 %v4103
    %v4105 = vand.u32 %v3983, 4294901760
    %v4106 = vsub.f32 %v3983, %v4105
    %v4107 = vand.u32 %v4106, 4294901760
    %4108 = vmatmul.f32.gmra.mxu0 %v4107
    %v4109 = vpop.f32.mrf.mxu0
    %v4110 = vadd.f32 %v4083, %v4109
    %4111 = vdwg.mxu0
    %4112 = vmatpush.msra.mxu0 0.0
    %4113 = vmatpush.msra.mxu0 0.0
    %4114 = vmatpush.msra.mxu0 0.0
    %4115 = vmatpush.msra.mxu0 0.0
    %4116 = vmatpush.msra.mxu0 0.0
    %4117 = vmatpush.msra.mxu0 0.0
    %4118 = vmatpush.msra.mxu0 0.0
    %4119 = vmatpush.msra.mxu0 0.0
    %4120 = vmatpush.msra.mxu0 0.0
    %4121 = vmatpush.msra.mxu0 0.0
    %4122 = vmatpush.msra.mxu0 0.0
    %4123 = vmatpush.msra.mxu0 0.0
    %v4124 = vand.u32 %v3981, 4294901760
    %v4125 = vsub.f32 %v3981, %v4124
    %v4126 = vand.u32 %v4125, 4294901760
    %4127 = vmatpush.msra.mxu0 %v4126
    %v4128 = vand.u32 %v3980, 4294901760
    %v4129 = vsub.f32 %v3980, %v4128
    %v4130 = vand.u32 %v4129, 4294901760
    %4131 = vmatpush.msra.mxu0 %v4130
    %v4132 = vand.u32 %v3979, 4294901760
    %v4133 = vsub.f32 %v3979, %v4132
    %v4134 = vand.u32 %v4133, 4294901760
    %4135 = vmatpush.msra.mxu0 %v4134
    %v4136 = vand.u32 %v3978, 4294901760
    %v4137 = vsub.f32 %v3978, %v4136
    %v4138 = vand.u32 %v4137, 4294901760
    %4139 = vmatpush.msra.mxu0 %v4138
    %v4140 = vand.u32 %v3983, 4294901760
    %4141 = vmatmul.f32.gmra.mxu0 %v4140
    %v4142 = vpop.f32.mrf.mxu0
    %v4143 = vadd.f32 %v4110, %v4142
    %4144 = vdwg.mxu0
    %4145 = vmatpush.msra.mxu0 0.0
    %4146 = vmatpush.msra.mxu0 0.0
    %4147 = vmatpush.msra.mxu0 0.0
    %4148 = vmatpush.msra.mxu0 0.0
    %4149 = vmatpush.msra.mxu0 0.0
    %4150 = vmatpush.msra.mxu0 0.0
    %4151 = vmatpush.msra.mxu0 0.0
    %4152 = vmatpush.msra.mxu0 0.0
    %4153 = vmatpush.msra.mxu0 0.0
    %4154 = vmatpush.msra.mxu0 0.0
    %4155 = vmatpush.msra.mxu0 0.0
    %4156 = vmatpush.msra.mxu0 0.0
    %v4157 = vand.u32 %v3981, 4294901760
    %4158 = vmatpush.msra.mxu0 %v4157
    %v4159 = vand.u32 %v3980, 4294901760
    %4160 = vmatpush.msra.mxu0 %v4159
    %v4161 = vand.u32 %v3979, 4294901760
    %4162 = vmatpush.msra.mxu0 %v4161
    %v4163 = vand.u32 %v3978, 4294901760
    %4164 = vmatpush.msra.mxu0 %v4163
    %v4165 = vand.u32 %v3983, 4294901760
    %4166 = vmatmul.f32.gmra.mxu0 %v4165
    %v4167 = vpop.f32.mrf.mxu0
    %v4168 = vadd.f32 %v4143, %v4167
    %4169 = vdwg.mxu0
    %v4170 = vadd.f32 %v3977, %v4168
    %v4171 = vperm.slane %v34, 2
    %v4172 = vadd.f32 %v4170, %v4171
    %4173 = vst.msk [vmem:[#allocation3] sm:$0xff] %vm54, %v4172
    // Predicated region
    $region38: #{tpu_custom_call.1} parent=1 // pred_check
      _
    $region39: #{tpu_custom_call.1} parent=1 // pred_check_branch
      %4175 = sbr.rel (0) target = $region41
    $region40: #{tpu_custom_call.1} parent=1 // pred_region
      %4177 = vsyncadd [#allocation4], 0
      %s4179 = sshll.u32 [#allocation3], 4
      %s4180 = int_to_ptr.vmem [resolvable:$true] %s4179
      %s4181 = sshll.u32 %s9, 4
      %s4182 = int_to_ptr.hbm [resolvable:$true] %s4181
      %4184 = dma.vmem_to_hbm [thread:$0]  %s4180, 128, %s4182, [#allocation4]
    $region41: #{tpu_custom_call.1} parent=1 // pred_fallthru
      _
    // Predicated region
    $region42: #{tpu_custom_call.1} parent=1 // pred_check
      _
    $region43: #{tpu_custom_call.1} parent=1 // pred_check_branch
      %4186 = sbr.rel (0) target = $region45
    $region44: #{tpu_custom_call.1} parent=1 // pred_region
      %4188 = dma.done [#allocation4], 128
    $region45: #{tpu_custom_call.1} parent=1 // pred_fallthru
      _
    %4189 = vsyncpa [#allocation4], 1

</llo_original>
